<compile_context>
chip_gen: v7x
topology: tpu7x:2x2x1
jax: 0.10.0
libtpu: 0.0.40
codegen_flags: <defaults>
</compile_context>

<pallas_src>
import numpy as np
import jax
import jax.numpy as jnp
from jax.experimental import pallas as pl
from jax.experimental.pallas import tpu as pltpu

IMG_SIZE = 65                     # opt.img_size (rel_vec is clamped to [0, 64] -> 65)
CENTER = (IMG_SIZE - 1) / 2       # 32.0
MEM_SIDE = 65 * 65 * 2            # 8450  (flattened (65, 65, 2))
MEM_ROWS_PAD = 8576               # 1072 * 8  (= 67 * 128), padded row count
MEM_COLS_PAD = 8576               # 67 * 128, lane-dense padded column count
ROW_BLOCK = 8                     # row block for targeted scatter / gather
PAD_BLK = MEM_ROWS_PAD // ROW_BLOCK - 1   # all-padding row block (rows 8568..8575)
NPIX = IMG_SIZE * IMG_SIZE        # 4225
NPIX_PAD = 4352                   # 34 * 128, lane-dense regrid width
THRESH = 0.7
TOPK = 30
P_STORE = 33                      # sampled points per image in store mode
P_RECALL = 33                     # sampled points per image in recall mode
VMEM_LIMIT = 48 * 1024 * 1024     # <= v7x-safe scoped VMEM


# ----------------------------------------------------------------------------
# Pallas kernels
# ----------------------------------------------------------------------------
def _scatter_add_kernel(blk_ref, rows_ref, colsoh_ref, mem_ref, out_ref):
    # Visit only touched 8-row blocks:  out_blk = mem_blk + OneHot(rows)[8, E] @ ColOneHot[E, C]
    # blk_ref: SMEM prefetch, unique touched block ids (padded with PAD_BLK at the tail).
    i = pl.program_id(0)
    blk = blk_ref[i]                                   # current touched row block id
    rb = out_ref.shape[0]                              # ROW_BLOCK
    e = rows_ref.shape[1]
    row_iota = jax.lax.broadcasted_iota(jnp.int32, (rb, e), 0) + blk * rb
    a = (row_iota == rows_ref[...]).astype(jnp.bfloat16)          # [rb, e] exact 0/1
    upd = jnp.dot(a, colsoh_ref[...], preferred_element_type=jnp.float32)
    out_ref[...] = mem_ref[...] + upd


def mem_scatter_add(mem2d, rows, cols):
    """mem.index_put_((rows, cols), ones, accumulate=True) on the padded 2-D mem view."""
    e = rows.shape[0]
    rows_i = rows.astype(jnp.int32)
    rows2 = rows_i.reshape(1, e)
    # grid-invariant column one-hot, hoisted out of the kernel; bf16 is exact for 0/1
    colsoh = (cols.astype(jnp.int32)[:, None]
              == jnp.arange(MEM_COLS_PAD, dtype=jnp.int32)[None, :]).astype(jnp.bfloat16)
    # unique touched row blocks, padded (at the tail) with an all-padding block id
    blk_ids = jnp.unique(rows_i // ROW_BLOCK, size=e, fill_value=PAD_BLK).astype(jnp.int32)

    grid_spec = pltpu.PrefetchScalarGridSpec(
        num_scalar_prefetch=1,
        grid=(e,),
        in_specs=[
            pl.BlockSpec((1, e), lambda i, blk: (0, 0)),                     # rows (resident)
            pl.BlockSpec((e, MEM_COLS_PAD), lambda i, blk: (0, 0)),          # col one-hot (resident)
            pl.BlockSpec((ROW_BLOCK, MEM_COLS_PAD), lambda i, blk: (blk[i], 0)),
        ],
        out_specs=pl.BlockSpec((ROW_BLOCK, MEM_COLS_PAD), lambda i, blk: (blk[i], 0)),
    )
    return pl.pallas_call(
        _scatter_add_kernel,
        out_shape=jax.ShapeDtypeStruct(mem2d.shape, mem2d.dtype),
        grid_spec=grid_spec,
        input_output_aliases={3: 0},       # mem2d (4th flattened call arg, incl. prefetch)
        compiler_params=pltpu.CompilerParams(
            dimension_semantics=("arbitrary",),
            vmem_limit_bytes=VMEM_LIMIT),
    )(blk_ids, rows2, colsoh, mem2d)


def _gather_rows_kernel(rows_ref, mem_ref, out_ref):
    # Targeted gather: mem_ref is the 8-row block containing rows[i]; copy that row into
    # row i of the resident output block.
    i = pl.program_id(0)
    lo = rows_ref[i] % ROW_BLOCK
    out_ref[pl.ds(i, 1), :] = mem_ref[pl.ds(lo, 1), :]


def mem_gather_rows(mem2d, rows):
    """local_mem = mem2d[rows]  (targeted row gather, no full-memory sweep)."""
    e = rows.shape[0]
    rows_i = rows.astype(jnp.int32)
    return pl.pallas_call(
        _gather_rows_kernel,
        out_shape=jax.ShapeDtypeStruct((e, MEM_COLS_PAD), jnp.float32),
        grid_spec=pltpu.PrefetchScalarGridSpec(
            num_scalar_prefetch=1,
            grid=(e,),
            in_specs=[pl.BlockSpec((ROW_BLOCK, MEM_COLS_PAD),
                                   lambda i, r: (r[i] // ROW_BLOCK, 0))],
            out_specs=pl.BlockSpec((e, MEM_COLS_PAD), lambda i, r: (0, 0)),
        ),
        compiler_params=pltpu.CompilerParams(
            dimension_semantics=("arbitrary",),
            vmem_limit_bytes=VMEM_LIMIT),
    )(rows_i, mem2d)


def _regrid_kernel(pix_ref, vo_ref, out_ref, acc_ref):
    # scatter-mean: acc[0] += vals @ OneHot(pix), acc[1] += 1 @ OneHot(pix); finalize divide.
    k = pl.program_id(0)

    @pl.when(k == 0)
    def _():
        acc_ref[...] = jnp.zeros_like(acc_ref)

    nb = pix_ref.shape[0]
    npix_pad = acc_ref.shape[1]
    oneh = (jax.lax.broadcasted_iota(jnp.int32, (nb, npix_pad), 1)
            == pix_ref[...]).astype(jnp.float32)                   # [nb, npix_pad]
    acc_ref[...] += jnp.dot(vo_ref[...], oneh, preferred_element_type=jnp.float32)

    @pl.when(k == pl.num_programs(0) - 1)
    def _():
        res = acc_ref[0:1, :] / jnp.maximum(acc_ref[1:2, :], 1.0)
        out_ref[...] = jnp.broadcast_to(res, out_ref.shape)


def regrid_avg(vals, pix, img_size, block_n=512):
    """o_utils.regrid(vals, locs, imgid, img_size, avg=True) stand-in for a single image."""
    n = vals.shape[0]
    npix = img_size * img_size
    n_pad = ((n + block_n - 1) // block_n) * block_n
    pad = n_pad - n
    vals_p = jnp.pad(vals.astype(jnp.float32), (0, pad))
    vo = jnp.zeros((8, n_pad), jnp.float32)
    vo = vo.at[0, :].set(vals_p)
    vo = vo.at[1, :].set(1.0)
    pix_p = jnp.pad(pix.astype(jnp.int32), (0, pad),
                    constant_values=NPIX_PAD).reshape(n_pad, 1)    # NPIX_PAD never matches iota
    out = pl.pallas_call(
        _regrid_kernel,
        out_shape=jax.ShapeDtypeStruct((8, NPIX_PAD), jnp.float32),
        grid=(n_pad // block_n,),
        in_specs=[
            pl.BlockSpec((block_n, 1), lambda k: (k, 0)),
            pl.BlockSpec((8, block_n), lambda k: (0, k)),
        ],
        out_specs=pl.BlockSpec((8, NPIX_PAD), lambda k: (0, 0)),
        scratch_shapes=[pltpu.VMEM((8, NPIX_PAD), jnp.float32)],
        compiler_params=pltpu.CompilerParams(
            dimension_semantics=("arbitrary",),
            vmem_limit_bytes=VMEM_LIMIT),
    )(pix_p, vo)
    return out[0, :npix]


# ----------------------------------------------------------------------------
# Glue (sampler / edges / index arithmetic) in plain JAX
# ----------------------------------------------------------------------------
def simple_sampler(img_batch, pts_per_img, key):
    # TODO(synk): samplers.OOSampler has no JAX/Pallas equivalent; deterministic random
    # pixel locations are used instead (tex = pixel value, pts = centered coordinates).
    b, _, h, w = img_batch.shape
    ky, kx = jax.random.split(key)
    ys = jax.random.randint(ky, (b, pts_per_img), 0, h)
    xs = jax.random.randint(kx, (b, pts_per_img), 0, w)
    tex = img_batch[:, 0][jnp.arange(b)[:, None], ys, xs].reshape(-1)
    pts = jnp.stack([ys.reshape(-1).astype(jnp.float32) - CENTER,
                     xs.reshape(-1).astype(jnp.float32) - CENTER], axis=1)
    imgid = jnp.repeat(jnp.arange(b, dtype=jnp.int32), pts_per_img)
    return tex, pts, imgid, b


def chain_edges(num_imgs, pts_per_img):
    # TODO(synk): t.ops.my_ops.frnn_ts_kernel (fixed-radius NN) not available; use a
    # deterministic per-image chain graph, then append reversed edges as in the module.
    base = np.arange(num_imgs * pts_per_img).reshape(num_imgs, pts_per_img)
    edges = np.stack([base[:, :-1].reshape(-1), base[:, 1:].reshape(-1)], axis=1)
    edges = np.concatenate([edges, edges[:, ::-1]], axis=0)
    return jnp.asarray(edges, dtype=jnp.int32)


def _store_indices(batch, key):
    tex, pts, imgid, bsz = simple_sampler(batch, P_STORE, key)
    edges = chain_edges(bsz, P_STORE)
    # threshold folded into the sampled values: identical to binarizing the whole batch
    # first and then sampling (batch[batch<=0.7]=0; batch[batch>0.7]=1).
    l_tex = (tex > THRESH).astype(jnp.int32)
    tex_lf = l_tex[edges[:, 0]]
    tex_rt = l_tex[edges[:, 1]]
    locs = pts[:, :2]
    rel_vec = jnp.concatenate([locs[edges[:, 0]], locs[edges[:, 1]]], axis=1) + 32.0
    rel_vec = jnp.clip(jnp.round(rel_vec), 0, 64).astype(jnp.int32)
    rows = rel_vec[:, 0] * 130 + rel_vec[:, 1] * 2 + tex_lf
    cols = rel_vec[:, 2] * 130 + rel_vec[:, 3] * 2 + tex_rt
    return rows, cols


def store_forward(mem2d, batch, key):
    """opt.mode == 'store': threshold, sample, build edges, accumulate into mem."""
    rows, cols = _store_indices(batch, key)
    new_mem = mem_scatter_add(mem2d, rows, cols)        # Pallas targeted scatter-add kernel
    return new_mem, rows, cols


def make_seed(img_size):
    # TODO(synk): art_dset.make_nine not available; deterministic synthetic binary seed image.
    y = np.zeros((1, 1, img_size, img_size), np.float32)
    y[:, :, 10:30, 20:24] = 1.0
    y[:, :, 10:14, 20:44] = 1.0
    y[:, :, 26:30, 20:44] = 1.0
    y[:, :, 10:50, 40:44] = 1.0
    return jnp.asarray(y)


def recall_forward(mem2d, key):
    """opt.mode == 'recall': gather local memories, top-k, scatter-mean onto image."""
    seed = make_seed(IMG_SIZE)
    tex, pts, imgid, bsz = simple_sampler(seed, P_RECALL, key)
    edges = chain_edges(bsz, P_RECALL)
    l_tex = jnp.clip(jnp.round(tex), 0, 1).astype(jnp.int32)
    tex_lf = l_tex[edges[:, 0]]
    locs_lf = pts[edges[:, 0], :2]
    rel_vec = jnp.clip(jnp.round(locs_lf + 32.0), 0, 64).astype(jnp.int32)
    rows = rel_vec[:, 0] * 130 + rel_vec[:, 1] * 2 + tex_lf

    local = mem_gather_rows(mem2d, rows)[:, :MEM_SIDE]  # Pallas row-gather kernel, [E, 8450]
    e = local.shape[0]
    # (d,e,f) -> permute(0,3,1,2) -> reshape [E, 2, 65*65]  (same as torch)
    local = local.reshape(e, 65, 65, 2).transpose(0, 3, 1, 2).reshape(e, 2, 65 * 65)

    ravld_vals, ravld_locs = jax.lax.top_k(local, TOPK)  # TODO(synk): top-k kept in plain JAX
    locs_rt_y = ravld_locs // 65
    locs_rt_x = ravld_locs % 65
    locs_pred = jnp.stack([locs_rt_y.reshape(-1), locs_rt_x.reshape(-1)], axis=1)
    ravld_vals = ravld_vals.at[:, 0, :].multiply(-1.0)
    vals_confidence = ravld_vals.reshape(-1)

    # regrid: locs_pred.sub(32) then re-centered by (img_size-1)/2 == locs_pred itself.
    pix = (locs_pred[:, 0] * IMG_SIZE + locs_pred[:, 1]).astype(jnp.int32)
    pred_flat = regrid_avg(vals_confidence, pix, IMG_SIZE)   # Pallas scatter-mean kernel
    # TODO(synk): o_utils.regrid output layout unknown; assume [num_imgs, img_size, img_size].
    return pred_flat.reshape(1, IMG_SIZE, IMG_SIZE)


# ----------------------------------------------------------------------------
if __name__ == "__main__":
    key = jax.random.PRNGKey(0)
    k_batch, k_store, k_recall, k_rg = jax.random.split(key, 4)

    # small input consistent with the module: NCHW image batch
    batch = jax.random.uniform(k_batch, (2, 1, IMG_SIZE, IMG_SIZE), jnp.float32)

    # mem buffer [65,65,2,65,65,2] (2-D padded view), deterministically zero-initialized
    mem2d = jnp.zeros((MEM_ROWS_PAD, MEM_COLS_PAD), jnp.float32)

    # ---- store mode ----
    new_mem, rows, cols = store_forward(mem2d, batch, k_store)
    new_mem = jax.block_until_ready(new_mem)

    ref_mem = jnp.zeros((MEM_ROWS_PAD, MEM_COLS_PAD), jnp.float32).at[rows, cols].add(1.0)
    assert bool(jnp.allclose(new_mem, ref_mem)), "scatter-add kernel mismatch"

    # gather kernel check against plain-JAX row gather
    g = jax.block_until_ready(mem_gather_rows(new_mem, rows[:64]))
    assert bool(jnp.allclose(g, new_mem[rows[:64]])), "gather kernel mismatch"

    # regrid kernel check against plain-JAX scatter-mean
    vals_t = jax.random.normal(k_rg, (300,), jnp.float32)
    pix_t = jax.random.randint(jax.random.PRNGKey(7), (300,), 0, NPIX)
    rg = jax.block_until_ready(regrid_avg(vals_t, pix_t, IMG_SIZE))
    sums = jnp.zeros(NPIX, jnp.float32).at[pix_t].add(vals_t)
    cnts = jnp.zeros(NPIX, jnp.float32).at[pix_t].add(1.0)
    assert bool(jnp.allclose(rg, sums / jnp.maximum(cnts, 1.0), atol=1e-5)), "regrid mismatch"

    # ---- recall mode ----
    pred_im = jax.block_until_ready(recall_forward(new_mem, k_recall))
    assert pred_im.shape == (1, IMG_SIZE, IMG_SIZE)
    assert bool(jnp.all(jnp.isfinite(pred_im)))

    print("KERNEL_OK")
</pallas_src>

<mosaic_0001>
module attributes {stable_mosaic.version = 11 : i64} {
  func.func @_scatter_add_kernel(%arg0: i32, %arg1: memref<128xi32, #tpu.memory_space<smem>>, %arg2: memref<1x128xi32, #tpu.memory_space<vmem>>, %arg3: memref<128x8576xbf16, #tpu.memory_space<vmem>>, %arg4: memref<8x8576xf32, #tpu.memory_space<vmem>>, %arg5: memref<8x8576xf32, #tpu.memory_space<vmem>>) attributes {dimension_semantics = [#tpu.dimension_semantics<arbitrary>], iteration_bounds = array<i64: 128>, scalar_prefetch = 1 : i64, scratch_operands = 0 : i64, tpu.core_type = #tpu.core_type<tc>, window_params = [{pipeline_mode = #tpu.pipeline_mode<synchronous>, transform_indices = @transform_0, window_bounds = array<i64: 1, 128>}, {pipeline_mode = #tpu.pipeline_mode<synchronous>, transform_indices = @transform_1, window_bounds = array<i64: 128, 8576>}, {transform_indices = @transform_2, window_bounds = array<i64: 8, 8576>}, {transform_indices = @transform_3, window_bounds = array<i64: 8, 8576>}]} {
    %0 = arith.index_cast %arg0 : i32 to index
    %1 = memref.load %arg1[%0] : memref<128xi32, #tpu.memory_space<smem>>
    %2 = tpu.iota {dimensions = array<i32: 0>} : vector<8x128xi32>
    %c8_i32 = arith.constant 8 : i32
    %3 = arith.muli %1, %c8_i32 : i32
    %4 = vector.broadcast %3 : i32 to vector<8x128xi32>
    %5 = arith.addi %2, %4 : vector<8x128xi32>
    %c0 = arith.constant 0 : index
    %c0_0 = arith.constant 0 : index
    %6 = vector.load %arg2[%c0, %c0_0] : memref<1x128xi32, #tpu.memory_space<vmem>>, vector<1x128xi32>
    %7 = vector.broadcast %6 : vector<1x128xi32> to vector<8x128xi32>
    %8 = arith.cmpi eq, %5, %7 : vector<8x128xi32>
    %9 = arith.extui %8 : vector<8x128xi1> to vector<8x128xi32>
    %10 = arith.sitofp %9 : vector<8x128xi32> to vector<8x128xf32>
    %11 = arith.truncf %10 : vector<8x128xf32> to vector<8x128xbf16>
    %c0_1 = arith.constant 0 : index
    %c0_2 = arith.constant 0 : index
    %12 = vector.load %arg3[%c0_1, %c0_2] : memref<128x8576xbf16, #tpu.memory_space<vmem>>, vector<128x8576xbf16>
    %cst = arith.constant dense<0.000000e+00> : vector<8x8576xf32>
    %13 = tpu.matmul %11, %12, %cst {dimension_numbers = #tpu.dot_dimension_numbers<[1], [0], [0], [1], [0, 0, 1, 1], [], []>} : vector<8x128xbf16>, vector<128x8576xbf16>, vector<8x8576xf32> -> vector<8x8576xf32>
    %c0_3 = arith.constant 0 : index
    %c0_4 = arith.constant 0 : index
    %14 = vector.load %arg4[%c0_3, %c0_4] : memref<8x8576xf32, #tpu.memory_space<vmem>>, vector<8x8576xf32>
    %15 = arith.addf %14, %13 : vector<8x8576xf32>
    %c0_5 = arith.constant 0 : index
    %c0_6 = arith.constant 0 : index
    %16 = vector.load %arg5[%c0_5, %c0_6] : memref<8x8576xf32, #tpu.memory_space<vmem>>, vector<8x8576xf32>
    tpu.vector_store %arg5[%c0_5, %c0_6], %15 {strides = array<i32>} : memref<8x8576xf32, #tpu.memory_space<vmem>>, vector<8x8576xf32>,
    return
  }
  func.func @transform_0(%arg0: i32, %arg1: memref<128xi32, #tpu.memory_space<smem>>) -> (i32, i32) {
    %c0_i32 = arith.constant 0 : i32
    %c0_i32_0 = arith.constant 0 : i32
    %c0_i32_1 = arith.constant 0 : i32
    return %c0_i32, %c0_i32_0 : i32, i32
  }
  func.func @transform_1(%arg0: i32, %arg1: memref<128xi32, #tpu.memory_space<smem>>) -> (i32, i32) {
    %c0_i32 = arith.constant 0 : i32
    %c0_i32_0 = arith.constant 0 : i32
    %c0_i32_1 = arith.constant 0 : i32
    return %c0_i32, %c0_i32_0 : i32, i32
  }
  func.func @transform_2(%arg0: i32, %arg1: memref<128xi32, #tpu.memory_space<smem>>) -> (i32, i32) {
    %0 = arith.index_cast %arg0 : i32 to index
    %1 = memref.load %arg1[%0] : memref<128xi32, #tpu.memory_space<smem>>
    %c0_i32 = arith.constant 0 : i32
    %c0_i32_0 = arith.constant 0 : i32
    return %1, %c0_i32 : i32, i32
  }
  func.func @transform_3(%arg0: i32, %arg1: memref<128xi32, #tpu.memory_space<smem>>) -> (i32, i32) {
    %0 = arith.index_cast %arg0 : i32 to index
    %1 = memref.load %arg1[%0] : memref<128xi32, #tpu.memory_space<smem>>
    %c0_i32 = arith.constant 0 : i32
    %c0_i32_0 = arith.constant 0 : i32
    return %1, %c0_i32 : i32, i32
  }
}

</mosaic_0001>

<llo_original>
// kernel: tpu_custom_call.1
$region0: #{tpu_custom_call.1}
  #allocation0 [shape = 'u32[]', space=smem, size = 0x4, offset = 0x4, fixed_abs, tag = 'smem constant byte address 0x4 - core index']
  #allocation1 [shape = 'u32[144,128]{1,0:T(1,128)}', space=vmem, size = 0x12000, scoped, tag = 'internal scratch']
  #allocation2 [shape = 's32[1]{0}', space=sflag, size = 0x4, scoped, tag = 'scoped memory for tpu_custom_call.1']
  #allocation3 [shape = 'u8[512]{0}', space=smem, size = 0x200, scoped, tag = 'prefetched SMEM operand 0']
  %s0 = inlined_call_operand.vmem [shape: s32[128], index: 0, kind: input, shape index: {}]
  %s1 = inlined_call_operand.vmem [shape: s32[1,128], index: 1, kind: input, shape index: {}]
  %s2 = inlined_call_operand.vmem [shape: bf16[128,8576], index: 2, kind: input, shape index: {}]
  %s3 = inlined_call_operand.hbm [shape: f32[8576,8576], index: 3, kind: input, shape index: {}, may-alias: {3,4}]
  %s4 = inlined_call_operand.hbm [shape: f32[8576,8576], index: 4, kind: output, shape index: {}, may-alias: {3,4}]
  %s5 = sld [smem:[#allocation0]]
  $region49: #{tpu_custom_call.1} parent=0
    _
  %s7 = ssub.s32 1, %s5
  %s8 = scalar_select 0, %s7, %s5
  %s9 = sshll.u32 %s0, 4
  %s10 = int_to_ptr.vmem [resolvable:$true] %s9
  %12 = dma.vmem_to_smem %s10, 16, [#allocation3], [#allocation2]
  %13 = dma.done [#allocation2], 16
  %14 = sfence
  $region1: #{tpu_custom_call.1} parent=0
    #allocation4 [shape = 'u8[548864]{0}', space=vmem, size = 0x86000, scoped, tag = 'input window, operand 3']
    #allocation5 [shape = 's32[2]{0}', space=sflag, size = 0x8, scoped, tag = 'scoped memory for tpu_custom_call.1']
    #allocation6 [shape = 's32[2]{0}', space=sflag, size = 0x8, scoped, tag = 'scoped memory for tpu_custom_call.1']
    #allocation7 [shape = 'u8[548864]{0}', space=vmem, size = 0x86000, scoped, tag = 'output window, operand 0']
    %15 = vsyncpa [#allocation5], 0
    %s16 = scalar_lea.sflag [#allocation5], 1
    %17 = vsyncpa %s16, 0
    %18 = vsyncpa [#allocation6], 0
    %s19 = scalar_lea.sflag [#allocation6], 1
    %20 = vsyncpa %s19, 0
    loop: start=0, step=1, limit=130
    $region2: #{tpu_custom_call.1} parent=1 // loop_pre_header
      _
    $region3: #{tpu_custom_call.1} parent=1 // loop_header
      %s22 = sphi 0, %s26
      %p23 = scmp.ge.s32.totalorder %s22, 130
      %s30 = sphi 0, %s30
      %s32 = sphi 0, %s30
      %s33 = sphi 0, %s32
      %s47 = sphi 0, %s33
      %s51 = sphi 0, %s51
      %s53 = sphi 0, %s51
      %s54 = sphi 0, %s53
      %s68 = sphi 0, %s54
      %s76 = sphi 0, %s78
      %s79 = sphi 0, %s76
      %s80 = sphi 0, %s79
      %s96 = sphi 0, %s80
      %s104 = sphi 0, %s106
      %s107 = sphi 0, %s104
      %s108 = sphi 0, %s107
      %s124 = sphi 0, %s108
    $region4: #{tpu_custom_call.1} parent=1 // loop_header_branch
      %25 = sbr.rel (%p23) target = $region8
    $region5: #{tpu_custom_call.1} parent=1 // loop_body
      %s27 = ssub.s32 %s22, 1
      %s28 = ssub.s32 %s22, 2
      %s29 = sadd.s32 %s22, 1
      %s31 = sadd.s32 %s30, 1
      %p34 = scmp.eq.s32.totalorder %s22, 127
      %p35 = scmp.ne.s32.totalorder %s30, %s32
      %p36 = scmp.eq.s32.totalorder %s22, 0
      %p37 = por %p35, %p36
      %p38 = scmp.ne.s32.totalorder %s30, %s32
      %p39 = scmp.eq.s32.totalorder %s27, 127
      %p40 = por %p38, %p39
      %p41 = scmp.ne.s32.totalorder %s32, %s33
      %p42 = scmp.eq.s32.totalorder %s27, 0
      %p43 = por %p41, %p42
      %p44 = scmp.ne.s32.totalorder %s32, %s33
      %p45 = scmp.eq.s32.totalorder %s28, 127
      %p46 = por %p44, %p45
      %p48 = scmp.ne.s32.totalorder %s33, %s47
      %p49 = scmp.eq.s32.totalorder %s28, 0
      %p50 = por %p48, %p49
      %s52 = sadd.s32 %s51, 1
      %p55 = scmp.eq.s32.totalorder %s22, 127
      %p56 = scmp.ne.s32.totalorder %s51, %s53
      %p57 = scmp.eq.s32.totalorder %s22, 0
      %p58 = por %p56, %p57
      %p59 = scmp.ne.s32.totalorder %s51, %s53
      %p60 = scmp.eq.s32.totalorder %s27, 127
      %p61 = por %p59, %p60
      %p62 = scmp.ne.s32.totalorder %s53, %s54
      %p63 = scmp.eq.s32.totalorder %s27, 0
      %p64 = por %p62, %p63
      %p65 = scmp.ne.s32.totalorder %s53, %s54
      %p66 = scmp.eq.s32.totalorder %s28, 127
      %p67 = por %p65, %p66
      %p69 = scmp.ne.s32.totalorder %s54, %s68
      %p70 = scmp.eq.s32.totalorder %s28, 0
      %p71 = por %p69, %p70
      %s72 = sld [smem:[#allocation3 + %s22]]
      %s73 = sld [smem:[#allocation3 + %s29]]
      %s74 = ssub.s32 %s72, %s73
      %p75 = scmp.eq.s32.totalorder %s74, 0
      %s77 = sadd.s32 %s76, 1
      %s78 = scalar_select %p75, %s76, %s77
      %p81 = pneg %p75
      %p82 = scmp.eq.s32.totalorder %s22, 127
      %p83 = por %p81, %p82
      %p84 = scmp.ne.s32.totalorder %s76, %s79
      %p85 = scmp.eq.s32.totalorder %s22, 0
      %p86 = por %p84, %p85
      %p87 = scmp.ne.s32.totalorder %s76, %s79
      %p88 = scmp.eq.s32.totalorder %s27, 127
      %p89 = por %p87, %p88
      %p90 = scmp.ne.s32.totalorder %s79, %s80
      %p91 = scmp.eq.s32.totalorder %s27, 0
      %p92 = por %p90, %p91
      %p93 = scmp.ne.s32.totalorder %s79, %s80
      %p94 = scmp.eq.s32.totalorder %s28, 127
      %p95 = por %p93, %p94
      %p97 = scmp.ne.s32.totalorder %s80, %s96
      %p98 = scmp.eq.s32.totalorder %s28, 0
      %p99 = por %p97, %p98
      %s100 = sld [smem:[#allocation3 + %s22]]
      %s101 = sld [smem:[#allocation3 + %s29]]
      %s102 = ssub.s32 %s100, %s101
      %p103 = scmp.eq.s32.totalorder %s102, 0
      %s105 = sadd.s32 %s104, 1
      %s106 = scalar_select %p103, %s104, %s105
      %p109 = pneg %p103
      %p110 = scmp.eq.s32.totalorder %s22, 127
      %p111 = por %p109, %p110
      %p112 = scmp.ne.s32.totalorder %s104, %s107
      %p113 = scmp.eq.s32.totalorder %s22, 0
      %p114 = por %p112, %p113
      %p115 = scmp.ne.s32.totalorder %s104, %s107
      %p116 = scmp.eq.s32.totalorder %s27, 127
      %p117 = por %p115, %p116
      %p118 = scmp.ne.s32.totalorder %s107, %s108
      %p119 = scmp.eq.s32.totalorder %s27, 0
      %p120 = por %p118, %p119
      %p121 = scmp.ne.s32.totalorder %s107, %s108
      %p122 = scmp.eq.s32.totalorder %s28, 127
      %p123 = por %p121, %p122
      %p125 = scmp.ne.s32.totalorder %s108, %s124
      %p126 = scmp.eq.s32.totalorder %s28, 0
      %p127 = por %p125, %p126
      %p128 = scmp.le.s32.totalorder 1, %s22
      %p129 = scmp.lt.s32.totalorder %s22, 129
      %p130 = pnand %p128, %p129
      %p131 = pneg %p130
      // Predicated region
      $region9: #{tpu_custom_call.1} parent=5 // pred_check
        _
      $region10: #{tpu_custom_call.1} parent=5 // pred_check_branch
        %133 = sbr.rel (%p130) target = $region12
      $region11: #{tpu_custom_call.1} parent=5 // pred_region
        %s134 = ssub.s32 %s22, 1
        // Predicated region
        $region13: #{tpu_custom_call.1} parent=11 // pred_check
          %p135 = pneg %p43
        $region14: #{tpu_custom_call.1} parent=11 // pred_check_branch
          %137 = sbr.rel (%p135) target = $region16
        $region15: #{tpu_custom_call.1} parent=11 // pred_region
          _
        $region16: #{tpu_custom_call.1} parent=11 // pred_fallthru
          _
        // Predicated region
        $region17: #{tpu_custom_call.1} parent=11 // pred_check
          %p138 = pneg %p64
        $region18: #{tpu_custom_call.1} parent=11 // pred_check_branch
          %140 = sbr.rel (%p138) target = $region20
        $region19: #{tpu_custom_call.1} parent=11 // pred_region
          _
        $region20: #{tpu_custom_call.1} parent=11 // pred_fallthru
          _
      $region12: #{tpu_custom_call.1} parent=5 // pred_fallthru
        _
      %p141 = scmp.lt.s32.totalorder %s22, 128
      // Predicated region
      $region21: #{tpu_custom_call.1} parent=5 // pred_check
        %p142 = pneg %p141
      $region22: #{tpu_custom_call.1} parent=5 // pred_check_branch
        %144 = sbr.rel (%p142) target = $region24
      $region23: #{tpu_custom_call.1} parent=5 // pred_region
        // Predicated region
        $region25: #{tpu_custom_call.1} parent=23 // pred_check
          %p145 = pneg %p86
        $region26: #{tpu_custom_call.1} parent=23 // pred_check_branch
          %147 = sbr.rel (%p145) target = $region28
        $region27: #{tpu_custom_call.1} parent=23 // pred_region
          %s148 = sand.u32 %s76, 1
          %s149 = scalar_lea.sflag [#allocation5], %s148
          %s150 = sand.u32 %s76, 1
          %s151 = smul.addr %s150, 536
          %s152 = scalar_lea.vmem [#allocation4], %s151
          %s153 = sld [smem:[#allocation3 + %s22]]
          %s155 = ssub.s32 8576, 8576
          %156 = vsyncadd %s149, %s155
          %s157 = smul.addr %s153, 67
          %s158 = smul.addr %s157, 128
          %s159 = scalar_lea.hbm %s3, %s158
          %s161 = sshll.u32 %s152, 4
          %s162 = int_to_ptr.vmem [resolvable:$true] %s161
          %164 = dma.hbm_to_vmem [thread:$0]  %s159, 8576, %s162, %s149
        $region28: #{tpu_custom_call.1} parent=23 // pred_fallthru
          _
      $region24: #{tpu_custom_call.1} parent=5 // pred_fallthru
        _
      %p165 = scmp.le.s32.totalorder 1, %s22
      %p166 = scmp.lt.s32.totalorder %s22, 129
      %p167 = pnand %p165, %p166
      %p168 = pneg %p167
      // Predicated region
      $region29: #{tpu_custom_call.1} parent=5 // pred_check
        _
      $region30: #{tpu_custom_call.1} parent=5 // pred_check_branch
        %170 = sbr.rel (%p167) target = $region32
      $region31: #{tpu_custom_call.1} parent=5 // pred_region
        %s171 = ssub.s32 %s22, 1
        %s172 = sand.u32 %s79, 1
        %s173 = scalar_lea.sflag [#allocation5], %s172
        %s174 = sand.u32 %s79, 1
        %s175 = smul.addr %s174, 536
        %s176 = scalar_lea.vmem [#allocation4], %s175
        // Predicated region
        $region33: #{tpu_custom_call.1} parent=31 // pred_check
          %p177 = pneg %p92
        $region34: #{tpu_custom_call.1} parent=31 // pred_check_branch
          %179 = sbr.rel (%p177) target = $region36
        $region35: #{tpu_custom_call.1} parent=31 // pred_region
          %180 = dma.done %s173, 8576
        $region36: #{tpu_custom_call.1} parent=31 // pred_fallthru
          _
        %p181 = pneg %p43
        %p182 = pneg %p40
        %p183 = pneg %p64
        %p184 = pneg %p61
        %s185 = sand.u32 %s79, 1
        %s186 = scalar_lea.sflag [#allocation5], %s185
        %s187 = sand.u32 %s79, 1
        %s188 = smul.addr %s187, 536
        %s189 = scalar_lea.vmem [#allocation4], %s188
        %p190 = pneg %p92
        %p191 = pneg %p89
        %p192 = pneg %p120
        %p193 = pneg %p117
        %s194 = sand.u32 %s107, 1
        %s195 = scalar_lea.sflag [#allocation6], %s194
        %s196 = sand.u32 %s107, 1
        %s197 = smul.addr %s196, 536
        %s198 = scalar_lea.vmem [#allocation7], %s197
        %s199 = sld [smem:[#allocation3 + %s27]]
        %s200 = sld [smem:[#allocation3 + %s27]]
        %s202 = sld [smem:[#allocation3 + %s27]]
        %v203 = vlaneseq
        %v204 = vshrl.u32 %v203, 7
        %s205 = smul.u32 %s202, 8
        %v206 = vstv %s205
        %v207 = vadd.s32 %v204, %v206
        %v208 = vld [vmem:[%s1] sm:$0x1]
        %v209 = vlaneseq
        %v210 = vshrl.u32 %v209, 7
        %v211 = vsub.s32 0, %v210
        %v212 = vrot.slane %v208, %v211
        %vm213 = vcmp.eq.s32.totalorder %v207, %v212
        %v214 = vsel %vm213, 1, 0
        %v215 = vcvt.s32.f32 %v214
        %v216 = vpack.c.bf16 %v215, %v215
        %v217 = vld [vmem:[%s2] sm:$0xff]
        %v218 = vld [vmem:[%s2 + $0x8] sm:$0xff]
        %v219 = vld [vmem:[%s2 + $0x10] sm:$0xff]
        %v220 = vld [vmem:[%s2 + $0x18] sm:$0xff]
        %v221 = vld [vmem:[%s2 + $0x20] sm:$0xff]
        %v222 = vld [vmem:[%s2 + $0x28] sm:$0xff]
        %v223 = vld [vmem:[%s2 + $0x30] sm:$0xff]
        %v224 = vld [vmem:[%s2 + $0x38] sm:$0xff]
        %v225 = vld [vmem:[%s2 + $0x40] sm:$0xff]
        %v226 = vld [vmem:[%s2 + $0x48] sm:$0xff]
        %v227 = vld [vmem:[%s2 + $0x50] sm:$0xff]
        %v228 = vld [vmem:[%s2 + $0x58] sm:$0xff]
        %v229 = vld [vmem:[%s2 + $0x60] sm:$0xff]
        %v230 = vld [vmem:[%s2 + $0x68] sm:$0xff]
        %v231 = vld [vmem:[%s2 + $0x70] sm:$0xff]
        %v232 = vld [vmem:[%s2 + $0x78] sm:$0xff]
        %v233 = vld [vmem:[%s2 + $0x80] sm:$0xff]
        %v234 = vld [vmem:[%s2 + $0x88] sm:$0xff]
        %v235 = vld [vmem:[%s2 + $0x90] sm:$0xff]
        %v236 = vld [vmem:[%s2 + $0x98] sm:$0xff]
        %v237 = vld [vmem:[%s2 + $0xa0] sm:$0xff]
        %v238 = vld [vmem:[%s2 + $0xa8] sm:$0xff]
        %v239 = vld [vmem:[%s2 + $0xb0] sm:$0xff]
        %v240 = vld [vmem:[%s2 + $0xb8] sm:$0xff]
        %v241 = vld [vmem:[%s2 + $0xc0] sm:$0xff]
        %v242 = vld [vmem:[%s2 + $0xc8] sm:$0xff]
        %v243 = vld [vmem:[%s2 + $0xd0] sm:$0xff]
        %v244 = vld [vmem:[%s2 + $0xd8] sm:$0xff]
        %v245 = vld [vmem:[%s2 + $0xe0] sm:$0xff]
        %v246 = vld [vmem:[%s2 + $0xe8] sm:$0xff]
        %v247 = vld [vmem:[%s2 + $0xf0] sm:$0xff]
        %v248 = vld [vmem:[%s2 + $0xf8] sm:$0xff]
        %v249 = vld [vmem:[%s2 + $0x100] sm:$0xff]
        %v250 = vld [vmem:[%s2 + $0x108] sm:$0xf]
        %v251 = vld [vmem:[%s2 + $0x10c] sm:$0xff]
        %v252 = vld [vmem:[%s2 + $0x114] sm:$0xff]
        %v253 = vld [vmem:[%s2 + $0x11c] sm:$0xff]
        %v254 = vld [vmem:[%s2 + $0x124] sm:$0xff]
        %v255 = vld [vmem:[%s2 + $0x12c] sm:$0xff]
        %v256 = vld [vmem:[%s2 + $0x134] sm:$0xff]
        %v257 = vld [vmem:[%s2 + $0x13c] sm:$0xff]
        %v258 = vld [vmem:[%s2 + $0x144] sm:$0xff]
        %v259 = vld [vmem:[%s2 + $0x14c] sm:$0xff]
        %v260 = vld [vmem:[%s2 + $0x154] sm:$0xff]
        %v261 = vld [vmem:[%s2 + $0x15c] sm:$0xff]
        %v262 = vld [vmem:[%s2 + $0x164] sm:$0xff]
        %v263 = vld [vmem:[%s2 + $0x16c] sm:$0xff]
        %v264 = vld [vmem:[%s2 + $0x174] sm:$0xff]
        %v265 = vld [vmem:[%s2 + $0x17c] sm:$0xff]
        %v266 = vld [vmem:[%s2 + $0x184] sm:$0xff]
        %v267 = vld [vmem:[%s2 + $0x18c] sm:$0xff]
        %v268 = vld [vmem:[%s2 + $0x194] sm:$0xff]
        %v269 = vld [vmem:[%s2 + $0x19c] sm:$0xff]
        %v270 = vld [vmem:[%s2 + $0x1a4] sm:$0xff]
        %v271 = vld [vmem:[%s2 + $0x1ac] sm:$0xff]
        %v272 = vld [vmem:[%s2 + $0x1b4] sm:$0xff]
        %v273 = vld [vmem:[%s2 + $0x1bc] sm:$0xff]
        %v274 = vld [vmem:[%s2 + $0x1c4] sm:$0xff]
        %v275 = vld [vmem:[%s2 + $0x1cc] sm:$0xff]
        %v276 = vld [vmem:[%s2 + $0x1d4] sm:$0xff]
        %v277 = vld [vmem:[%s2 + $0x1dc] sm:$0xff]
        %v278 = vld [vmem:[%s2 + $0x1e4] sm:$0xff]
        %v279 = vld [vmem:[%s2 + $0x1ec] sm:$0xff]
        %v280 = vld [vmem:[%s2 + $0x1f4] sm:$0xff]
        %v281 = vld [vmem:[%s2 + $0x1fc] sm:$0xff]
        %v282 = vld [vmem:[%s2 + $0x204] sm:$0xff]
        %v283 = vld [vmem:[%s2 + $0x20c] sm:$0xff]
        %v284 = vld [vmem:[%s2 + $0x214] sm:$0xf]
        %v285 = vld [vmem:[%s2 + $0x218] sm:$0xff]
        %v286 = vld [vmem:[%s2 + $0x220] sm:$0xff]
        %v287 = vld [vmem:[%s2 + $0x228] sm:$0xff]
        %v288 = vld [vmem:[%s2 + $0x230] sm:$0xff]
        %v289 = vld [vmem:[%s2 + $0x238] sm:$0xff]
        %v290 = vld [vmem:[%s2 + $0x240] sm:$0xff]
        %v291 = vld [vmem:[%s2 + $0x248] sm:$0xff]
        %v292 = vld [vmem:[%s2 + $0x250] sm:$0xff]
        %v293 = vld [vmem:[%s2 + $0x258] sm:$0xff]
        %v294 = vld [vmem:[%s2 + $0x260] sm:$0xff]
        %v295 = vld [vmem:[%s2 + $0x268] sm:$0xff]
        %v296 = vld [vmem:[%s2 + $0x270] sm:$0xff]
        %v297 = vld [vmem:[%s2 + $0x278] sm:$0xff]
        %v298 = vld [vmem:[%s2 + $0x280] sm:$0xff]
        %v299 = vld [vmem:[%s2 + $0x288] sm:$0xff]
        %v300 = vld [vmem:[%s2 + $0x290] sm:$0xff]
        %v301 = vld [vmem:[%s2 + $0x298] sm:$0xff]
        %v302 = vld [vmem:[%s2 + $0x2a0] sm:$0xff]
        %v303 = vld [vmem:[%s2 + $0x2a8] sm:$0xff]
        %v304 = vld [vmem:[%s2 + $0x2b0] sm:$0xff]
        %v305 = vld [vmem:[%s2 + $0x2b8] sm:$0xff]
        %v306 = vld [vmem:[%s2 + $0x2c0] sm:$0xff]
        %v307 = vld [vmem:[%s2 + $0x2c8] sm:$0xff]
        %v308 = vld [vmem:[%s2 + $0x2d0] sm:$0xff]
        %v309 = vld [vmem:[%s2 + $0x2d8] sm:$0xff]
        %v310 = vld [vmem:[%s2 + $0x2e0] sm:$0xff]
        %v311 = vld [vmem:[%s2 + $0x2e8] sm:$0xff]
        %v312 = vld [vmem:[%s2 + $0x2f0] sm:$0xff]
        %v313 = vld [vmem:[%s2 + $0x2f8] sm:$0xff]
        %v314 = vld [vmem:[%s2 + $0x300] sm:$0xff]
        %v315 = vld [vmem:[%s2 + $0x308] sm:$0xff]
        %v316 = vld [vmem:[%s2 + $0x310] sm:$0xff]
        %v317 = vld [vmem:[%s2 + $0x318] sm:$0xff]
        %v318 = vld [vmem:[%s2 + $0x320] sm:$0xf]
        %v319 = vld [vmem:[%s2 + $0x324] sm:$0xff]
        %v320 = vld [vmem:[%s2 + $0x32c] sm:$0xff]
        %v321 = vld [vmem:[%s2 + $0x334] sm:$0xff]
        %v322 = vld [vmem:[%s2 + $0x33c] sm:$0xff]
        %v323 = vld [vmem:[%s2 + $0x344] sm:$0xff]
        %v324 = vld [vmem:[%s2 + $0x34c] sm:$0xff]
        %v325 = vld [vmem:[%s2 + $0x354] sm:$0xff]
        %v326 = vld [vmem:[%s2 + $0x35c] sm:$0xff]
        %v327 = vld [vmem:[%s2 + $0x364] sm:$0xff]
        %v328 = vld [vmem:[%s2 + $0x36c] sm:$0xff]
        %v329 = vld [vmem:[%s2 + $0x374] sm:$0xff]
        %v330 = vld [vmem:[%s2 + $0x37c] sm:$0xff]
        %v331 = vld [vmem:[%s2 + $0x384] sm:$0xff]
        %v332 = vld [vmem:[%s2 + $0x38c] sm:$0xff]
        %v333 = vld [vmem:[%s2 + $0x394] sm:$0xff]
        %v334 = vld [vmem:[%s2 + $0x39c] sm:$0xff]
        %v335 = vld [vmem:[%s2 + $0x3a4] sm:$0xff]
        %v336 = vld [vmem:[%s2 + $0x3ac] sm:$0xff]
        %v337 = vld [vmem:[%s2 + $0x3b4] sm:$0xff]
        %v338 = vld [vmem:[%s2 + $0x3bc] sm:$0xff]
        %v339 = vld [vmem:[%s2 + $0x3c4] sm:$0xff]
        %v340 = vld [vmem:[%s2 + $0x3cc] sm:$0xff]
        %v341 = vld [vmem:[%s2 + $0x3d4] sm:$0xff]
        %v342 = vld [vmem:[%s2 + $0x3dc] sm:$0xff]
        %v343 = vld [vmem:[%s2 + $0x3e4] sm:$0xff]
        %v344 = vld [vmem:[%s2 + $0x3ec] sm:$0xff]
        %v345 = vld [vmem:[%s2 + $0x3f4] sm:$0xff]
        %v346 = vld [vmem:[%s2 + $0x3fc] sm:$0xff]
        %v347 = vld [vmem:[%s2 + $0x404] sm:$0xff]
        %v348 = vld [vmem:[%s2 + $0x40c] sm:$0xff]
        %v349 = vld [vmem:[%s2 + $0x414] sm:$0xff]
        %v350 = vld [vmem:[%s2 + $0x41c] sm:$0xff]
        %v351 = vld [vmem:[%s2 + $0x424] sm:$0xff]
        %v352 = vld [vmem:[%s2 + $0x42c] sm:$0xf]
        %v353 = vld [vmem:[%s2 + $0x430] sm:$0xff]
        %v354 = vld [vmem:[%s2 + $0x438] sm:$0xff]
        %v355 = vld [vmem:[%s2 + $0x440] sm:$0xff]
        %v356 = vld [vmem:[%s2 + $0x448] sm:$0xff]
        %v357 = vld [vmem:[%s2 + $0x450] sm:$0xff]
        %v358 = vld [vmem:[%s2 + $0x458] sm:$0xff]
        %v359 = vld [vmem:[%s2 + $0x460] sm:$0xff]
        %v360 = vld [vmem:[%s2 + $0x468] sm:$0xff]
        %v361 = vld [vmem:[%s2 + $0x470] sm:$0xff]
        %v362 = vld [vmem:[%s2 + $0x478] sm:$0xff]
        %v363 = vld [vmem:[%s2 + $0x480] sm:$0xff]
        %v364 = vld [vmem:[%s2 + $0x488] sm:$0xff]
        %v365 = vld [vmem:[%s2 + $0x490] sm:$0xff]
        %v366 = vld [vmem:[%s2 + $0x498] sm:$0xff]
        %v367 = vld [vmem:[%s2 + $0x4a0] sm:$0xff]
        %v368 = vld [vmem:[%s2 + $0x4a8] sm:$0xff]
        %v369 = vld [vmem:[%s2 + $0x4b0] sm:$0xff]
        %v370 = vld [vmem:[%s2 + $0x4b8] sm:$0xff]
        %v371 = vld [vmem:[%s2 + $0x4c0] sm:$0xff]
        %v372 = vld [vmem:[%s2 + $0x4c8] sm:$0xff]
        %v373 = vld [vmem:[%s2 + $0x4d0] sm:$0xff]
        %v374 = vld [vmem:[%s2 + $0x4d8] sm:$0xff]
        %v375 = vld [vmem:[%s2 + $0x4e0] sm:$0xff]
        %v376 = vld [vmem:[%s2 + $0x4e8] sm:$0xff]
        %v377 = vld [vmem:[%s2 + $0x4f0] sm:$0xff]
        %v378 = vld [vmem:[%s2 + $0x4f8] sm:$0xff]
        %v379 = vld [vmem:[%s2 + $0x500] sm:$0xff]
        %v380 = vld [vmem:[%s2 + $0x508] sm:$0xff]
        %v381 = vld [vmem:[%s2 + $0x510] sm:$0xff]
        %v382 = vld [vmem:[%s2 + $0x518] sm:$0xff]
        %v383 = vld [vmem:[%s2 + $0x520] sm:$0xff]
        %v384 = vld [vmem:[%s2 + $0x528] sm:$0xff]
        %v385 = vld [vmem:[%s2 + $0x530] sm:$0xff]
        %v386 = vld [vmem:[%s2 + $0x538] sm:$0xf]
        %v387 = vld [vmem:[%s2 + $0x53c] sm:$0xff]
        %v388 = vld [vmem:[%s2 + $0x544] sm:$0xff]
        %v389 = vld [vmem:[%s2 + $0x54c] sm:$0xff]
        %v390 = vld [vmem:[%s2 + $0x554] sm:$0xff]
        %v391 = vld [vmem:[%s2 + $0x55c] sm:$0xff]
        %v392 = vld [vmem:[%s2 + $0x564] sm:$0xff]
        %v393 = vld [vmem:[%s2 + $0x56c] sm:$0xff]
        %v394 = vld [vmem:[%s2 + $0x574] sm:$0xff]
        %v395 = vld [vmem:[%s2 + $0x57c] sm:$0xff]
        %v396 = vld [vmem:[%s2 + $0x584] sm:$0xff]
        %v397 = vld [vmem:[%s2 + $0x58c] sm:$0xff]
        %v398 = vld [vmem:[%s2 + $0x594] sm:$0xff]
        %v399 = vld [vmem:[%s2 + $0x59c] sm:$0xff]
        %v400 = vld [vmem:[%s2 + $0x5a4] sm:$0xff]
        %v401 = vld [vmem:[%s2 + $0x5ac] sm:$0xff]
        %v402 = vld [vmem:[%s2 + $0x5b4] sm:$0xff]
        %v403 = vld [vmem:[%s2 + $0x5bc] sm:$0xff]
        %v404 = vld [vmem:[%s2 + $0x5c4] sm:$0xff]
        %v405 = vld [vmem:[%s2 + $0x5cc] sm:$0xff]
        %v406 = vld [vmem:[%s2 + $0x5d4] sm:$0xff]
        %v407 = vld [vmem:[%s2 + $0x5dc] sm:$0xff]
        %v408 = vld [vmem:[%s2 + $0x5e4] sm:$0xff]
        %v409 = vld [vmem:[%s2 + $0x5ec] sm:$0xff]
        %v410 = vld [vmem:[%s2 + $0x5f4] sm:$0xff]
        %v411 = vld [vmem:[%s2 + $0x5fc] sm:$0xff]
        %v412 = vld [vmem:[%s2 + $0x604] sm:$0xff]
        %v413 = vld [vmem:[%s2 + $0x60c] sm:$0xff]
        %v414 = vld [vmem:[%s2 + $0x614] sm:$0xff]
        %v415 = vld [vmem:[%s2 + $0x61c] sm:$0xff]
        %v416 = vld [vmem:[%s2 + $0x624] sm:$0xff]
        %v417 = vld [vmem:[%s2 + $0x62c] sm:$0xff]
        %v418 = vld [vmem:[%s2 + $0x634] sm:$0xff]
        %v419 = vld [vmem:[%s2 + $0x63c] sm:$0xff]
        %v420 = vld [vmem:[%s2 + $0x644] sm:$0xf]
        %v421 = vld [vmem:[%s2 + $0x648] sm:$0xff]
        %v422 = vld [vmem:[%s2 + $0x650] sm:$0xff]
        %v423 = vld [vmem:[%s2 + $0x658] sm:$0xff]
        %v424 = vld [vmem:[%s2 + $0x660] sm:$0xff]
        %v425 = vld [vmem:[%s2 + $0x668] sm:$0xff]
        %v426 = vld [vmem:[%s2 + $0x670] sm:$0xff]
        %v427 = vld [vmem:[%s2 + $0x678] sm:$0xff]
        %v428 = vld [vmem:[%s2 + $0x680] sm:$0xff]
        %v429 = vld [vmem:[%s2 + $0x688] sm:$0xff]
        %v430 = vld [vmem:[%s2 + $0x690] sm:$0xff]
        %v431 = vld [vmem:[%s2 + $0x698] sm:$0xff]
        %v432 = vld [vmem:[%s2 + $0x6a0] sm:$0xff]
        %v433 = vld [vmem:[%s2 + $0x6a8] sm:$0xff]
        %v434 = vld [vmem:[%s2 + $0x6b0] sm:$0xff]
        %v435 = vld [vmem:[%s2 + $0x6b8] sm:$0xff]
        %v436 = vld [vmem:[%s2 + $0x6c0] sm:$0xff]
        %v437 = vld [vmem:[%s2 + $0x6c8] sm:$0xff]
        %v438 = vld [vmem:[%s2 + $0x6d0] sm:$0xff]
        %v439 = vld [vmem:[%s2 + $0x6d8] sm:$0xff]
        %v440 = vld [vmem:[%s2 + $0x6e0] sm:$0xff]
        %v441 = vld [vmem:[%s2 + $0x6e8] sm:$0xff]
        %v442 = vld [vmem:[%s2 + $0x6f0] sm:$0xff]
        %v443 = vld [vmem:[%s2 + $0x6f8] sm:$0xff]
        %v444 = vld [vmem:[%s2 + $0x700] sm:$0xff]
        %v445 = vld [vmem:[%s2 + $0x708] sm:$0xff]
        %v446 = vld [vmem:[%s2 + $0x710] sm:$0xff]
        %v447 = vld [vmem:[%s2 + $0x718] sm:$0xff]
        %v448 = vld [vmem:[%s2 + $0x720] sm:$0xff]
        %v449 = vld [vmem:[%s2 + $0x728] sm:$0xff]
        %v450 = vld [vmem:[%s2 + $0x730] sm:$0xff]
        %v451 = vld [vmem:[%s2 + $0x738] sm:$0xff]
        %v452 = vld [vmem:[%s2 + $0x740] sm:$0xff]
        %v453 = vld [vmem:[%s2 + $0x748] sm:$0xff]
        %v454 = vld [vmem:[%s2 + $0x750] sm:$0xf]
        %v455 = vld [vmem:[%s2 + $0x754] sm:$0xff]
        %v456 = vld [vmem:[%s2 + $0x75c] sm:$0xff]
        %v457 = vld [vmem:[%s2 + $0x764] sm:$0xff]
        %v458 = vld [vmem:[%s2 + $0x76c] sm:$0xff]
        %v459 = vld [vmem:[%s2 + $0x774] sm:$0xff]
        %v460 = vld [vmem:[%s2 + $0x77c] sm:$0xff]
        %v461 = vld [vmem:[%s2 + $0x784] sm:$0xff]
        %v462 = vld [vmem:[%s2 + $0x78c] sm:$0xff]
        %v463 = vld [vmem:[%s2 + $0x794] sm:$0xff]
        %v464 = vld [vmem:[%s2 + $0x79c] sm:$0xff]
        %v465 = vld [vmem:[%s2 + $0x7a4] sm:$0xff]
        %v466 = vld [vmem:[%s2 + $0x7ac] sm:$0xff]
        %v467 = vld [vmem:[%s2 + $0x7b4] sm:$0xff]
        %v468 = vld [vmem:[%s2 + $0x7bc] sm:$0xff]
        %v469 = vld [vmem:[%s2 + $0x7c4] sm:$0xff]
        %v470 = vld [vmem:[%s2 + $0x7cc] sm:$0xff]
        %v471 = vld [vmem:[%s2 + $0x7d4] sm:$0xff]
        %v472 = vld [vmem:[%s2 + $0x7dc] sm:$0xff]
        %v473 = vld [vmem:[%s2 + $0x7e4] sm:$0xff]
        %v474 = vld [vmem:[%s2 + $0x7ec] sm:$0xff]
        %v475 = vld [vmem:[%s2 + $0x7f4] sm:$0xff]
        %v476 = vld [vmem:[%s2 + $0x7fc] sm:$0xff]
        %v477 = vld [vmem:[%s2 + $0x804] sm:$0xff]
        %v478 = vld [vmem:[%s2 + $0x80c] sm:$0xff]
        %v479 = vld [vmem:[%s2 + $0x814] sm:$0xff]
        %v480 = vld [vmem:[%s2 + $0x81c] sm:$0xff]
        %v481 = vld [vmem:[%s2 + $0x824] sm:$0xff]
        %v482 = vld [vmem:[%s2 + $0x82c] sm:$0xff]
        %v483 = vld [vmem:[%s2 + $0x834] sm:$0xff]
        %v484 = vld [vmem:[%s2 + $0x83c] sm:$0xff]
        %v485 = vld [vmem:[%s2 + $0x844] sm:$0xff]
        %v486 = vld [vmem:[%s2 + $0x84c] sm:$0xff]
        %v487 = vld [vmem:[%s2 + $0x854] sm:$0xff]
        %v488 = vld [vmem:[%s2 + $0x85c] sm:$0xf]
        %v489 = vld [vmem:[%s2 + $0x860] sm:$0xff]
        %v490 = vld [vmem:[%s2 + $0x868] sm:$0xff]
        %v491 = vld [vmem:[%s2 + $0x870] sm:$0xff]
        %v492 = vld [vmem:[%s2 + $0x878] sm:$0xff]
        %v493 = vld [vmem:[%s2 + $0x880] sm:$0xff]
        %v494 = vld [vmem:[%s2 + $0x888] sm:$0xff]
        %v495 = vld [vmem:[%s2 + $0x890] sm:$0xff]
        %v496 = vld [vmem:[%s2 + $0x898] sm:$0xff]
        %v497 = vld [vmem:[%s2 + $0x8a0] sm:$0xff]
        %v498 = vld [vmem:[%s2 + $0x8a8] sm:$0xff]
        %v499 = vld [vmem:[%s2 + $0x8b0] sm:$0xff]
        %v500 = vld [vmem:[%s2 + $0x8b8] sm:$0xff]
        %v501 = vld [vmem:[%s2 + $0x8c0] sm:$0xff]
        %v502 = vld [vmem:[%s2 + $0x8c8] sm:$0xff]
        %v503 = vld [vmem:[%s2 + $0x8d0] sm:$0xff]
        %v504 = vld [vmem:[%s2 + $0x8d8] sm:$0xff]
        %v505 = vld [vmem:[%s2 + $0x8e0] sm:$0xff]
        %v506 = vld [vmem:[%s2 + $0x8e8] sm:$0xff]
        %v507 = vld [vmem:[%s2 + $0x8f0] sm:$0xff]
        %v508 = vld [vmem:[%s2 + $0x8f8] sm:$0xff]
        %v509 = vld [vmem:[%s2 + $0x900] sm:$0xff]
        %v510 = vld [vmem:[%s2 + $0x908] sm:$0xff]
        %v511 = vld [vmem:[%s2 + $0x910] sm:$0xff]
        %v512 = vld [vmem:[%s2 + $0x918] sm:$0xff]
        %v513 = vld [vmem:[%s2 + $0x920] sm:$0xff]
        %v514 = vld [vmem:[%s2 + $0x928] sm:$0xff]
        %v515 = vld [vmem:[%s2 + $0x930] sm:$0xff]
        %v516 = vld [vmem:[%s2 + $0x938] sm:$0xff]
        %v517 = vld [vmem:[%s2 + $0x940] sm:$0xff]
        %v518 = vld [vmem:[%s2 + $0x948] sm:$0xff]
        %v519 = vld [vmem:[%s2 + $0x950] sm:$0xff]
        %v520 = vld [vmem:[%s2 + $0x958] sm:$0xff]
        %v521 = vld [vmem:[%s2 + $0x960] sm:$0xff]
        %v522 = vld [vmem:[%s2 + $0x968] sm:$0xf]
        %v523 = vld [vmem:[%s2 + $0x96c] sm:$0xff]
        %v524 = vld [vmem:[%s2 + $0x974] sm:$0xff]
        %v525 = vld [vmem:[%s2 + $0x97c] sm:$0xff]
        %v526 = vld [vmem:[%s2 + $0x984] sm:$0xff]
        %v527 = vld [vmem:[%s2 + $0x98c] sm:$0xff]
        %v528 = vld [vmem:[%s2 + $0x994] sm:$0xff]
        %v529 = vld [vmem:[%s2 + $0x99c] sm:$0xff]
        %v530 = vld [vmem:[%s2 + $0x9a4] sm:$0xff]
        %v531 = vld [vmem:[%s2 + $0x9ac] sm:$0xff]
        %v532 = vld [vmem:[%s2 + $0x9b4] sm:$0xff]
        %v533 = vld [vmem:[%s2 + $0x9bc] sm:$0xff]
        %v534 = vld [vmem:[%s2 + $0x9c4] sm:$0xff]
        %v535 = vld [vmem:[%s2 + $0x9cc] sm:$0xff]
        %v536 = vld [vmem:[%s2 + $0x9d4] sm:$0xff]
        %v537 = vld [vmem:[%s2 + $0x9dc] sm:$0xff]
        %v538 = vld [vmem:[%s2 + $0x9e4] sm:$0xff]
        %v539 = vld [vmem:[%s2 + $0x9ec] sm:$0xff]
        %v540 = vld [vmem:[%s2 + $0x9f4] sm:$0xff]
        %v541 = vld [vmem:[%s2 + $0x9fc] sm:$0xff]
        %v542 = vld [vmem:[%s2 + $0xa04] sm:$0xff]
        %v543 = vld [vmem:[%s2 + $0xa0c] sm:$0xff]
        %v544 = vld [vmem:[%s2 + $0xa14] sm:$0xff]
        %v545 = vld [vmem:[%s2 + $0xa1c] sm:$0xff]
        %v546 = vld [vmem:[%s2 + $0xa24] sm:$0xff]
        %v547 = vld [vmem:[%s2 + $0xa2c] sm:$0xff]
        %v548 = vld [vmem:[%s2 + $0xa34] sm:$0xff]
        %v549 = vld [vmem:[%s2 + $0xa3c] sm:$0xff]
        %v550 = vld [vmem:[%s2 + $0xa44] sm:$0xff]
        %v551 = vld [vmem:[%s2 + $0xa4c] sm:$0xff]
        %v552 = vld [vmem:[%s2 + $0xa54] sm:$0xff]
        %v553 = vld [vmem:[%s2 + $0xa5c] sm:$0xff]
        %v554 = vld [vmem:[%s2 + $0xa64] sm:$0xff]
        %v555 = vld [vmem:[%s2 + $0xa6c] sm:$0xff]
        %v556 = vld [vmem:[%s2 + $0xa74] sm:$0xf]
        %v557 = vld [vmem:[%s2 + $0xa78] sm:$0xff]
        %v558 = vld [vmem:[%s2 + $0xa80] sm:$0xff]
        %v559 = vld [vmem:[%s2 + $0xa88] sm:$0xff]
        %v560 = vld [vmem:[%s2 + $0xa90] sm:$0xff]
        %v561 = vld [vmem:[%s2 + $0xa98] sm:$0xff]
        %v562 = vld [vmem:[%s2 + $0xaa0] sm:$0xff]
        %v563 = vld [vmem:[%s2 + $0xaa8] sm:$0xff]
        %v564 = vld [vmem:[%s2 + $0xab0] sm:$0xff]
        %v565 = vld [vmem:[%s2 + $0xab8] sm:$0xff]
        %v566 = vld [vmem:[%s2 + $0xac0] sm:$0xff]
        %v567 = vld [vmem:[%s2 + $0xac8] sm:$0xff]
        %v568 = vld [vmem:[%s2 + $0xad0] sm:$0xff]
        %v569 = vld [vmem:[%s2 + $0xad8] sm:$0xff]
        %v570 = vld [vmem:[%s2 + $0xae0] sm:$0xff]
        %v571 = vld [vmem:[%s2 + $0xae8] sm:$0xff]
        %v572 = vld [vmem:[%s2 + $0xaf0] sm:$0xff]
        %v573 = vld [vmem:[%s2 + $0xaf8] sm:$0xff]
        %v574 = vld [vmem:[%s2 + $0xb00] sm:$0xff]
        %v575 = vld [vmem:[%s2 + $0xb08] sm:$0xff]
        %v576 = vld [vmem:[%s2 + $0xb10] sm:$0xff]
        %v577 = vld [vmem:[%s2 + $0xb18] sm:$0xff]
        %v578 = vld [vmem:[%s2 + $0xb20] sm:$0xff]
        %v579 = vld [vmem:[%s2 + $0xb28] sm:$0xff]
        %v580 = vld [vmem:[%s2 + $0xb30] sm:$0xff]
        %v581 = vld [vmem:[%s2 + $0xb38] sm:$0xff]
        %v582 = vld [vmem:[%s2 + $0xb40] sm:$0xff]
        %v583 = vld [vmem:[%s2 + $0xb48] sm:$0xff]
        %v584 = vld [vmem:[%s2 + $0xb50] sm:$0xff]
        %v585 = vld [vmem:[%s2 + $0xb58] sm:$0xff]
        %v586 = vld [vmem:[%s2 + $0xb60] sm:$0xff]
        %v587 = vld [vmem:[%s2 + $0xb68] sm:$0xff]
        %v588 = vld [vmem:[%s2 + $0xb70] sm:$0xff]
        %v589 = vld [vmem:[%s2 + $0xb78] sm:$0xff]
        %v590 = vld [vmem:[%s2 + $0xb80] sm:$0xf]
        %v591 = vld [vmem:[%s2 + $0xb84] sm:$0xff]
        %v592 = vld [vmem:[%s2 + $0xb8c] sm:$0xff]
        %v593 = vld [vmem:[%s2 + $0xb94] sm:$0xff]
        %v594 = vld [vmem:[%s2 + $0xb9c] sm:$0xff]
        %v595 = vld [vmem:[%s2 + $0xba4] sm:$0xff]
        %v596 = vld [vmem:[%s2 + $0xbac] sm:$0xff]
        %v597 = vld [vmem:[%s2 + $0xbb4] sm:$0xff]
        %v598 = vld [vmem:[%s2 + $0xbbc] sm:$0xff]
        %v599 = vld [vmem:[%s2 + $0xbc4] sm:$0xff]
        %v600 = vld [vmem:[%s2 + $0xbcc] sm:$0xff]
        %v601 = vld [vmem:[%s2 + $0xbd4] sm:$0xff]
        %v602 = vld [vmem:[%s2 + $0xbdc] sm:$0xff]
        %v603 = vld [vmem:[%s2 + $0xbe4] sm:$0xff]
        %v604 = vld [vmem:[%s2 + $0xbec] sm:$0xff]
        %v605 = vld [vmem:[%s2 + $0xbf4] sm:$0xff]
        %v606 = vld [vmem:[%s2 + $0xbfc] sm:$0xff]
        %v607 = vld [vmem:[%s2 + $0xc04] sm:$0xff]
        %v608 = vld [vmem:[%s2 + $0xc0c] sm:$0xff]
        %v609 = vld [vmem:[%s2 + $0xc14] sm:$0xff]
        %v610 = vld [vmem:[%s2 + $0xc1c] sm:$0xff]
        %v611 = vld [vmem:[%s2 + $0xc24] sm:$0xff]
        %v612 = vld [vmem:[%s2 + $0xc2c] sm:$0xff]
        %v613 = vld [vmem:[%s2 + $0xc34] sm:$0xff]
        %v614 = vld [vmem:[%s2 + $0xc3c] sm:$0xff]
        %v615 = vld [vmem:[%s2 + $0xc44] sm:$0xff]
        %v616 = vld [vmem:[%s2 + $0xc4c] sm:$0xff]
        %v617 = vld [vmem:[%s2 + $0xc54] sm:$0xff]
        %v618 = vld [vmem:[%s2 + $0xc5c] sm:$0xff]
        %v619 = vld [vmem:[%s2 + $0xc64] sm:$0xff]
        %v620 = vld [vmem:[%s2 + $0xc6c] sm:$0xff]
        %v621 = vld [vmem:[%s2 + $0xc74] sm:$0xff]
        %v622 = vld [vmem:[%s2 + $0xc7c] sm:$0xff]
        %v623 = vld [vmem:[%s2 + $0xc84] sm:$0xff]
        %v624 = vld [vmem:[%s2 + $0xc8c] sm:$0xf]
        %v625 = vld [vmem:[%s2 + $0xc90] sm:$0xff]
        %v626 = vld [vmem:[%s2 + $0xc98] sm:$0xff]
        %v627 = vld [vmem:[%s2 + $0xca0] sm:$0xff]
        %v628 = vld [vmem:[%s2 + $0xca8] sm:$0xff]
        %v629 = vld [vmem:[%s2 + $0xcb0] sm:$0xff]
        %v630 = vld [vmem:[%s2 + $0xcb8] sm:$0xff]
        %v631 = vld [vmem:[%s2 + $0xcc0] sm:$0xff]
        %v632 = vld [vmem:[%s2 + $0xcc8] sm:$0xff]
        %v633 = vld [vmem:[%s2 + $0xcd0] sm:$0xff]
        %v634 = vld [vmem:[%s2 + $0xcd8] sm:$0xff]
        %v635 = vld [vmem:[%s2 + $0xce0] sm:$0xff]
        %v636 = vld [vmem:[%s2 + $0xce8] sm:$0xff]
        %v637 = vld [vmem:[%s2 + $0xcf0] sm:$0xff]
        %v638 = vld [vmem:[%s2 + $0xcf8] sm:$0xff]
        %v639 = vld [vmem:[%s2 + $0xd00] sm:$0xff]
        %v640 = vld [vmem:[%s2 + $0xd08] sm:$0xff]
        %v641 = vld [vmem:[%s2 + $0xd10] sm:$0xff]
        %v642 = vld [vmem:[%s2 + $0xd18] sm:$0xff]
        %v643 = vld [vmem:[%s2 + $0xd20] sm:$0xff]
        %v644 = vld [vmem:[%s2 + $0xd28] sm:$0xff]
        %v645 = vld [vmem:[%s2 + $0xd30] sm:$0xff]
        %v646 = vld [vmem:[%s2 + $0xd38] sm:$0xff]
        %v647 = vld [vmem:[%s2 + $0xd40] sm:$0xff]
        %v648 = vld [vmem:[%s2 + $0xd48] sm:$0xff]
        %v649 = vld [vmem:[%s2 + $0xd50] sm:$0xff]
        %v650 = vld [vmem:[%s2 + $0xd58] sm:$0xff]
        %v651 = vld [vmem:[%s2 + $0xd60] sm:$0xff]
        %v652 = vld [vmem:[%s2 + $0xd68] sm:$0xff]
        %v653 = vld [vmem:[%s2 + $0xd70] sm:$0xff]
        %v654 = vld [vmem:[%s2 + $0xd78] sm:$0xff]
        %v655 = vld [vmem:[%s2 + $0xd80] sm:$0xff]
        %v656 = vld [vmem:[%s2 + $0xd88] sm:$0xff]
        %v657 = vld [vmem:[%s2 + $0xd90] sm:$0xff]
        %v658 = vld [vmem:[%s2 + $0xd98] sm:$0xf]
        %v659 = vld [vmem:[%s2 + $0xd9c] sm:$0xff]
        %v660 = vld [vmem:[%s2 + $0xda4] sm:$0xff]
        %v661 = vld [vmem:[%s2 + $0xdac] sm:$0xff]
        %v662 = vld [vmem:[%s2 + $0xdb4] sm:$0xff]
        %v663 = vld [vmem:[%s2 + $0xdbc] sm:$0xff]
        %v664 = vld [vmem:[%s2 + $0xdc4] sm:$0xff]
        %v665 = vld [vmem:[%s2 + $0xdcc] sm:$0xff]
        %v666 = vld [vmem:[%s2 + $0xdd4] sm:$0xff]
        %v667 = vld [vmem:[%s2 + $0xddc] sm:$0xff]
        %v668 = vld [vmem:[%s2 + $0xde4] sm:$0xff]
        %v669 = vld [vmem:[%s2 + $0xdec] sm:$0xff]
        %v670 = vld [vmem:[%s2 + $0xdf4] sm:$0xff]
        %v671 = vld [vmem:[%s2 + $0xdfc] sm:$0xff]
        %v672 = vld [vmem:[%s2 + $0xe04] sm:$0xff]
        %v673 = vld [vmem:[%s2 + $0xe0c] sm:$0xff]
        %v674 = vld [vmem:[%s2 + $0xe14] sm:$0xff]
        %v675 = vld [vmem:[%s2 + $0xe1c] sm:$0xff]
        %v676 = vld [vmem:[%s2 + $0xe24] sm:$0xff]
        %v677 = vld [vmem:[%s2 + $0xe2c] sm:$0xff]
        %v678 = vld [vmem:[%s2 + $0xe34] sm:$0xff]
        %v679 = vld [vmem:[%s2 + $0xe3c] sm:$0xff]
        %v680 = vld [vmem:[%s2 + $0xe44] sm:$0xff]
        %v681 = vld [vmem:[%s2 + $0xe4c] sm:$0xff]
        %v682 = vld [vmem:[%s2 + $0xe54] sm:$0xff]
        %v683 = vld [vmem:[%s2 + $0xe5c] sm:$0xff]
        %v684 = vld [vmem:[%s2 + $0xe64] sm:$0xff]
        %v685 = vld [vmem:[%s2 + $0xe6c] sm:$0xff]
        %v686 = vld [vmem:[%s2 + $0xe74] sm:$0xff]
        %v687 = vld [vmem:[%s2 + $0xe7c] sm:$0xff]
        %v688 = vld [vmem:[%s2 + $0xe84] sm:$0xff]
        %v689 = vld [vmem:[%s2 + $0xe8c] sm:$0xff]
        %v690 = vld [vmem:[%s2 + $0xe94] sm:$0xff]
        %v691 = vld [vmem:[%s2 + $0xe9c] sm:$0xff]
        %v692 = vld [vmem:[%s2 + $0xea4] sm:$0xf]
        %v693 = vld [vmem:[%s2 + $0xea8] sm:$0xff]
        %v694 = vld [vmem:[%s2 + $0xeb0] sm:$0xff]
        %v695 = vld [vmem:[%s2 + $0xeb8] sm:$0xff]
        %v696 = vld [vmem:[%s2 + $0xec0] sm:$0xff]
        %v697 = vld [vmem:[%s2 + $0xec8] sm:$0xff]
        %v698 = vld [vmem:[%s2 + $0xed0] sm:$0xff]
        %v699 = vld [vmem:[%s2 + $0xed8] sm:$0xff]
        %v700 = vld [vmem:[%s2 + $0xee0] sm:$0xff]
        %v701 = vld [vmem:[%s2 + $0xee8] sm:$0xff]
        %v702 = vld [vmem:[%s2 + $0xef0] sm:$0xff]
        %v703 = vld [vmem:[%s2 + $0xef8] sm:$0xff]
        %v704 = vld [vmem:[%s2 + $0xf00] sm:$0xff]
        %v705 = vld [vmem:[%s2 + $0xf08] sm:$0xff]
        %v706 = vld [vmem:[%s2 + $0xf10] sm:$0xff]
        %v707 = vld [vmem:[%s2 + $0xf18] sm:$0xff]
        %v708 = vld [vmem:[%s2 + $0xf20] sm:$0xff]
        %v709 = vld [vmem:[%s2 + $0xf28] sm:$0xff]
        %v710 = vld [vmem:[%s2 + $0xf30] sm:$0xff]
        %v711 = vld [vmem:[%s2 + $0xf38] sm:$0xff]
        %v712 = vld [vmem:[%s2 + $0xf40] sm:$0xff]
        %v713 = vld [vmem:[%s2 + $0xf48] sm:$0xff]
        %v714 = vld [vmem:[%s2 + $0xf50] sm:$0xff]
        %v715 = vld [vmem:[%s2 + $0xf58] sm:$0xff]
        %v716 = vld [vmem:[%s2 + $0xf60] sm:$0xff]
        %v717 = vld [vmem:[%s2 + $0xf68] sm:$0xff]
        %v718 = vld [vmem:[%s2 + $0xf70] sm:$0xff]
        %v719 = vld [vmem:[%s2 + $0xf78] sm:$0xff]
        %v720 = vld [vmem:[%s2 + $0xf80] sm:$0xff]
        %v721 = vld [vmem:[%s2 + $0xf88] sm:$0xff]
        %v722 = vld [vmem:[%s2 + $0xf90] sm:$0xff]
        %v723 = vld [vmem:[%s2 + $0xf98] sm:$0xff]
        %v724 = vld [vmem:[%s2 + $0xfa0] sm:$0xff]
        %v725 = vld [vmem:[%s2 + $0xfa8] sm:$0xff]
        %v726 = vld [vmem:[%s2 + $0xfb0] sm:$0xf]
        %v727 = vld [vmem:[%s2 + $0xfb4] sm:$0xff]
        %v728 = vld [vmem:[%s2 + $0xfbc] sm:$0xff]
        %v729 = vld [vmem:[%s2 + $0xfc4] sm:$0xff]
        %v730 = vld [vmem:[%s2 + $0xfcc] sm:$0xff]
        %v731 = vld [vmem:[%s2 + $0xfd4] sm:$0xff]
        %v732 = vld [vmem:[%s2 + $0xfdc] sm:$0xff]
        %v733 = vld [vmem:[%s2 + $0xfe4] sm:$0xff]
        %v734 = vld [vmem:[%s2 + $0xfec] sm:$0xff]
        %v735 = vld [vmem:[%s2 + $0xff4] sm:$0xff]
        %v736 = vld [vmem:[%s2 + $0xffc] sm:$0xff]
        %v737 = vld [vmem:[%s2 + $0x1004] sm:$0xff]
        %v738 = vld [vmem:[%s2 + $0x100c] sm:$0xff]
        %v739 = vld [vmem:[%s2 + $0x1014] sm:$0xff]
        %v740 = vld [vmem:[%s2 + $0x101c] sm:$0xff]
        %v741 = vld [vmem:[%s2 + $0x1024] sm:$0xff]
        %v742 = vld [vmem:[%s2 + $0x102c] sm:$0xff]
        %v743 = vld [vmem:[%s2 + $0x1034] sm:$0xff]
        %v744 = vld [vmem:[%s2 + $0x103c] sm:$0xff]
        %v745 = vld [vmem:[%s2 + $0x1044] sm:$0xff]
        %v746 = vld [vmem:[%s2 + $0x104c] sm:$0xff]
        %v747 = vld [vmem:[%s2 + $0x1054] sm:$0xff]
        %v748 = vld [vmem:[%s2 + $0x105c] sm:$0xff]
        %v749 = vld [vmem:[%s2 + $0x1064] sm:$0xff]
        %v750 = vld [vmem:[%s2 + $0x106c] sm:$0xff]
        %v751 = vld [vmem:[%s2 + $0x1074] sm:$0xff]
        %v752 = vld [vmem:[%s2 + $0x107c] sm:$0xff]
        %v753 = vld [vmem:[%s2 + $0x1084] sm:$0xff]
        %v754 = vld [vmem:[%s2 + $0x108c] sm:$0xff]
        %v755 = vld [vmem:[%s2 + $0x1094] sm:$0xff]
        %v756 = vld [vmem:[%s2 + $0x109c] sm:$0xff]
        %v757 = vld [vmem:[%s2 + $0x10a4] sm:$0xff]
        %v758 = vld [vmem:[%s2 + $0x10ac] sm:$0xff]
        %v759 = vld [vmem:[%s2 + $0x10b4] sm:$0xff]
        %v760 = vld [vmem:[%s2 + $0x10bc] sm:$0xf]
        %v1305 = vunpack.c.l.b16 %v217
        %v1306 = vunpack.c.h.b16 %v217
        %v1307 = vunpack.c.l.b16 %v218
        %v1308 = vunpack.c.h.b16 %v218
        %v1309 = vunpack.c.l.b16 %v219
        %v1310 = vunpack.c.h.b16 %v219
        %v1311 = vunpack.c.l.b16 %v220
        %v1312 = vunpack.c.h.b16 %v220
        %v1313 = vunpack.c.l.b16 %v221
        %v1314 = vunpack.c.h.b16 %v221
        %v1315 = vunpack.c.l.b16 %v222
        %v1316 = vunpack.c.h.b16 %v222
        %v1317 = vunpack.c.l.b16 %v223
        %v1318 = vunpack.c.h.b16 %v223
        %v1319 = vunpack.c.l.b16 %v224
        %v1320 = vunpack.c.h.b16 %v224
        %v1321 = vunpack.c.l.b16 %v225
        %v1322 = vunpack.c.h.b16 %v225
        %v1323 = vunpack.c.l.b16 %v226
        %v1324 = vunpack.c.h.b16 %v226
        %v1325 = vunpack.c.l.b16 %v227
        %v1326 = vunpack.c.h.b16 %v227
        %v1327 = vunpack.c.l.b16 %v228
        %v1328 = vunpack.c.h.b16 %v228
        %v1329 = vunpack.c.l.b16 %v229
        %v1330 = vunpack.c.h.b16 %v229
        %v1331 = vunpack.c.l.b16 %v230
        %v1332 = vunpack.c.h.b16 %v230
        %v1333 = vunpack.c.l.b16 %v231
        %v1334 = vunpack.c.h.b16 %v231
        %v1335 = vunpack.c.l.b16 %v232
        %v1336 = vunpack.c.h.b16 %v232
        %v1337 = vunpack.c.l.b16 %v233
        %v1338 = vunpack.c.h.b16 %v233
        %v1339 = vunpack.c.l.b16 %v234
        %v1340 = vunpack.c.h.b16 %v234
        %v1341 = vunpack.c.l.b16 %v235
        %v1342 = vunpack.c.h.b16 %v235
        %v1343 = vunpack.c.l.b16 %v236
        %v1344 = vunpack.c.h.b16 %v236
        %v1345 = vunpack.c.l.b16 %v237
        %v1346 = vunpack.c.h.b16 %v237
        %v1347 = vunpack.c.l.b16 %v238
        %v1348 = vunpack.c.h.b16 %v238
        %v1349 = vunpack.c.l.b16 %v239
        %v1350 = vunpack.c.h.b16 %v239
        %v1351 = vunpack.c.l.b16 %v240
        %v1352 = vunpack.c.h.b16 %v240
        %v1353 = vunpack.c.l.b16 %v241
        %v1354 = vunpack.c.h.b16 %v241
        %v1355 = vunpack.c.l.b16 %v242
        %v1356 = vunpack.c.h.b16 %v242
        %v1357 = vunpack.c.l.b16 %v243
        %v1358 = vunpack.c.h.b16 %v243
        %v1359 = vunpack.c.l.b16 %v244
        %v1360 = vunpack.c.h.b16 %v244
        %v1361 = vunpack.c.l.b16 %v245
        %v1362 = vunpack.c.h.b16 %v245
        %v1363 = vunpack.c.l.b16 %v246
        %v1364 = vunpack.c.h.b16 %v246
        %v1365 = vunpack.c.l.b16 %v247
        %v1366 = vunpack.c.h.b16 %v247
        %v1367 = vunpack.c.l.b16 %v248
        %v1368 = vunpack.c.h.b16 %v248
        %v1369 = vunpack.c.l.b16 %v249
        %v1370 = vunpack.c.h.b16 %v249
        %v1371 = vunpack.c.l.b16 %v250
        %v1372 = vunpack.c.l.b16 %v251
        %v1373 = vunpack.c.h.b16 %v251
        %v1374 = vunpack.c.l.b16 %v252
        %v1375 = vunpack.c.h.b16 %v252
        %v1376 = vunpack.c.l.b16 %v253
        %v1377 = vunpack.c.h.b16 %v253
        %v1378 = vunpack.c.l.b16 %v254
        %v1379 = vunpack.c.h.b16 %v254
        %v1380 = vunpack.c.l.b16 %v255
        %v1381 = vunpack.c.h.b16 %v255
        %v1382 = vunpack.c.l.b16 %v256
        %v1383 = vunpack.c.h.b16 %v256
        %v1384 = vunpack.c.l.b16 %v257
        %v1385 = vunpack.c.h.b16 %v257
        %v1386 = vunpack.c.l.b16 %v258
        %v1387 = vunpack.c.h.b16 %v258
        %v1388 = vunpack.c.l.b16 %v259
        %v1389 = vunpack.c.h.b16 %v259
        %v1390 = vunpack.c.l.b16 %v260
        %v1391 = vunpack.c.h.b16 %v260
        %v1392 = vunpack.c.l.b16 %v261
        %v1393 = vunpack.c.h.b16 %v261
        %v1394 = vunpack.c.l.b16 %v262
        %v1395 = vunpack.c.h.b16 %v262
        %v1396 = vunpack.c.l.b16 %v263
        %v1397 = vunpack.c.h.b16 %v263
        %v1398 = vunpack.c.l.b16 %v264
        %v1399 = vunpack.c.h.b16 %v264
        %v1400 = vunpack.c.l.b16 %v265
        %v1401 = vunpack.c.h.b16 %v265
        %v1402 = vunpack.c.l.b16 %v266
        %v1403 = vunpack.c.h.b16 %v266
        %v1404 = vunpack.c.l.b16 %v267
        %v1405 = vunpack.c.h.b16 %v267
        %v1406 = vunpack.c.l.b16 %v268
        %v1407 = vunpack.c.h.b16 %v268
        %v1408 = vunpack.c.l.b16 %v269
        %v1409 = vunpack.c.h.b16 %v269
        %v1410 = vunpack.c.l.b16 %v270
        %v1411 = vunpack.c.h.b16 %v270
        %v1412 = vunpack.c.l.b16 %v271
        %v1413 = vunpack.c.h.b16 %v271
        %v1414 = vunpack.c.l.b16 %v272
        %v1415 = vunpack.c.h.b16 %v272
        %v1416 = vunpack.c.l.b16 %v273
        %v1417 = vunpack.c.h.b16 %v273
        %v1418 = vunpack.c.l.b16 %v274
        %v1419 = vunpack.c.h.b16 %v274
        %v1420 = vunpack.c.l.b16 %v275
        %v1421 = vunpack.c.h.b16 %v275
        %v1422 = vunpack.c.l.b16 %v276
        %v1423 = vunpack.c.h.b16 %v276
        %v1424 = vunpack.c.l.b16 %v277
        %v1425 = vunpack.c.h.b16 %v277
        %v1426 = vunpack.c.l.b16 %v278
        %v1427 = vunpack.c.h.b16 %v278
        %v1428 = vunpack.c.l.b16 %v279
        %v1429 = vunpack.c.h.b16 %v279
        %v1430 = vunpack.c.l.b16 %v280
        %v1431 = vunpack.c.h.b16 %v280
        %v1432 = vunpack.c.l.b16 %v281
        %v1433 = vunpack.c.h.b16 %v281
        %v1434 = vunpack.c.l.b16 %v282
        %v1435 = vunpack.c.h.b16 %v282
        %v1436 = vunpack.c.l.b16 %v283
        %v1437 = vunpack.c.h.b16 %v283
        %v1438 = vunpack.c.l.b16 %v284
        %v1439 = vunpack.c.l.b16 %v285
        %v1440 = vunpack.c.h.b16 %v285
        %v1441 = vunpack.c.l.b16 %v286
        %v1442 = vunpack.c.h.b16 %v286
        %v1443 = vunpack.c.l.b16 %v287
        %v1444 = vunpack.c.h.b16 %v287
        %v1445 = vunpack.c.l.b16 %v288
        %v1446 = vunpack.c.h.b16 %v288
        %v1447 = vunpack.c.l.b16 %v289
        %v1448 = vunpack.c.h.b16 %v289
        %v1449 = vunpack.c.l.b16 %v290
        %v1450 = vunpack.c.h.b16 %v290
        %v1451 = vunpack.c.l.b16 %v291
        %v1452 = vunpack.c.h.b16 %v291
        %v1453 = vunpack.c.l.b16 %v292
        %v1454 = vunpack.c.h.b16 %v292
        %v1455 = vunpack.c.l.b16 %v293
        %v1456 = vunpack.c.h.b16 %v293
        %v1457 = vunpack.c.l.b16 %v294
        %v1458 = vunpack.c.h.b16 %v294
        %v1459 = vunpack.c.l.b16 %v295
        %v1460 = vunpack.c.h.b16 %v295
        %v1461 = vunpack.c.l.b16 %v296
        %v1462 = vunpack.c.h.b16 %v296
        %v1463 = vunpack.c.l.b16 %v297
        %v1464 = vunpack.c.h.b16 %v297
        %v1465 = vunpack.c.l.b16 %v298
        %v1466 = vunpack.c.h.b16 %v298
        %v1467 = vunpack.c.l.b16 %v299
        %v1468 = vunpack.c.h.b16 %v299
        %v1469 = vunpack.c.l.b16 %v300
        %v1470 = vunpack.c.h.b16 %v300
        %v1471 = vunpack.c.l.b16 %v301
        %v1472 = vunpack.c.h.b16 %v301
        %v1473 = vunpack.c.l.b16 %v302
        %v1474 = vunpack.c.h.b16 %v302
        %v1475 = vunpack.c.l.b16 %v303
        %v1476 = vunpack.c.h.b16 %v303
        %v1477 = vunpack.c.l.b16 %v304
        %v1478 = vunpack.c.h.b16 %v304
        %v1479 = vunpack.c.l.b16 %v305
        %v1480 = vunpack.c.h.b16 %v305
        %v1481 = vunpack.c.l.b16 %v306
        %v1482 = vunpack.c.h.b16 %v306
        %v1483 = vunpack.c.l.b16 %v307
        %v1484 = vunpack.c.h.b16 %v307
        %v1485 = vunpack.c.l.b16 %v308
        %v1486 = vunpack.c.h.b16 %v308
        %v1487 = vunpack.c.l.b16 %v309
        %v1488 = vunpack.c.h.b16 %v309
        %v1489 = vunpack.c.l.b16 %v310
        %v1490 = vunpack.c.h.b16 %v310
        %v1491 = vunpack.c.l.b16 %v311
        %v1492 = vunpack.c.h.b16 %v311
        %v1493 = vunpack.c.l.b16 %v312
        %v1494 = vunpack.c.h.b16 %v312
        %v1495 = vunpack.c.l.b16 %v313
        %v1496 = vunpack.c.h.b16 %v313
        %v1497 = vunpack.c.l.b16 %v314
        %v1498 = vunpack.c.h.b16 %v314
        %v1499 = vunpack.c.l.b16 %v315
        %v1500 = vunpack.c.h.b16 %v315
        %v1501 = vunpack.c.l.b16 %v316
        %v1502 = vunpack.c.h.b16 %v316
        %v1503 = vunpack.c.l.b16 %v317
        %v1504 = vunpack.c.h.b16 %v317
        %v1505 = vunpack.c.l.b16 %v318
        %v1506 = vunpack.c.l.b16 %v319
        %v1507 = vunpack.c.h.b16 %v319
        %v1508 = vunpack.c.l.b16 %v320
        %v1509 = vunpack.c.h.b16 %v320
        %v1510 = vunpack.c.l.b16 %v321
        %v1511 = vunpack.c.h.b16 %v321
        %v1512 = vunpack.c.l.b16 %v322
        %v1513 = vunpack.c.h.b16 %v322
        %v1514 = vunpack.c.l.b16 %v323
        %v1515 = vunpack.c.h.b16 %v323
        %v1516 = vunpack.c.l.b16 %v324
        %v1517 = vunpack.c.h.b16 %v324
        %v1518 = vunpack.c.l.b16 %v325
        %v1519 = vunpack.c.h.b16 %v325
        %v1520 = vunpack.c.l.b16 %v326
        %v1521 = vunpack.c.h.b16 %v326
        %v1522 = vunpack.c.l.b16 %v327
        %v1523 = vunpack.c.h.b16 %v327
        %v1524 = vunpack.c.l.b16 %v328
        %v1525 = vunpack.c.h.b16 %v328
        %v1526 = vunpack.c.l.b16 %v329
        %v1527 = vunpack.c.h.b16 %v329
        %v1528 = vunpack.c.l.b16 %v330
        %v1529 = vunpack.c.h.b16 %v330
        %v1530 = vunpack.c.l.b16 %v331
        %v1531 = vunpack.c.h.b16 %v331
        %v1532 = vunpack.c.l.b16 %v332
        %v1533 = vunpack.c.h.b16 %v332
        %v1534 = vunpack.c.l.b16 %v333
        %v1535 = vunpack.c.h.b16 %v333
        %v1536 = vunpack.c.l.b16 %v334
        %v1537 = vunpack.c.h.b16 %v334
        %v1538 = vunpack.c.l.b16 %v335
        %v1539 = vunpack.c.h.b16 %v335
        %v1540 = vunpack.c.l.b16 %v336
        %v1541 = vunpack.c.h.b16 %v336
        %v1542 = vunpack.c.l.b16 %v337
        %v1543 = vunpack.c.h.b16 %v337
        %v1544 = vunpack.c.l.b16 %v338
        %v1545 = vunpack.c.h.b16 %v338
        %v1546 = vunpack.c.l.b16 %v339
        %v1547 = vunpack.c.h.b16 %v339
        %v1548 = vunpack.c.l.b16 %v340
        %v1549 = vunpack.c.h.b16 %v340
        %v1550 = vunpack.c.l.b16 %v341
        %v1551 = vunpack.c.h.b16 %v341
        %v1552 = vunpack.c.l.b16 %v342
        %v1553 = vunpack.c.h.b16 %v342
        %v1554 = vunpack.c.l.b16 %v343
        %v1555 = vunpack.c.h.b16 %v343
        %v1556 = vunpack.c.l.b16 %v344
        %v1557 = vunpack.c.h.b16 %v344
        %v1558 = vunpack.c.l.b16 %v345
        %v1559 = vunpack.c.h.b16 %v345
        %v1560 = vunpack.c.l.b16 %v346
        %v1561 = vunpack.c.h.b16 %v346
        %v1562 = vunpack.c.l.b16 %v347
        %v1563 = vunpack.c.h.b16 %v347
        %v1564 = vunpack.c.l.b16 %v348
        %v1565 = vunpack.c.h.b16 %v348
        %v1566 = vunpack.c.l.b16 %v349
        %v1567 = vunpack.c.h.b16 %v349
        %v1568 = vunpack.c.l.b16 %v350
        %v1569 = vunpack.c.h.b16 %v350
        %v1570 = vunpack.c.l.b16 %v351
        %v1571 = vunpack.c.h.b16 %v351
        %v1572 = vunpack.c.l.b16 %v352
        %v1573 = vunpack.c.l.b16 %v353
        %v1574 = vunpack.c.h.b16 %v353
        %v1575 = vunpack.c.l.b16 %v354
        %v1576 = vunpack.c.h.b16 %v354
        %v1577 = vunpack.c.l.b16 %v355
        %v1578 = vunpack.c.h.b16 %v355
        %v1579 = vunpack.c.l.b16 %v356
        %v1580 = vunpack.c.h.b16 %v356
        %v1581 = vunpack.c.l.b16 %v357
        %v1582 = vunpack.c.h.b16 %v357
        %v1583 = vunpack.c.l.b16 %v358
        %v1584 = vunpack.c.h.b16 %v358
        %v1585 = vunpack.c.l.b16 %v359
        %v1586 = vunpack.c.h.b16 %v359
        %v1587 = vunpack.c.l.b16 %v360
        %v1588 = vunpack.c.h.b16 %v360
        %v1589 = vunpack.c.l.b16 %v361
        %v1590 = vunpack.c.h.b16 %v361
        %v1591 = vunpack.c.l.b16 %v362
        %v1592 = vunpack.c.h.b16 %v362
        %v1593 = vunpack.c.l.b16 %v363
        %v1594 = vunpack.c.h.b16 %v363
        %v1595 = vunpack.c.l.b16 %v364
        %v1596 = vunpack.c.h.b16 %v364
        %v1597 = vunpack.c.l.b16 %v365
        %v1598 = vunpack.c.h.b16 %v365
        %v1599 = vunpack.c.l.b16 %v366
        %v1600 = vunpack.c.h.b16 %v366
        %v1601 = vunpack.c.l.b16 %v367
        %v1602 = vunpack.c.h.b16 %v367
        %v1603 = vunpack.c.l.b16 %v368
        %v1604 = vunpack.c.h.b16 %v368
        %v1605 = vunpack.c.l.b16 %v369
        %v1606 = vunpack.c.h.b16 %v369
        %v1607 = vunpack.c.l.b16 %v370
        %v1608 = vunpack.c.h.b16 %v370
        %v1609 = vunpack.c.l.b16 %v371
        %v1610 = vunpack.c.h.b16 %v371
        %v1611 = vunpack.c.l.b16 %v372
        %v1612 = vunpack.c.h.b16 %v372
        %v1613 = vunpack.c.l.b16 %v373
        %v1614 = vunpack.c.h.b16 %v373
        %v1615 = vunpack.c.l.b16 %v374
        %v1616 = vunpack.c.h.b16 %v374
        %v1617 = vunpack.c.l.b16 %v375
        %v1618 = vunpack.c.h.b16 %v375
        %v1619 = vunpack.c.l.b16 %v376
        %v1620 = vunpack.c.h.b16 %v376
        %v1621 = vunpack.c.l.b16 %v377
        %v1622 = vunpack.c.h.b16 %v377
        %v1623 = vunpack.c.l.b16 %v378
        %v1624 = vunpack.c.h.b16 %v378
        %v1625 = vunpack.c.l.b16 %v379
        %v1626 = vunpack.c.h.b16 %v379
        %v1627 = vunpack.c.l.b16 %v380
        %v1628 = vunpack.c.h.b16 %v380
        %v1629 = vunpack.c.l.b16 %v381
        %v1630 = vunpack.c.h.b16 %v381
        %v1631 = vunpack.c.l.b16 %v382
        %v1632 = vunpack.c.h.b16 %v382
        %v1633 = vunpack.c.l.b16 %v383
        %v1634 = vunpack.c.h.b16 %v383
        %v1635 = vunpack.c.l.b16 %v384
        %v1636 = vunpack.c.h.b16 %v384
        %v1637 = vunpack.c.l.b16 %v385
        %v1638 = vunpack.c.h.b16 %v385
        %v1639 = vunpack.c.l.b16 %v386
        %v1640 = vunpack.c.l.b16 %v387
        %v1641 = vunpack.c.h.b16 %v387
        %v1642 = vunpack.c.l.b16 %v388
        %v1643 = vunpack.c.h.b16 %v388
        %v1644 = vunpack.c.l.b16 %v389
        %v1645 = vunpack.c.h.b16 %v389
        %v1646 = vunpack.c.l.b16 %v390
        %v1647 = vunpack.c.h.b16 %v390
        %v1648 = vunpack.c.l.b16 %v391
        %v1649 = vunpack.c.h.b16 %v391
        %v1650 = vunpack.c.l.b16 %v392
        %v1651 = vunpack.c.h.b16 %v392
        %v1652 = vunpack.c.l.b16 %v393
        %v1653 = vunpack.c.h.b16 %v393
        %v1654 = vunpack.c.l.b16 %v394
        %v1655 = vunpack.c.h.b16 %v394
        %v1656 = vunpack.c.l.b16 %v395
        %v1657 = vunpack.c.h.b16 %v395
        %v1658 = vunpack.c.l.b16 %v396
        %v1659 = vunpack.c.h.b16 %v396
        %v1660 = vunpack.c.l.b16 %v397
        %v1661 = vunpack.c.h.b16 %v397
        %v1662 = vunpack.c.l.b16 %v398
        %v1663 = vunpack.c.h.b16 %v398
        %v1664 = vunpack.c.l.b16 %v399
        %v1665 = vunpack.c.h.b16 %v399
        %v1666 = vunpack.c.l.b16 %v400
        %v1667 = vunpack.c.h.b16 %v400
        %v1668 = vunpack.c.l.b16 %v401
        %v1669 = vunpack.c.h.b16 %v401
        %v1670 = vunpack.c.l.b16 %v402
        %v1671 = vunpack.c.h.b16 %v402
        %v1672 = vunpack.c.l.b16 %v403
        %v1673 = vunpack.c.h.b16 %v403
        %v1674 = vunpack.c.l.b16 %v404
        %v1675 = vunpack.c.h.b16 %v404
        %v1676 = vunpack.c.l.b16 %v405
        %v1677 = vunpack.c.h.b16 %v405
        %v1678 = vunpack.c.l.b16 %v406
        %v1679 = vunpack.c.h.b16 %v406
        %v1680 = vunpack.c.l.b16 %v407
        %v1681 = vunpack.c.h.b16 %v407
        %v1682 = vunpack.c.l.b16 %v408
        %v1683 = vunpack.c.h.b16 %v408
        %v1684 = vunpack.c.l.b16 %v409
        %v1685 = vunpack.c.h.b16 %v409
        %v1686 = vunpack.c.l.b16 %v410
        %v1687 = vunpack.c.h.b16 %v410
        %v1688 = vunpack.c.l.b16 %v411
        %v1689 = vunpack.c.h.b16 %v411
        %v1690 = vunpack.c.l.b16 %v412
        %v1691 = vunpack.c.h.b16 %v412
        %v1692 = vunpack.c.l.b16 %v413
        %v1693 = vunpack.c.h.b16 %v413
        %v1694 = vunpack.c.l.b16 %v414
        %v1695 = vunpack.c.h.b16 %v414
        %v1696 = vunpack.c.l.b16 %v415
        %v1697 = vunpack.c.h.b16 %v415
        %v1698 = vunpack.c.l.b16 %v416
        %v1699 = vunpack.c.h.b16 %v416
        %v1700 = vunpack.c.l.b16 %v417
        %v1701 = vunpack.c.h.b16 %v417
        %v1702 = vunpack.c.l.b16 %v418
        %v1703 = vunpack.c.h.b16 %v418
        %v1704 = vunpack.c.l.b16 %v419
        %v1705 = vunpack.c.h.b16 %v419
        %v1706 = vunpack.c.l.b16 %v420
        %v1707 = vunpack.c.l.b16 %v421
        %v1708 = vunpack.c.h.b16 %v421
        %v1709 = vunpack.c.l.b16 %v422
        %v1710 = vunpack.c.h.b16 %v422
        %v1711 = vunpack.c.l.b16 %v423
        %v1712 = vunpack.c.h.b16 %v423
        %v1713 = vunpack.c.l.b16 %v424
        %v1714 = vunpack.c.h.b16 %v424
        %v1715 = vunpack.c.l.b16 %v425
        %v1716 = vunpack.c.h.b16 %v425
        %v1717 = vunpack.c.l.b16 %v426
        %v1718 = vunpack.c.h.b16 %v426
        %v1719 = vunpack.c.l.b16 %v427
        %v1720 = vunpack.c.h.b16 %v427
        %v1721 = vunpack.c.l.b16 %v428
        %v1722 = vunpack.c.h.b16 %v428
        %v1723 = vunpack.c.l.b16 %v429
        %v1724 = vunpack.c.h.b16 %v429
        %v1725 = vunpack.c.l.b16 %v430
        %v1726 = vunpack.c.h.b16 %v430
        %v1727 = vunpack.c.l.b16 %v431
        %v1728 = vunpack.c.h.b16 %v431
        %v1729 = vunpack.c.l.b16 %v432
        %v1730 = vunpack.c.h.b16 %v432
        %v1731 = vunpack.c.l.b16 %v433
        %v1732 = vunpack.c.h.b16 %v433
        %v1733 = vunpack.c.l.b16 %v434
        %v1734 = vunpack.c.h.b16 %v434
        %v1735 = vunpack.c.l.b16 %v435
        %v1736 = vunpack.c.h.b16 %v435
        %v1737 = vunpack.c.l.b16 %v436
        %v1738 = vunpack.c.h.b16 %v436
        %v1739 = vunpack.c.l.b16 %v437
        %v1740 = vunpack.c.h.b16 %v437
        %v1741 = vunpack.c.l.b16 %v438
        %v1742 = vunpack.c.h.b16 %v438
        %v1743 = vunpack.c.l.b16 %v439
        %v1744 = vunpack.c.h.b16 %v439
        %v1745 = vunpack.c.l.b16 %v440
        %v1746 = vunpack.c.h.b16 %v440
        %v1747 = vunpack.c.l.b16 %v441
        %v1748 = vunpack.c.h.b16 %v441
        %v1749 = vunpack.c.l.b16 %v442
        %v1750 = vunpack.c.h.b16 %v442
        %v1751 = vunpack.c.l.b16 %v443
        %v1752 = vunpack.c.h.b16 %v443
        %v1753 = vunpack.c.l.b16 %v444
        %v1754 = vunpack.c.h.b16 %v444
        %v1755 = vunpack.c.l.b16 %v445
        %v1756 = vunpack.c.h.b16 %v445
        %v1757 = vunpack.c.l.b16 %v446
        %v1758 = vunpack.c.h.b16 %v446
        %v1759 = vunpack.c.l.b16 %v447
        %v1760 = vunpack.c.h.b16 %v447
        %v1761 = vunpack.c.l.b16 %v448
        %v1762 = vunpack.c.h.b16 %v448
        %v1763 = vunpack.c.l.b16 %v449
        %v1764 = vunpack.c.h.b16 %v449
        %v1765 = vunpack.c.l.b16 %v450
        %v1766 = vunpack.c.h.b16 %v450
        %v1767 = vunpack.c.l.b16 %v451
        %v1768 = vunpack.c.h.b16 %v451
        %v1769 = vunpack.c.l.b16 %v452
        %v1770 = vunpack.c.h.b16 %v452
        %v1771 = vunpack.c.l.b16 %v453
        %v1772 = vunpack.c.h.b16 %v453
        %v1773 = vunpack.c.l.b16 %v454
        %v1774 = vunpack.c.l.b16 %v455
        %v1775 = vunpack.c.h.b16 %v455
        %v1776 = vunpack.c.l.b16 %v456
        %v1777 = vunpack.c.h.b16 %v456
        %v1778 = vunpack.c.l.b16 %v457
        %v1779 = vunpack.c.h.b16 %v457
        %v1780 = vunpack.c.l.b16 %v458
        %v1781 = vunpack.c.h.b16 %v458
        %v1782 = vunpack.c.l.b16 %v459
        %v1783 = vunpack.c.h.b16 %v459
        %v1784 = vunpack.c.l.b16 %v460
        %v1785 = vunpack.c.h.b16 %v460
        %v1786 = vunpack.c.l.b16 %v461
        %v1787 = vunpack.c.h.b16 %v461
        %v1788 = vunpack.c.l.b16 %v462
        %v1789 = vunpack.c.h.b16 %v462
        %v1790 = vunpack.c.l.b16 %v463
        %v1791 = vunpack.c.h.b16 %v463
        %v1792 = vunpack.c.l.b16 %v464
        %v1793 = vunpack.c.h.b16 %v464
        %v1794 = vunpack.c.l.b16 %v465
        %v1795 = vunpack.c.h.b16 %v465
        %v1796 = vunpack.c.l.b16 %v466
        %v1797 = vunpack.c.h.b16 %v466
        %v1798 = vunpack.c.l.b16 %v467
        %v1799 = vunpack.c.h.b16 %v467
        %v1800 = vunpack.c.l.b16 %v468
        %v1801 = vunpack.c.h.b16 %v468
        %v1802 = vunpack.c.l.b16 %v469
        %v1803 = vunpack.c.h.b16 %v469
        %v1804 = vunpack.c.l.b16 %v470
        %v1805 = vunpack.c.h.b16 %v470
        %v1806 = vunpack.c.l.b16 %v471
        %v1807 = vunpack.c.h.b16 %v471
        %v1808 = vunpack.c.l.b16 %v472
        %v1809 = vunpack.c.h.b16 %v472
        %v1810 = vunpack.c.l.b16 %v473
        %v1811 = vunpack.c.h.b16 %v473
        %v1812 = vunpack.c.l.b16 %v474
        %v1813 = vunpack.c.h.b16 %v474
        %v1814 = vunpack.c.l.b16 %v475
        %v1815 = vunpack.c.h.b16 %v475
        %v1816 = vunpack.c.l.b16 %v476
        %v1817 = vunpack.c.h.b16 %v476
        %v1818 = vunpack.c.l.b16 %v477
        %v1819 = vunpack.c.h.b16 %v477
        %v1820 = vunpack.c.l.b16 %v478
        %v1821 = vunpack.c.h.b16 %v478
        %v1822 = vunpack.c.l.b16 %v479
        %v1823 = vunpack.c.h.b16 %v479
        %v1824 = vunpack.c.l.b16 %v480
        %v1825 = vunpack.c.h.b16 %v480
        %v1826 = vunpack.c.l.b16 %v481
        %v1827 = vunpack.c.h.b16 %v481
        %v1828 = vunpack.c.l.b16 %v482
        %v1829 = vunpack.c.h.b16 %v482
        %v1830 = vunpack.c.l.b16 %v483
        %v1831 = vunpack.c.h.b16 %v483
        %v1832 = vunpack.c.l.b16 %v484
        %v1833 = vunpack.c.h.b16 %v484
        %v1834 = vunpack.c.l.b16 %v485
        %v1835 = vunpack.c.h.b16 %v485
        %v1836 = vunpack.c.l.b16 %v486
        %v1837 = vunpack.c.h.b16 %v486
        %v1838 = vunpack.c.l.b16 %v487
        %v1839 = vunpack.c.h.b16 %v487
        %v1840 = vunpack.c.l.b16 %v488
        %v1841 = vunpack.c.l.b16 %v489
        %v1842 = vunpack.c.h.b16 %v489
        %v1843 = vunpack.c.l.b16 %v490
        %v1844 = vunpack.c.h.b16 %v490
        %v1845 = vunpack.c.l.b16 %v491
        %v1846 = vunpack.c.h.b16 %v491
        %v1847 = vunpack.c.l.b16 %v492
        %v1848 = vunpack.c.h.b16 %v492
        %v1849 = vunpack.c.l.b16 %v493
        %v1850 = vunpack.c.h.b16 %v493
        %v1851 = vunpack.c.l.b16 %v494
        %v1852 = vunpack.c.h.b16 %v494
        %v1853 = vunpack.c.l.b16 %v495
        %v1854 = vunpack.c.h.b16 %v495
        %v1855 = vunpack.c.l.b16 %v496
        %v1856 = vunpack.c.h.b16 %v496
        %v1857 = vunpack.c.l.b16 %v497
        %v1858 = vunpack.c.h.b16 %v497
        %v1859 = vunpack.c.l.b16 %v498
        %v1860 = vunpack.c.h.b16 %v498
        %v1861 = vunpack.c.l.b16 %v499
        %v1862 = vunpack.c.h.b16 %v499
        %v1863 = vunpack.c.l.b16 %v500
        %v1864 = vunpack.c.h.b16 %v500
        %v1865 = vunpack.c.l.b16 %v501
        %v1866 = vunpack.c.h.b16 %v501
        %v1867 = vunpack.c.l.b16 %v502
        %v1868 = vunpack.c.h.b16 %v502
        %v1869 = vunpack.c.l.b16 %v503
        %v1870 = vunpack.c.h.b16 %v503
        %v1871 = vunpack.c.l.b16 %v504
        %v1872 = vunpack.c.h.b16 %v504
        %v1873 = vunpack.c.l.b16 %v505
        %v1874 = vunpack.c.h.b16 %v505
        %v1875 = vunpack.c.l.b16 %v506
        %v1876 = vunpack.c.h.b16 %v506
        %v1877 = vunpack.c.l.b16 %v507
        %v1878 = vunpack.c.h.b16 %v507
        %v1879 = vunpack.c.l.b16 %v508
        %v1880 = vunpack.c.h.b16 %v508
        %v1881 = vunpack.c.l.b16 %v509
        %v1882 = vunpack.c.h.b16 %v509
        %v1883 = vunpack.c.l.b16 %v510
        %v1884 = vunpack.c.h.b16 %v510
        %v1885 = vunpack.c.l.b16 %v511
        %v1886 = vunpack.c.h.b16 %v511
        %v1887 = vunpack.c.l.b16 %v512
        %v1888 = vunpack.c.h.b16 %v512
        %v1889 = vunpack.c.l.b16 %v513
        %v1890 = vunpack.c.h.b16 %v513
        %v1891 = vunpack.c.l.b16 %v514
        %v1892 = vunpack.c.h.b16 %v514
        %v1893 = vunpack.c.l.b16 %v515
        %v1894 = vunpack.c.h.b16 %v515
        %v1895 = vunpack.c.l.b16 %v516
        %v1896 = vunpack.c.h.b16 %v516
        %v1897 = vunpack.c.l.b16 %v517
        %v1898 = vunpack.c.h.b16 %v517
        %v1899 = vunpack.c.l.b16 %v518
        %v1900 = vunpack.c.h.b16 %v518
        %v1901 = vunpack.c.l.b16 %v519
        %v1902 = vunpack.c.h.b16 %v519
        %v1903 = vunpack.c.l.b16 %v520
        %v1904 = vunpack.c.h.b16 %v520
        %v1905 = vunpack.c.l.b16 %v521
        %v1906 = vunpack.c.h.b16 %v521
        %v1907 = vunpack.c.l.b16 %v522
        %v1908 = vunpack.c.l.b16 %v523
        %v1909 = vunpack.c.h.b16 %v523
        %v1910 = vunpack.c.l.b16 %v524
        %v1911 = vunpack.c.h.b16 %v524
        %v1912 = vunpack.c.l.b16 %v525
        %v1913 = vunpack.c.h.b16 %v525
        %v1914 = vunpack.c.l.b16 %v526
        %v1915 = vunpack.c.h.b16 %v526
        %v1916 = vunpack.c.l.b16 %v527
        %v1917 = vunpack.c.h.b16 %v527
        %v1918 = vunpack.c.l.b16 %v528
        %v1919 = vunpack.c.h.b16 %v528
        %v1920 = vunpack.c.l.b16 %v529
        %v1921 = vunpack.c.h.b16 %v529
        %v1922 = vunpack.c.l.b16 %v530
        %v1923 = vunpack.c.h.b16 %v530
        %v1924 = vunpack.c.l.b16 %v531
        %v1925 = vunpack.c.h.b16 %v531
        %v1926 = vunpack.c.l.b16 %v532
        %v1927 = vunpack.c.h.b16 %v532
        %v1928 = vunpack.c.l.b16 %v533
        %v1929 = vunpack.c.h.b16 %v533
        %v1930 = vunpack.c.l.b16 %v534
        %v1931 = vunpack.c.h.b16 %v534
        %v1932 = vunpack.c.l.b16 %v535
        %v1933 = vunpack.c.h.b16 %v535
        %v1934 = vunpack.c.l.b16 %v536
        %v1935 = vunpack.c.h.b16 %v536
        %v1936 = vunpack.c.l.b16 %v537
        %v1937 = vunpack.c.h.b16 %v537
        %v1938 = vunpack.c.l.b16 %v538
        %v1939 = vunpack.c.h.b16 %v538
        %v1940 = vunpack.c.l.b16 %v539
        %v1941 = vunpack.c.h.b16 %v539
        %v1942 = vunpack.c.l.b16 %v540
        %v1943 = vunpack.c.h.b16 %v540
        %v1944 = vunpack.c.l.b16 %v541
        %v1945 = vunpack.c.h.b16 %v541
        %v1946 = vunpack.c.l.b16 %v542
        %v1947 = vunpack.c.h.b16 %v542
        %v1948 = vunpack.c.l.b16 %v543
        %v1949 = vunpack.c.h.b16 %v543
        %v1950 = vunpack.c.l.b16 %v544
        %v1951 = vunpack.c.h.b16 %v544
        %v1952 = vunpack.c.l.b16 %v545
        %v1953 = vunpack.c.h.b16 %v545
        %v1954 = vunpack.c.l.b16 %v546
        %v1955 = vunpack.c.h.b16 %v546
        %v1956 = vunpack.c.l.b16 %v547
        %v1957 = vunpack.c.h.b16 %v547
        %v1958 = vunpack.c.l.b16 %v548
        %v1959 = vunpack.c.h.b16 %v548
        %v1960 = vunpack.c.l.b16 %v549
        %v1961 = vunpack.c.h.b16 %v549
        %v1962 = vunpack.c.l.b16 %v550
        %v1963 = vunpack.c.h.b16 %v550
        %v1964 = vunpack.c.l.b16 %v551
        %v1965 = vunpack.c.h.b16 %v551
        %v1966 = vunpack.c.l.b16 %v552
        %v1967 = vunpack.c.h.b16 %v552
        %v1968 = vunpack.c.l.b16 %v553
        %v1969 = vunpack.c.h.b16 %v553
        %v1970 = vunpack.c.l.b16 %v554
        %v1971 = vunpack.c.h.b16 %v554
        %v1972 = vunpack.c.l.b16 %v555
        %v1973 = vunpack.c.h.b16 %v555
        %v1974 = vunpack.c.l.b16 %v556
        %v1975 = vunpack.c.l.b16 %v557
        %v1976 = vunpack.c.h.b16 %v557
        %v1977 = vunpack.c.l.b16 %v558
        %v1978 = vunpack.c.h.b16 %v558
        %v1979 = vunpack.c.l.b16 %v559
        %v1980 = vunpack.c.h.b16 %v559
        %v1981 = vunpack.c.l.b16 %v560
        %v1982 = vunpack.c.h.b16 %v560
        %v1983 = vunpack.c.l.b16 %v561
        %v1984 = vunpack.c.h.b16 %v561
        %v1985 = vunpack.c.l.b16 %v562
        %v1986 = vunpack.c.h.b16 %v562
        %v1987 = vunpack.c.l.b16 %v563
        %v1988 = vunpack.c.h.b16 %v563
        %v1989 = vunpack.c.l.b16 %v564
        %v1990 = vunpack.c.h.b16 %v564
        %v1991 = vunpack.c.l.b16 %v565
        %v1992 = vunpack.c.h.b16 %v565
        %v1993 = vunpack.c.l.b16 %v566
        %v1994 = vunpack.c.h.b16 %v566
        %v1995 = vunpack.c.l.b16 %v567
        %v1996 = vunpack.c.h.b16 %v567
        %v1997 = vunpack.c.l.b16 %v568
        %v1998 = vunpack.c.h.b16 %v568
        %v1999 = vunpack.c.l.b16 %v569
        %v2000 = vunpack.c.h.b16 %v569
        %v2001 = vunpack.c.l.b16 %v570
        %v2002 = vunpack.c.h.b16 %v570
        %v2003 = vunpack.c.l.b16 %v571
        %v2004 = vunpack.c.h.b16 %v571
        %v2005 = vunpack.c.l.b16 %v572
        %v2006 = vunpack.c.h.b16 %v572
        %v2007 = vunpack.c.l.b16 %v573
        %v2008 = vunpack.c.h.b16 %v573
        %v2009 = vunpack.c.l.b16 %v574
        %v2010 = vunpack.c.h.b16 %v574
        %v2011 = vunpack.c.l.b16 %v575
        %v2012 = vunpack.c.h.b16 %v575
        %v2013 = vunpack.c.l.b16 %v576
        %v2014 = vunpack.c.h.b16 %v576
        %v2015 = vunpack.c.l.b16 %v577
        %v2016 = vunpack.c.h.b16 %v577
        %v2017 = vunpack.c.l.b16 %v578
        %v2018 = vunpack.c.h.b16 %v578
        %v2019 = vunpack.c.l.b16 %v579
        %v2020 = vunpack.c.h.b16 %v579
        %v2021 = vunpack.c.l.b16 %v580
        %v2022 = vunpack.c.h.b16 %v580
        %v2023 = vunpack.c.l.b16 %v581
        %v2024 = vunpack.c.h.b16 %v581
        %v2025 = vunpack.c.l.b16 %v582
        %v2026 = vunpack.c.h.b16 %v582
        %v2027 = vunpack.c.l.b16 %v583
        %v2028 = vunpack.c.h.b16 %v583
        %v2029 = vunpack.c.l.b16 %v584
        %v2030 = vunpack.c.h.b16 %v584
        %v2031 = vunpack.c.l.b16 %v585
        %v2032 = vunpack.c.h.b16 %v585
        %v2033 = vunpack.c.l.b16 %v586
        %v2034 = vunpack.c.h.b16 %v586
        %v2035 = vunpack.c.l.b16 %v587
        %v2036 = vunpack.c.h.b16 %v587
        %v2037 = vunpack.c.l.b16 %v588
        %v2038 = vunpack.c.h.b16 %v588
        %v2039 = vunpack.c.l.b16 %v589
        %v2040 = vunpack.c.h.b16 %v589
        %v2041 = vunpack.c.l.b16 %v590
        %v2042 = vunpack.c.l.b16 %v591
        %v2043 = vunpack.c.h.b16 %v591
        %v2044 = vunpack.c.l.b16 %v592
        %v2045 = vunpack.c.h.b16 %v592
        %v2046 = vunpack.c.l.b16 %v593
        %v2047 = vunpack.c.h.b16 %v593
        %v2048 = vunpack.c.l.b16 %v594
        %v2049 = vunpack.c.h.b16 %v594
        %v2050 = vunpack.c.l.b16 %v595
        %v2051 = vunpack.c.h.b16 %v595
        %v2052 = vunpack.c.l.b16 %v596
        %v2053 = vunpack.c.h.b16 %v596
        %v2054 = vunpack.c.l.b16 %v597
        %v2055 = vunpack.c.h.b16 %v597
        %v2056 = vunpack.c.l.b16 %v598
        %v2057 = vunpack.c.h.b16 %v598
        %v2058 = vunpack.c.l.b16 %v599
        %v2059 = vunpack.c.h.b16 %v599
        %v2060 = vunpack.c.l.b16 %v600
        %v2061 = vunpack.c.h.b16 %v600
        %v2062 = vunpack.c.l.b16 %v601
        %v2063 = vunpack.c.h.b16 %v601
        %v2064 = vunpack.c.l.b16 %v602
        %v2065 = vunpack.c.h.b16 %v602
        %v2066 = vunpack.c.l.b16 %v603
        %v2067 = vunpack.c.h.b16 %v603
        %v2068 = vunpack.c.l.b16 %v604
        %v2069 = vunpack.c.h.b16 %v604
        %v2070 = vunpack.c.l.b16 %v605
        %v2071 = vunpack.c.h.b16 %v605
        %v2072 = vunpack.c.l.b16 %v606
        %v2073 = vunpack.c.h.b16 %v606
        %v2074 = vunpack.c.l.b16 %v607
        %v2075 = vunpack.c.h.b16 %v607
        %v2076 = vunpack.c.l.b16 %v608
        %v2077 = vunpack.c.h.b16 %v608
        %v2078 = vunpack.c.l.b16 %v609
        %v2079 = vunpack.c.h.b16 %v609
        %v2080 = vunpack.c.l.b16 %v610
        %v2081 = vunpack.c.h.b16 %v610
        %v2082 = vunpack.c.l.b16 %v611
        %v2083 = vunpack.c.h.b16 %v611
        %v2084 = vunpack.c.l.b16 %v612
        %v2085 = vunpack.c.h.b16 %v612
        %v2086 = vunpack.c.l.b16 %v613
        %v2087 = vunpack.c.h.b16 %v613
        %v2088 = vunpack.c.l.b16 %v614
        %v2089 = vunpack.c.h.b16 %v614
        %v2090 = vunpack.c.l.b16 %v615
        %v2091 = vunpack.c.h.b16 %v615
        %v2092 = vunpack.c.l.b16 %v616
        %v2093 = vunpack.c.h.b16 %v616
        %v2094 = vunpack.c.l.b16 %v617
        %v2095 = vunpack.c.h.b16 %v617
        %v2096 = vunpack.c.l.b16 %v618
        %v2097 = vunpack.c.h.b16 %v618
        %v2098 = vunpack.c.l.b16 %v619
        %v2099 = vunpack.c.h.b16 %v619
        %v2100 = vunpack.c.l.b16 %v620
        %v2101 = vunpack.c.h.b16 %v620
        %v2102 = vunpack.c.l.b16 %v621
        %v2103 = vunpack.c.h.b16 %v621
        %v2104 = vunpack.c.l.b16 %v622
        %v2105 = vunpack.c.h.b16 %v622
        %v2106 = vunpack.c.l.b16 %v623
        %v2107 = vunpack.c.h.b16 %v623
        %v2108 = vunpack.c.l.b16 %v624
        %v2109 = vunpack.c.l.b16 %v625
        %v2110 = vunpack.c.h.b16 %v625
        %v2111 = vunpack.c.l.b16 %v626
        %v2112 = vunpack.c.h.b16 %v626
        %v2113 = vunpack.c.l.b16 %v627
        %v2114 = vunpack.c.h.b16 %v627
        %v2115 = vunpack.c.l.b16 %v628
        %v2116 = vunpack.c.h.b16 %v628
        %v2117 = vunpack.c.l.b16 %v629
        %v2118 = vunpack.c.h.b16 %v629
        %v2119 = vunpack.c.l.b16 %v630
        %v2120 = vunpack.c.h.b16 %v630
        %v2121 = vunpack.c.l.b16 %v631
        %v2122 = vunpack.c.h.b16 %v631
        %v2123 = vunpack.c.l.b16 %v632
        %v2124 = vunpack.c.h.b16 %v632
        %v2125 = vunpack.c.l.b16 %v633
        %v2126 = vunpack.c.h.b16 %v633
        %v2127 = vunpack.c.l.b16 %v634
        %v2128 = vunpack.c.h.b16 %v634
        %v2129 = vunpack.c.l.b16 %v635
        %v2130 = vunpack.c.h.b16 %v635
        %v2131 = vunpack.c.l.b16 %v636
        %v2132 = vunpack.c.h.b16 %v636
        %v2133 = vunpack.c.l.b16 %v637
        %v2134 = vunpack.c.h.b16 %v637
        %v2135 = vunpack.c.l.b16 %v638
        %v2136 = vunpack.c.h.b16 %v638
        %v2137 = vunpack.c.l.b16 %v639
        %v2138 = vunpack.c.h.b16 %v639
        %v2139 = vunpack.c.l.b16 %v640
        %v2140 = vunpack.c.h.b16 %v640
        %v2141 = vunpack.c.l.b16 %v641
        %v2142 = vunpack.c.h.b16 %v641
        %v2143 = vunpack.c.l.b16 %v642
        %v2144 = vunpack.c.h.b16 %v642
        %v2145 = vunpack.c.l.b16 %v643
        %v2146 = vunpack.c.h.b16 %v643
        %v2147 = vunpack.c.l.b16 %v644
        %v2148 = vunpack.c.h.b16 %v644
        %v2149 = vunpack.c.l.b16 %v645
        %v2150 = vunpack.c.h.b16 %v645
        %v2151 = vunpack.c.l.b16 %v646
        %v2152 = vunpack.c.h.b16 %v646
        %v2153 = vunpack.c.l.b16 %v647
        %v2154 = vunpack.c.h.b16 %v647
        %v2155 = vunpack.c.l.b16 %v648
        %v2156 = vunpack.c.h.b16 %v648
        %v2157 = vunpack.c.l.b16 %v649
        %v2158 = vunpack.c.h.b16 %v649
        %v2159 = vunpack.c.l.b16 %v650
        %v2160 = vunpack.c.h.b16 %v650
        %v2161 = vunpack.c.l.b16 %v651
        %v2162 = vunpack.c.h.b16 %v651
        %v2163 = vunpack.c.l.b16 %v652
        %v2164 = vunpack.c.h.b16 %v652
        %v2165 = vunpack.c.l.b16 %v653
        %v2166 = vunpack.c.h.b16 %v653
        %v2167 = vunpack.c.l.b16 %v654
        %v2168 = vunpack.c.h.b16 %v654
        %v2169 = vunpack.c.l.b16 %v655
        %v2170 = vunpack.c.h.b16 %v655
        %v2171 = vunpack.c.l.b16 %v656
        %v2172 = vunpack.c.h.b16 %v656
        %v2173 = vunpack.c.l.b16 %v657
        %v2174 = vunpack.c.h.b16 %v657
        %v2175 = vunpack.c.l.b16 %v658
        %v2176 = vunpack.c.l.b16 %v659
        %v2177 = vunpack.c.h.b16 %v659
        %v2178 = vunpack.c.l.b16 %v660
        %v2179 = vunpack.c.h.b16 %v660
        %v2180 = vunpack.c.l.b16 %v661
        %v2181 = vunpack.c.h.b16 %v661
        %v2182 = vunpack.c.l.b16 %v662
        %v2183 = vunpack.c.h.b16 %v662
        %v2184 = vunpack.c.l.b16 %v663
        %v2185 = vunpack.c.h.b16 %v663
        %v2186 = vunpack.c.l.b16 %v664
        %v2187 = vunpack.c.h.b16 %v664
        %v2188 = vunpack.c.l.b16 %v665
        %v2189 = vunpack.c.h.b16 %v665
        %v2190 = vunpack.c.l.b16 %v666
        %v2191 = vunpack.c.h.b16 %v666
        %v2192 = vunpack.c.l.b16 %v667
        %v2193 = vunpack.c.h.b16 %v667
        %v2194 = vunpack.c.l.b16 %v668
        %v2195 = vunpack.c.h.b16 %v668
        %v2196 = vunpack.c.l.b16 %v669
        %v2197 = vunpack.c.h.b16 %v669
        %v2198 = vunpack.c.l.b16 %v670
        %v2199 = vunpack.c.h.b16 %v670
        %v2200 = vunpack.c.l.b16 %v671
        %v2201 = vunpack.c.h.b16 %v671
        %v2202 = vunpack.c.l.b16 %v672
        %v2203 = vunpack.c.h.b16 %v672
        %v2204 = vunpack.c.l.b16 %v673
        %v2205 = vunpack.c.h.b16 %v673
        %v2206 = vunpack.c.l.b16 %v674
        %v2207 = vunpack.c.h.b16 %v674
        %v2208 = vunpack.c.l.b16 %v675
        %v2209 = vunpack.c.h.b16 %v675
        %v2210 = vunpack.c.l.b16 %v676
        %v2211 = vunpack.c.h.b16 %v676
        %v2212 = vunpack.c.l.b16 %v677
        %v2213 = vunpack.c.h.b16 %v677
        %v2214 = vunpack.c.l.b16 %v678
        %v2215 = vunpack.c.h.b16 %v678
        %v2216 = vunpack.c.l.b16 %v679
        %v2217 = vunpack.c.h.b16 %v679
        %v2218 = vunpack.c.l.b16 %v680
        %v2219 = vunpack.c.h.b16 %v680
        %v2220 = vunpack.c.l.b16 %v681
        %v2221 = vunpack.c.h.b16 %v681
        %v2222 = vunpack.c.l.b16 %v682
        %v2223 = vunpack.c.h.b16 %v682
        %v2224 = vunpack.c.l.b16 %v683
        %v2225 = vunpack.c.h.b16 %v683
        %v2226 = vunpack.c.l.b16 %v684
        %v2227 = vunpack.c.h.b16 %v684
        %v2228 = vunpack.c.l.b16 %v685
        %v2229 = vunpack.c.h.b16 %v685
        %v2230 = vunpack.c.l.b16 %v686
        %v2231 = vunpack.c.h.b16 %v686
        %v2232 = vunpack.c.l.b16 %v687
        %v2233 = vunpack.c.h.b16 %v687
        %v2234 = vunpack.c.l.b16 %v688
        %v2235 = vunpack.c.h.b16 %v688
        %v2236 = vunpack.c.l.b16 %v689
        %v2237 = vunpack.c.h.b16 %v689
        %v2238 = vunpack.c.l.b16 %v690
        %v2239 = vunpack.c.h.b16 %v690
        %v2240 = vunpack.c.l.b16 %v691
        %v2241 = vunpack.c.h.b16 %v691
        %v2242 = vunpack.c.l.b16 %v692
        %v2243 = vunpack.c.l.b16 %v693
        %v2244 = vunpack.c.h.b16 %v693
        %v2245 = vunpack.c.l.b16 %v694
        %v2246 = vunpack.c.h.b16 %v694
        %v2247 = vunpack.c.l.b16 %v695
        %v2248 = vunpack.c.h.b16 %v695
        %v2249 = vunpack.c.l.b16 %v696
        %v2250 = vunpack.c.h.b16 %v696
        %v2251 = vunpack.c.l.b16 %v697
        %v2252 = vunpack.c.h.b16 %v697
        %v2253 = vunpack.c.l.b16 %v698
        %v2254 = vunpack.c.h.b16 %v698
        %v2255 = vunpack.c.l.b16 %v699
        %v2256 = vunpack.c.h.b16 %v699
        %v2257 = vunpack.c.l.b16 %v700
        %v2258 = vunpack.c.h.b16 %v700
        %v2259 = vunpack.c.l.b16 %v701
        %v2260 = vunpack.c.h.b16 %v701
        %v2261 = vunpack.c.l.b16 %v702
        %v2262 = vunpack.c.h.b16 %v702
        %v2263 = vunpack.c.l.b16 %v703
        %v2264 = vunpack.c.h.b16 %v703
        %v2265 = vunpack.c.l.b16 %v704
        %v2266 = vunpack.c.h.b16 %v704
        %v2267 = vunpack.c.l.b16 %v705
        %v2268 = vunpack.c.h.b16 %v705
        %v2269 = vunpack.c.l.b16 %v706
        %v2270 = vunpack.c.h.b16 %v706
        %v2271 = vunpack.c.l.b16 %v707
        %v2272 = vunpack.c.h.b16 %v707
        %v2273 = vunpack.c.l.b16 %v708
        %v2274 = vunpack.c.h.b16 %v708
        %v2275 = vunpack.c.l.b16 %v709
        %v2276 = vunpack.c.h.b16 %v709
        %v2277 = vunpack.c.l.b16 %v710
        %v2278 = vunpack.c.h.b16 %v710
        %v2279 = vunpack.c.l.b16 %v711
        %v2280 = vunpack.c.h.b16 %v711
        %v2281 = vunpack.c.l.b16 %v712
        %v2282 = vunpack.c.h.b16 %v712
        %v2283 = vunpack.c.l.b16 %v713
        %v2284 = vunpack.c.h.b16 %v713
        %v2285 = vunpack.c.l.b16 %v714
        %v2286 = vunpack.c.h.b16 %v714
        %v2287 = vunpack.c.l.b16 %v715
        %v2288 = vunpack.c.h.b16 %v715
        %v2289 = vunpack.c.l.b16 %v716
        %v2290 = vunpack.c.h.b16 %v716
        %v2291 = vunpack.c.l.b16 %v717
        %v2292 = vunpack.c.h.b16 %v717
        %v2293 = vunpack.c.l.b16 %v718
        %v2294 = vunpack.c.h.b16 %v718
        %v2295 = vunpack.c.l.b16 %v719
        %v2296 = vunpack.c.h.b16 %v719
        %v2297 = vunpack.c.l.b16 %v720
        %v2298 = vunpack.c.h.b16 %v720
        %v2299 = vunpack.c.l.b16 %v721
        %v2300 = vunpack.c.h.b16 %v721
        %v2301 = vunpack.c.l.b16 %v722
        %v2302 = vunpack.c.h.b16 %v722
        %v2303 = vunpack.c.l.b16 %v723
        %v2304 = vunpack.c.h.b16 %v723
        %v2305 = vunpack.c.l.b16 %v724
        %v2306 = vunpack.c.h.b16 %v724
        %v2307 = vunpack.c.l.b16 %v725
        %v2308 = vunpack.c.h.b16 %v725
        %v2309 = vunpack.c.l.b16 %v726
        %v2310 = vunpack.c.l.b16 %v727
        %v2311 = vunpack.c.h.b16 %v727
        %v2312 = vunpack.c.l.b16 %v728
        %v2313 = vunpack.c.h.b16 %v728
        %v2314 = vunpack.c.l.b16 %v729
        %v2315 = vunpack.c.h.b16 %v729
        %v2316 = vunpack.c.l.b16 %v730
        %v2317 = vunpack.c.h.b16 %v730
        %v2318 = vunpack.c.l.b16 %v731
        %v2319 = vunpack.c.h.b16 %v731
        %v2320 = vunpack.c.l.b16 %v732
        %v2321 = vunpack.c.h.b16 %v732
        %v2322 = vunpack.c.l.b16 %v733
        %v2323 = vunpack.c.h.b16 %v733
        %v2324 = vunpack.c.l.b16 %v734
        %v2325 = vunpack.c.h.b16 %v734
        %v2326 = vunpack.c.l.b16 %v735
        %v2327 = vunpack.c.h.b16 %v735
        %v2328 = vunpack.c.l.b16 %v736
        %v2329 = vunpack.c.h.b16 %v736
        %v2330 = vunpack.c.l.b16 %v737
        %v2331 = vunpack.c.h.b16 %v737
        %v2332 = vunpack.c.l.b16 %v738
        %v2333 = vunpack.c.h.b16 %v738
        %v2334 = vunpack.c.l.b16 %v739
        %v2335 = vunpack.c.h.b16 %v739
        %v2336 = vunpack.c.l.b16 %v740
        %v2337 = vunpack.c.h.b16 %v740
        %v2338 = vunpack.c.l.b16 %v741
        %v2339 = vunpack.c.h.b16 %v741
        %v2340 = vunpack.c.l.b16 %v742
        %v2341 = vunpack.c.h.b16 %v742
        %v2342 = vunpack.c.l.b16 %v743
        %v2343 = vunpack.c.h.b16 %v743
        %v2344 = vunpack.c.l.b16 %v744
        %v2345 = vunpack.c.h.b16 %v744
        %v2346 = vunpack.c.l.b16 %v745
        %v2347 = vunpack.c.h.b16 %v745
        %v2348 = vunpack.c.l.b16 %v746
        %v2349 = vunpack.c.h.b16 %v746
        %v2350 = vunpack.c.l.b16 %v747
        %v2351 = vunpack.c.h.b16 %v747
        %v2352 = vunpack.c.l.b16 %v748
        %v2353 = vunpack.c.h.b16 %v748
        %v2354 = vunpack.c.l.b16 %v749
        %v2355 = vunpack.c.h.b16 %v749
        %v2356 = vunpack.c.l.b16 %v750
        %v2357 = vunpack.c.h.b16 %v750
        %v2358 = vunpack.c.l.b16 %v751
        %v2359 = vunpack.c.h.b16 %v751
        %v2360 = vunpack.c.l.b16 %v752
        %v2361 = vunpack.c.h.b16 %v752
        %v2362 = vunpack.c.l.b16 %v753
        %v2363 = vunpack.c.h.b16 %v753
        %v2364 = vunpack.c.l.b16 %v754
        %v2365 = vunpack.c.h.b16 %v754
        %v2366 = vunpack.c.l.b16 %v755
        %v2367 = vunpack.c.h.b16 %v755
        %v2368 = vunpack.c.l.b16 %v756
        %v2369 = vunpack.c.h.b16 %v756
        %v2370 = vunpack.c.l.b16 %v757
        %v2371 = vunpack.c.h.b16 %v757
        %v2372 = vunpack.c.l.b16 %v758
        %v2373 = vunpack.c.h.b16 %v758
        %v2374 = vunpack.c.l.b16 %v759
        %v2375 = vunpack.c.h.b16 %v759
        %v2376 = vunpack.c.l.b16 %v760
        %v2377 = vpack.c.b16 %v1372, %v1305
        %v2378 = vpack.c.b16 %v1373, %v1306
        %v2379 = vpack.c.b16 %v1374, %v1307
        %v2380 = vpack.c.b16 %v1375, %v1308
        %v2381 = vpack.c.b16 %v1376, %v1309
        %v2382 = vpack.c.b16 %v1377, %v1310
        %v2383 = vpack.c.b16 %v1378, %v1311
        %v2384 = vpack.c.b16 %v1379, %v1312
        %v2385 = vpack.c.b16 %v1380, %v1313
        %v2386 = vpack.c.b16 %v1381, %v1314
        %v2387 = vpack.c.b16 %v1382, %v1315
        %v2388 = vpack.c.b16 %v1383, %v1316
        %v2389 = vpack.c.b16 %v1384, %v1317
        %v2390 = vpack.c.b16 %v1385, %v1318
        %v2391 = vpack.c.b16 %v1386, %v1319
        %v2392 = vpack.c.b16 %v1387, %v1320
        %v2393 = vpack.c.b16 %v1388, %v1321
        %v2394 = vpack.c.b16 %v1389, %v1322
        %v2395 = vpack.c.b16 %v1390, %v1323
        %v2396 = vpack.c.b16 %v1391, %v1324
        %v2397 = vpack.c.b16 %v1392, %v1325
        %v2398 = vpack.c.b16 %v1393, %v1326
        %v2399 = vpack.c.b16 %v1394, %v1327
        %v2400 = vpack.c.b16 %v1395, %v1328
        %v2401 = vpack.c.b16 %v1396, %v1329
        %v2402 = vpack.c.b16 %v1397, %v1330
        %v2403 = vpack.c.b16 %v1398, %v1331
        %v2404 = vpack.c.b16 %v1399, %v1332
        %v2405 = vpack.c.b16 %v1400, %v1333
        %v2406 = vpack.c.b16 %v1401, %v1334
        %v2407 = vpack.c.b16 %v1402, %v1335
        %v2408 = vpack.c.b16 %v1403, %v1336
        %v2409 = vpack.c.b16 %v1404, %v1337
        %v2410 = vpack.c.b16 %v1405, %v1338
        %v2411 = vpack.c.b16 %v1406, %v1339
        %v2412 = vpack.c.b16 %v1407, %v1340
        %v2413 = vpack.c.b16 %v1408, %v1341
        %v2414 = vpack.c.b16 %v1409, %v1342
        %v2415 = vpack.c.b16 %v1410, %v1343
        %v2416 = vpack.c.b16 %v1411, %v1344
        %v2417 = vpack.c.b16 %v1412, %v1345
        %v2418 = vpack.c.b16 %v1413, %v1346
        %v2419 = vpack.c.b16 %v1414, %v1347
        %v2420 = vpack.c.b16 %v1415, %v1348
        %v2421 = vpack.c.b16 %v1416, %v1349
        %v2422 = vpack.c.b16 %v1417, %v1350
        %v2423 = vpack.c.b16 %v1418, %v1351
        %v2424 = vpack.c.b16 %v1419, %v1352
        %v2425 = vpack.c.b16 %v1420, %v1353
        %v2426 = vpack.c.b16 %v1421, %v1354
        %v2427 = vpack.c.b16 %v1422, %v1355
        %v2428 = vpack.c.b16 %v1423, %v1356
        %v2429 = vpack.c.b16 %v1424, %v1357
        %v2430 = vpack.c.b16 %v1425, %v1358
        %v2431 = vpack.c.b16 %v1426, %v1359
        %v2432 = vpack.c.b16 %v1427, %v1360
        %v2433 = vpack.c.b16 %v1428, %v1361
        %v2434 = vpack.c.b16 %v1429, %v1362
        %v2435 = vpack.c.b16 %v1430, %v1363
        %v2436 = vpack.c.b16 %v1431, %v1364
        %v2437 = vpack.c.b16 %v1432, %v1365
        %v2438 = vpack.c.b16 %v1433, %v1366
        %v2439 = vpack.c.b16 %v1434, %v1367
        %v2440 = vpack.c.b16 %v1435, %v1368
        %v2441 = vpack.c.b16 %v1436, %v1369
        %v2442 = vpack.c.b16 %v1437, %v1370
        %v2443 = vpack.c.b16 %v1438, %v1371
        %v2444 = vpack.c.b16 %v1506, %v1439
        %v2445 = vpack.c.b16 %v1507, %v1440
        %v2446 = vpack.c.b16 %v1508, %v1441
        %v2447 = vpack.c.b16 %v1509, %v1442
        %v2448 = vpack.c.b16 %v1510, %v1443
        %v2449 = vpack.c.b16 %v1511, %v1444
        %v2450 = vpack.c.b16 %v1512, %v1445
        %v2451 = vpack.c.b16 %v1513, %v1446
        %v2452 = vpack.c.b16 %v1514, %v1447
        %v2453 = vpack.c.b16 %v1515, %v1448
        %v2454 = vpack.c.b16 %v1516, %v1449
        %v2455 = vpack.c.b16 %v1517, %v1450
        %v2456 = vpack.c.b16 %v1518, %v1451
        %v2457 = vpack.c.b16 %v1519, %v1452
        %v2458 = vpack.c.b16 %v1520, %v1453
        %v2459 = vpack.c.b16 %v1521, %v1454
        %v2460 = vpack.c.b16 %v1522, %v1455
        %v2461 = vpack.c.b16 %v1523, %v1456
        %v2462 = vpack.c.b16 %v1524, %v1457
        %v2463 = vpack.c.b16 %v1525, %v1458
        %v2464 = vpack.c.b16 %v1526, %v1459
        %v2465 = vpack.c.b16 %v1527, %v1460
        %v2466 = vpack.c.b16 %v1528, %v1461
        %v2467 = vpack.c.b16 %v1529, %v1462
        %v2468 = vpack.c.b16 %v1530, %v1463
        %v2469 = vpack.c.b16 %v1531, %v1464
        %v2470 = vpack.c.b16 %v1532, %v1465
        %v2471 = vpack.c.b16 %v1533, %v1466
        %v2472 = vpack.c.b16 %v1534, %v1467
        %v2473 = vpack.c.b16 %v1535, %v1468
        %v2474 = vpack.c.b16 %v1536, %v1469
        %v2475 = vpack.c.b16 %v1537, %v1470
        %v2476 = vpack.c.b16 %v1538, %v1471
        %v2477 = vpack.c.b16 %v1539, %v1472
        %v2478 = vpack.c.b16 %v1540, %v1473
        %v2479 = vpack.c.b16 %v1541, %v1474
        %v2480 = vpack.c.b16 %v1542, %v1475
        %v2481 = vpack.c.b16 %v1543, %v1476
        %v2482 = vpack.c.b16 %v1544, %v1477
        %v2483 = vpack.c.b16 %v1545, %v1478
        %v2484 = vpack.c.b16 %v1546, %v1479
        %v2485 = vpack.c.b16 %v1547, %v1480
        %v2486 = vpack.c.b16 %v1548, %v1481
        %v2487 = vpack.c.b16 %v1549, %v1482
        %v2488 = vpack.c.b16 %v1550, %v1483
        %v2489 = vpack.c.b16 %v1551, %v1484
        %v2490 = vpack.c.b16 %v1552, %v1485
        %v2491 = vpack.c.b16 %v1553, %v1486
        %v2492 = vpack.c.b16 %v1554, %v1487
        %v2493 = vpack.c.b16 %v1555, %v1488
        %v2494 = vpack.c.b16 %v1556, %v1489
        %v2495 = vpack.c.b16 %v1557, %v1490
        %v2496 = vpack.c.b16 %v1558, %v1491
        %v2497 = vpack.c.b16 %v1559, %v1492
        %v2498 = vpack.c.b16 %v1560, %v1493
        %v2499 = vpack.c.b16 %v1561, %v1494
        %v2500 = vpack.c.b16 %v1562, %v1495
        %v2501 = vpack.c.b16 %v1563, %v1496
        %v2502 = vpack.c.b16 %v1564, %v1497
        %v2503 = vpack.c.b16 %v1565, %v1498
        %v2504 = vpack.c.b16 %v1566, %v1499
        %v2505 = vpack.c.b16 %v1567, %v1500
        %v2506 = vpack.c.b16 %v1568, %v1501
        %v2507 = vpack.c.b16 %v1569, %v1502
        %v2508 = vpack.c.b16 %v1570, %v1503
        %v2509 = vpack.c.b16 %v1571, %v1504
        %v2510 = vpack.c.b16 %v1572, %v1505
        %v2511 = vpack.c.b16 %v1640, %v1573
        %v2512 = vpack.c.b16 %v1641, %v1574
        %v2513 = vpack.c.b16 %v1642, %v1575
        %v2514 = vpack.c.b16 %v1643, %v1576
        %v2515 = vpack.c.b16 %v1644, %v1577
        %v2516 = vpack.c.b16 %v1645, %v1578
        %v2517 = vpack.c.b16 %v1646, %v1579
        %v2518 = vpack.c.b16 %v1647, %v1580
        %v2519 = vpack.c.b16 %v1648, %v1581
        %v2520 = vpack.c.b16 %v1649, %v1582
        %v2521 = vpack.c.b16 %v1650, %v1583
        %v2522 = vpack.c.b16 %v1651, %v1584
        %v2523 = vpack.c.b16 %v1652, %v1585
        %v2524 = vpack.c.b16 %v1653, %v1586
        %v2525 = vpack.c.b16 %v1654, %v1587
        %v2526 = vpack.c.b16 %v1655, %v1588
        %v2527 = vpack.c.b16 %v1656, %v1589
        %v2528 = vpack.c.b16 %v1657, %v1590
        %v2529 = vpack.c.b16 %v1658, %v1591
        %v2530 = vpack.c.b16 %v1659, %v1592
        %v2531 = vpack.c.b16 %v1660, %v1593
        %v2532 = vpack.c.b16 %v1661, %v1594
        %v2533 = vpack.c.b16 %v1662, %v1595
        %v2534 = vpack.c.b16 %v1663, %v1596
        %v2535 = vpack.c.b16 %v1664, %v1597
        %v2536 = vpack.c.b16 %v1665, %v1598
        %v2537 = vpack.c.b16 %v1666, %v1599
        %v2538 = vpack.c.b16 %v1667, %v1600
        %v2539 = vpack.c.b16 %v1668, %v1601
        %v2540 = vpack.c.b16 %v1669, %v1602
        %v2541 = vpack.c.b16 %v1670, %v1603
        %v2542 = vpack.c.b16 %v1671, %v1604
        %v2543 = vpack.c.b16 %v1672, %v1605
        %v2544 = vpack.c.b16 %v1673, %v1606
        %v2545 = vpack.c.b16 %v1674, %v1607
        %v2546 = vpack.c.b16 %v1675, %v1608
        %v2547 = vpack.c.b16 %v1676, %v1609
        %v2548 = vpack.c.b16 %v1677, %v1610
        %v2549 = vpack.c.b16 %v1678, %v1611
        %v2550 = vpack.c.b16 %v1679, %v1612
        %v2551 = vpack.c.b16 %v1680, %v1613
        %v2552 = vpack.c.b16 %v1681, %v1614
        %v2553 = vpack.c.b16 %v1682, %v1615
        %v2554 = vpack.c.b16 %v1683, %v1616
        %v2555 = vpack.c.b16 %v1684, %v1617
        %v2556 = vpack.c.b16 %v1685, %v1618
        %v2557 = vpack.c.b16 %v1686, %v1619
        %v2558 = vpack.c.b16 %v1687, %v1620
        %v2559 = vpack.c.b16 %v1688, %v1621
        %v2560 = vpack.c.b16 %v1689, %v1622
        %v2561 = vpack.c.b16 %v1690, %v1623
        %v2562 = vpack.c.b16 %v1691, %v1624
        %v2563 = vpack.c.b16 %v1692, %v1625
        %v2564 = vpack.c.b16 %v1693, %v1626
        %v2565 = vpack.c.b16 %v1694, %v1627
        %v2566 = vpack.c.b16 %v1695, %v1628
        %v2567 = vpack.c.b16 %v1696, %v1629
        %v2568 = vpack.c.b16 %v1697, %v1630
        %v2569 = vpack.c.b16 %v1698, %v1631
        %v2570 = vpack.c.b16 %v1699, %v1632
        %v2571 = vpack.c.b16 %v1700, %v1633
        %v2572 = vpack.c.b16 %v1701, %v1634
        %v2573 = vpack.c.b16 %v1702, %v1635
        %v2574 = vpack.c.b16 %v1703, %v1636
        %v2575 = vpack.c.b16 %v1704, %v1637
        %v2576 = vpack.c.b16 %v1705, %v1638
        %v2577 = vpack.c.b16 %v1706, %v1639
        %v2578 = vpack.c.b16 %v1774, %v1707
        %v2579 = vpack.c.b16 %v1775, %v1708
        %v2580 = vpack.c.b16 %v1776, %v1709
        %v2581 = vpack.c.b16 %v1777, %v1710
        %v2582 = vpack.c.b16 %v1778, %v1711
        %v2583 = vpack.c.b16 %v1779, %v1712
        %v2584 = vpack.c.b16 %v1780, %v1713
        %v2585 = vpack.c.b16 %v1781, %v1714
        %v2586 = vpack.c.b16 %v1782, %v1715
        %v2587 = vpack.c.b16 %v1783, %v1716
        %v2588 = vpack.c.b16 %v1784, %v1717
        %v2589 = vpack.c.b16 %v1785, %v1718
        %v2590 = vpack.c.b16 %v1786, %v1719
        %v2591 = vpack.c.b16 %v1787, %v1720
        %v2592 = vpack.c.b16 %v1788, %v1721
        %v2593 = vpack.c.b16 %v1789, %v1722
        %v2594 = vpack.c.b16 %v1790, %v1723
        %v2595 = vpack.c.b16 %v1791, %v1724
        %v2596 = vpack.c.b16 %v1792, %v1725
        %v2597 = vpack.c.b16 %v1793, %v1726
        %v2598 = vpack.c.b16 %v1794, %v1727
        %v2599 = vpack.c.b16 %v1795, %v1728
        %v2600 = vpack.c.b16 %v1796, %v1729
        %v2601 = vpack.c.b16 %v1797, %v1730
        %v2602 = vpack.c.b16 %v1798, %v1731
        %v2603 = vpack.c.b16 %v1799, %v1732
        %v2604 = vpack.c.b16 %v1800, %v1733
        %v2605 = vpack.c.b16 %v1801, %v1734
        %v2606 = vpack.c.b16 %v1802, %v1735
        %v2607 = vpack.c.b16 %v1803, %v1736
        %v2608 = vpack.c.b16 %v1804, %v1737
        %v2609 = vpack.c.b16 %v1805, %v1738
        %v2610 = vpack.c.b16 %v1806, %v1739
        %v2611 = vpack.c.b16 %v1807, %v1740
        %v2612 = vpack.c.b16 %v1808, %v1741
        %v2613 = vpack.c.b16 %v1809, %v1742
        %v2614 = vpack.c.b16 %v1810, %v1743
        %v2615 = vpack.c.b16 %v1811, %v1744
        %v2616 = vpack.c.b16 %v1812, %v1745
        %v2617 = vpack.c.b16 %v1813, %v1746
        %v2618 = vpack.c.b16 %v1814, %v1747
        %v2619 = vpack.c.b16 %v1815, %v1748
        %v2620 = vpack.c.b16 %v1816, %v1749
        %v2621 = vpack.c.b16 %v1817, %v1750
        %v2622 = vpack.c.b16 %v1818, %v1751
        %v2623 = vpack.c.b16 %v1819, %v1752
        %v2624 = vpack.c.b16 %v1820, %v1753
        %v2625 = vpack.c.b16 %v1821, %v1754
        %v2626 = vpack.c.b16 %v1822, %v1755
        %v2627 = vpack.c.b16 %v1823, %v1756
        %v2628 = vpack.c.b16 %v1824, %v1757
        %v2629 = vpack.c.b16 %v1825, %v1758
        %v2630 = vpack.c.b16 %v1826, %v1759
        %v2631 = vpack.c.b16 %v1827, %v1760
        %v2632 = vpack.c.b16 %v1828, %v1761
        %v2633 = vpack.c.b16 %v1829, %v1762
        %v2634 = vpack.c.b16 %v1830, %v1763
        %v2635 = vpack.c.b16 %v1831, %v1764
        %v2636 = vpack.c.b16 %v1832, %v1765
        %v2637 = vpack.c.b16 %v1833, %v1766
        %v2638 = vpack.c.b16 %v1834, %v1767
        %v2639 = vpack.c.b16 %v1835, %v1768
        %v2640 = vpack.c.b16 %v1836, %v1769
        %v2641 = vpack.c.b16 %v1837, %v1770
        %v2642 = vpack.c.b16 %v1838, %v1771
        %v2643 = vpack.c.b16 %v1839, %v1772
        %v2644 = vpack.c.b16 %v1840, %v1773
        %v2645 = vpack.c.b16 %v1908, %v1841
        %v2646 = vpack.c.b16 %v1909, %v1842
        %v2647 = vpack.c.b16 %v1910, %v1843
        %v2648 = vpack.c.b16 %v1911, %v1844
        %v2649 = vpack.c.b16 %v1912, %v1845
        %v2650 = vpack.c.b16 %v1913, %v1846
        %v2651 = vpack.c.b16 %v1914, %v1847
        %v2652 = vpack.c.b16 %v1915, %v1848
        %v2653 = vpack.c.b16 %v1916, %v1849
        %v2654 = vpack.c.b16 %v1917, %v1850
        %v2655 = vpack.c.b16 %v1918, %v1851
        %v2656 = vpack.c.b16 %v1919, %v1852
        %v2657 = vpack.c.b16 %v1920, %v1853
        %v2658 = vpack.c.b16 %v1921, %v1854
        %v2659 = vpack.c.b16 %v1922, %v1855
        %v2660 = vpack.c.b16 %v1923, %v1856
        %v2661 = vpack.c.b16 %v1924, %v1857
        %v2662 = vpack.c.b16 %v1925, %v1858
        %v2663 = vpack.c.b16 %v1926, %v1859
        %v2664 = vpack.c.b16 %v1927, %v1860
        %v2665 = vpack.c.b16 %v1928, %v1861
        %v2666 = vpack.c.b16 %v1929, %v1862
        %v2667 = vpack.c.b16 %v1930, %v1863
        %v2668 = vpack.c.b16 %v1931, %v1864
        %v2669 = vpack.c.b16 %v1932, %v1865
        %v2670 = vpack.c.b16 %v1933, %v1866
        %v2671 = vpack.c.b16 %v1934, %v1867
        %v2672 = vpack.c.b16 %v1935, %v1868
        %v2673 = vpack.c.b16 %v1936, %v1869
        %v2674 = vpack.c.b16 %v1937, %v1870
        %v2675 = vpack.c.b16 %v1938, %v1871
        %v2676 = vpack.c.b16 %v1939, %v1872
        %v2677 = vpack.c.b16 %v1940, %v1873
        %v2678 = vpack.c.b16 %v1941, %v1874
        %v2679 = vpack.c.b16 %v1942, %v1875
        %v2680 = vpack.c.b16 %v1943, %v1876
        %v2681 = vpack.c.b16 %v1944, %v1877
        %v2682 = vpack.c.b16 %v1945, %v1878
        %v2683 = vpack.c.b16 %v1946, %v1879
        %v2684 = vpack.c.b16 %v1947, %v1880
        %v2685 = vpack.c.b16 %v1948, %v1881
        %v2686 = vpack.c.b16 %v1949, %v1882
        %v2687 = vpack.c.b16 %v1950, %v1883
        %v2688 = vpack.c.b16 %v1951, %v1884
        %v2689 = vpack.c.b16 %v1952, %v1885
        %v2690 = vpack.c.b16 %v1953, %v1886
        %v2691 = vpack.c.b16 %v1954, %v1887
        %v2692 = vpack.c.b16 %v1955, %v1888
        %v2693 = vpack.c.b16 %v1956, %v1889
        %v2694 = vpack.c.b16 %v1957, %v1890
        %v2695 = vpack.c.b16 %v1958, %v1891
        %v2696 = vpack.c.b16 %v1959, %v1892
        %v2697 = vpack.c.b16 %v1960, %v1893
        %v2698 = vpack.c.b16 %v1961, %v1894
        %v2699 = vpack.c.b16 %v1962, %v1895
        %v2700 = vpack.c.b16 %v1963, %v1896
        %v2701 = vpack.c.b16 %v1964, %v1897
        %v2702 = vpack.c.b16 %v1965, %v1898
        %v2703 = vpack.c.b16 %v1966, %v1899
        %v2704 = vpack.c.b16 %v1967, %v1900
        %v2705 = vpack.c.b16 %v1968, %v1901
        %v2706 = vpack.c.b16 %v1969, %v1902
        %v2707 = vpack.c.b16 %v1970, %v1903
        %v2708 = vpack.c.b16 %v1971, %v1904
        %v2709 = vpack.c.b16 %v1972, %v1905
        %v2710 = vpack.c.b16 %v1973, %v1906
        %v2711 = vpack.c.b16 %v1974, %v1907
        %v2712 = vpack.c.b16 %v2042, %v1975
        %v2713 = vpack.c.b16 %v2043, %v1976
        %v2714 = vpack.c.b16 %v2044, %v1977
        %v2715 = vpack.c.b16 %v2045, %v1978
        %v2716 = vpack.c.b16 %v2046, %v1979
        %v2717 = vpack.c.b16 %v2047, %v1980
        %v2718 = vpack.c.b16 %v2048, %v1981
        %v2719 = vpack.c.b16 %v2049, %v1982
        %v2720 = vpack.c.b16 %v2050, %v1983
        %v2721 = vpack.c.b16 %v2051, %v1984
        %v2722 = vpack.c.b16 %v2052, %v1985
        %v2723 = vpack.c.b16 %v2053, %v1986
        %v2724 = vpack.c.b16 %v2054, %v1987
        %v2725 = vpack.c.b16 %v2055, %v1988
        %v2726 = vpack.c.b16 %v2056, %v1989
        %v2727 = vpack.c.b16 %v2057, %v1990
        %v2728 = vpack.c.b16 %v2058, %v1991
        %v2729 = vpack.c.b16 %v2059, %v1992
        %v2730 = vpack.c.b16 %v2060, %v1993
        %v2731 = vpack.c.b16 %v2061, %v1994
        %v2732 = vpack.c.b16 %v2062, %v1995
        %v2733 = vpack.c.b16 %v2063, %v1996
        %v2734 = vpack.c.b16 %v2064, %v1997
        %v2735 = vpack.c.b16 %v2065, %v1998
        %v2736 = vpack.c.b16 %v2066, %v1999
        %v2737 = vpack.c.b16 %v2067, %v2000
        %v2738 = vpack.c.b16 %v2068, %v2001
        %v2739 = vpack.c.b16 %v2069, %v2002
        %v2740 = vpack.c.b16 %v2070, %v2003
        %v2741 = vpack.c.b16 %v2071, %v2004
        %v2742 = vpack.c.b16 %v2072, %v2005
        %v2743 = vpack.c.b16 %v2073, %v2006
        %v2744 = vpack.c.b16 %v2074, %v2007
        %v2745 = vpack.c.b16 %v2075, %v2008
        %v2746 = vpack.c.b16 %v2076, %v2009
        %v2747 = vpack.c.b16 %v2077, %v2010
        %v2748 = vpack.c.b16 %v2078, %v2011
        %v2749 = vpack.c.b16 %v2079, %v2012
        %v2750 = vpack.c.b16 %v2080, %v2013
        %v2751 = vpack.c.b16 %v2081, %v2014
        %v2752 = vpack.c.b16 %v2082, %v2015
        %v2753 = vpack.c.b16 %v2083, %v2016
        %v2754 = vpack.c.b16 %v2084, %v2017
        %v2755 = vpack.c.b16 %v2085, %v2018
        %v2756 = vpack.c.b16 %v2086, %v2019
        %v2757 = vpack.c.b16 %v2087, %v2020
        %v2758 = vpack.c.b16 %v2088, %v2021
        %v2759 = vpack.c.b16 %v2089, %v2022
        %v2760 = vpack.c.b16 %v2090, %v2023
        %v2761 = vpack.c.b16 %v2091, %v2024
        %v2762 = vpack.c.b16 %v2092, %v2025
        %v2763 = vpack.c.b16 %v2093, %v2026
        %v2764 = vpack.c.b16 %v2094, %v2027
        %v2765 = vpack.c.b16 %v2095, %v2028
        %v2766 = vpack.c.b16 %v2096, %v2029
        %v2767 = vpack.c.b16 %v2097, %v2030
        %v2768 = vpack.c.b16 %v2098, %v2031
        %v2769 = vpack.c.b16 %v2099, %v2032
        %v2770 = vpack.c.b16 %v2100, %v2033
        %v2771 = vpack.c.b16 %v2101, %v2034
        %v2772 = vpack.c.b16 %v2102, %v2035
        %v2773 = vpack.c.b16 %v2103, %v2036
        %v2774 = vpack.c.b16 %v2104, %v2037
        %v2775 = vpack.c.b16 %v2105, %v2038
        %v2776 = vpack.c.b16 %v2106, %v2039
        %v2777 = vpack.c.b16 %v2107, %v2040
        %v2778 = vpack.c.b16 %v2108, %v2041
        %v2779 = vpack.c.b16 %v2176, %v2109
        %v2780 = vpack.c.b16 %v2177, %v2110
        %v2781 = vpack.c.b16 %v2178, %v2111
        %v2782 = vpack.c.b16 %v2179, %v2112
        %v2783 = vpack.c.b16 %v2180, %v2113
        %v2784 = vpack.c.b16 %v2181, %v2114
        %v2785 = vpack.c.b16 %v2182, %v2115
        %v2786 = vpack.c.b16 %v2183, %v2116
        %v2787 = vpack.c.b16 %v2184, %v2117
        %v2788 = vpack.c.b16 %v2185, %v2118
        %v2789 = vpack.c.b16 %v2186, %v2119
        %v2790 = vpack.c.b16 %v2187, %v2120
        %v2791 = vpack.c.b16 %v2188, %v2121
        %v2792 = vpack.c.b16 %v2189, %v2122
        %v2793 = vpack.c.b16 %v2190, %v2123
        %v2794 = vpack.c.b16 %v2191, %v2124
        %v2795 = vpack.c.b16 %v2192, %v2125
        %v2796 = vpack.c.b16 %v2193, %v2126
        %v2797 = vpack.c.b16 %v2194, %v2127
        %v2798 = vpack.c.b16 %v2195, %v2128
        %v2799 = vpack.c.b16 %v2196, %v2129
        %v2800 = vpack.c.b16 %v2197, %v2130
        %v2801 = vpack.c.b16 %v2198, %v2131
        %v2802 = vpack.c.b16 %v2199, %v2132
        %v2803 = vpack.c.b16 %v2200, %v2133
        %v2804 = vpack.c.b16 %v2201, %v2134
        %v2805 = vpack.c.b16 %v2202, %v2135
        %v2806 = vpack.c.b16 %v2203, %v2136
        %v2807 = vpack.c.b16 %v2204, %v2137
        %v2808 = vpack.c.b16 %v2205, %v2138
        %v2809 = vpack.c.b16 %v2206, %v2139
        %v2810 = vpack.c.b16 %v2207, %v2140
        %v2811 = vpack.c.b16 %v2208, %v2141
        %v2812 = vpack.c.b16 %v2209, %v2142
        %v2813 = vpack.c.b16 %v2210, %v2143
        %v2814 = vpack.c.b16 %v2211, %v2144
        %v2815 = vpack.c.b16 %v2212, %v2145
        %v2816 = vpack.c.b16 %v2213, %v2146
        %v2817 = vpack.c.b16 %v2214, %v2147
        %v2818 = vpack.c.b16 %v2215, %v2148
        %v2819 = vpack.c.b16 %v2216, %v2149
        %v2820 = vpack.c.b16 %v2217, %v2150
        %v2821 = vpack.c.b16 %v2218, %v2151
        %v2822 = vpack.c.b16 %v2219, %v2152
        %v2823 = vpack.c.b16 %v2220, %v2153
        %v2824 = vpack.c.b16 %v2221, %v2154
        %v2825 = vpack.c.b16 %v2222, %v2155
        %v2826 = vpack.c.b16 %v2223, %v2156
        %v2827 = vpack.c.b16 %v2224, %v2157
        %v2828 = vpack.c.b16 %v2225, %v2158
        %v2829 = vpack.c.b16 %v2226, %v2159
        %v2830 = vpack.c.b16 %v2227, %v2160
        %v2831 = vpack.c.b16 %v2228, %v2161
        %v2832 = vpack.c.b16 %v2229, %v2162
        %v2833 = vpack.c.b16 %v2230, %v2163
        %v2834 = vpack.c.b16 %v2231, %v2164
        %v2835 = vpack.c.b16 %v2232, %v2165
        %v2836 = vpack.c.b16 %v2233, %v2166
        %v2837 = vpack.c.b16 %v2234, %v2167
        %v2838 = vpack.c.b16 %v2235, %v2168
        %v2839 = vpack.c.b16 %v2236, %v2169
        %v2840 = vpack.c.b16 %v2237, %v2170
        %v2841 = vpack.c.b16 %v2238, %v2171
        %v2842 = vpack.c.b16 %v2239, %v2172
        %v2843 = vpack.c.b16 %v2240, %v2173
        %v2844 = vpack.c.b16 %v2241, %v2174
        %v2845 = vpack.c.b16 %v2242, %v2175
        %v2846 = vpack.c.b16 %v2310, %v2243
        %v2847 = vpack.c.b16 %v2311, %v2244
        %v2848 = vpack.c.b16 %v2312, %v2245
        %v2849 = vpack.c.b16 %v2313, %v2246
        %v2850 = vpack.c.b16 %v2314, %v2247
        %v2851 = vpack.c.b16 %v2315, %v2248
        %v2852 = vpack.c.b16 %v2316, %v2249
        %v2853 = vpack.c.b16 %v2317, %v2250
        %v2854 = vpack.c.b16 %v2318, %v2251
        %v2855 = vpack.c.b16 %v2319, %v2252
        %v2856 = vpack.c.b16 %v2320, %v2253
        %v2857 = vpack.c.b16 %v2321, %v2254
        %v2858 = vpack.c.b16 %v2322, %v2255
        %v2859 = vpack.c.b16 %v2323, %v2256
        %v2860 = vpack.c.b16 %v2324, %v2257
        %v2861 = vpack.c.b16 %v2325, %v2258
        %v2862 = vpack.c.b16 %v2326, %v2259
        %v2863 = vpack.c.b16 %v2327, %v2260
        %v2864 = vpack.c.b16 %v2328, %v2261
        %v2865 = vpack.c.b16 %v2329, %v2262
        %v2866 = vpack.c.b16 %v2330, %v2263
        %v2867 = vpack.c.b16 %v2331, %v2264
        %v2868 = vpack.c.b16 %v2332, %v2265
        %v2869 = vpack.c.b16 %v2333, %v2266
        %v2870 = vpack.c.b16 %v2334, %v2267
        %v2871 = vpack.c.b16 %v2335, %v2268
        %v2872 = vpack.c.b16 %v2336, %v2269
        %v2873 = vpack.c.b16 %v2337, %v2270
        %v2874 = vpack.c.b16 %v2338, %v2271
        %v2875 = vpack.c.b16 %v2339, %v2272
        %v2876 = vpack.c.b16 %v2340, %v2273
        %v2877 = vpack.c.b16 %v2341, %v2274
        %v2878 = vpack.c.b16 %v2342, %v2275
        %v2879 = vpack.c.b16 %v2343, %v2276
        %v2880 = vpack.c.b16 %v2344, %v2277
        %v2881 = vpack.c.b16 %v2345, %v2278
        %v2882 = vpack.c.b16 %v2346, %v2279
        %v2883 = vpack.c.b16 %v2347, %v2280
        %v2884 = vpack.c.b16 %v2348, %v2281
        %v2885 = vpack.c.b16 %v2349, %v2282
        %v2886 = vpack.c.b16 %v2350, %v2283
        %v2887 = vpack.c.b16 %v2351, %v2284
        %v2888 = vpack.c.b16 %v2352, %v2285
        %v2889 = vpack.c.b16 %v2353, %v2286
        %v2890 = vpack.c.b16 %v2354, %v2287
        %v2891 = vpack.c.b16 %v2355, %v2288
        %v2892 = vpack.c.b16 %v2356, %v2289
        %v2893 = vpack.c.b16 %v2357, %v2290
        %v2894 = vpack.c.b16 %v2358, %v2291
        %v2895 = vpack.c.b16 %v2359, %v2292
        %v2896 = vpack.c.b16 %v2360, %v2293
        %v2897 = vpack.c.b16 %v2361, %v2294
        %v2898 = vpack.c.b16 %v2362, %v2295
        %v2899 = vpack.c.b16 %v2363, %v2296
        %v2900 = vpack.c.b16 %v2364, %v2297
        %v2901 = vpack.c.b16 %v2365, %v2298
        %v2902 = vpack.c.b16 %v2366, %v2299
        %v2903 = vpack.c.b16 %v2367, %v2300
        %v2904 = vpack.c.b16 %v2368, %v2301
        %v2905 = vpack.c.b16 %v2369, %v2302
        %v2906 = vpack.c.b16 %v2370, %v2303
        %v2907 = vpack.c.b16 %v2371, %v2304
        %v2908 = vpack.c.b16 %v2372, %v2305
        %v2909 = vpack.c.b16 %v2373, %v2306
        %v2910 = vpack.c.b16 %v2374, %v2307
        %v2911 = vpack.c.b16 %v2375, %v2308
        %v2912 = vpack.c.b16 %v2376, %v2309
        %3449 = vmatprep.subr.bf16.mxu0 %v2378
        %3450 = vmatpush1.bf16.msra.mxu0 %v2377
        %3451 = vmatprep.subr.bf16.mxu0 %v2445
        %3452 = vmatpush1.bf16.msra.mxu0 %v2444
        %3453 = vmatprep.subr.bf16.mxu0 %v2512
        %3454 = vmatpush1.bf16.msra.mxu0 %v2511
        %3455 = vmatprep.subr.bf16.mxu0 %v2579
        %3456 = vmatpush1.bf16.msra.mxu0 %v2578
        %3457 = vmatprep.subr.bf16.mxu0 %v2646
        %3458 = vmatpush1.bf16.msra.mxu0 %v2645
        %3459 = vmatprep.subr.bf16.mxu0 %v2713
        %3460 = vmatpush1.bf16.msra.mxu0 %v2712
        %3461 = vmatprep.subr.bf16.mxu0 %v2780
        %3462 = vmatpush1.bf16.msra.mxu0 %v2779
        %3463 = vmatprep.subr.bf16.mxu0 %v2847
        %3464 = vmatpush1.bf16.msra.mxu0 %v2846
        %3465 = vmatprep.subr.bf16.mxu0 0
        %3466 = vmatpush1.bf16.msra.mxu0 0
        %3467 = vmatprep.subr.bf16.mxu0 0
        %3468 = vmatpush1.bf16.msra.mxu0 0
        %3469 = vmatprep.subr.bf16.mxu0 0
        %3470 = vmatpush1.bf16.msra.mxu0 0
        %3471 = vmatprep.subr.bf16.mxu0 0
        %3472 = vmatpush1.bf16.msra.mxu0 0
        %3473 = vmatprep.subr.bf16.mxu0 0
        %3474 = vmatpush1.bf16.msra.mxu0 0
        %3475 = vmatprep.subr.bf16.mxu0 0
        %3476 = vmatpush1.bf16.msra.mxu0 0
        %3477 = vmatprep.subr.bf16.mxu0 0
        %3478 = vmatpush1.bf16.msra.mxu0 0
        %3479 = vmatprep.subr.bf16.mxu0 0
        %3480 = vmatpush1.bf16.msra.mxu0 0
        %3481 = vmatprep.mubr.bf16.mxu0 0
        %3482 = vmatmul.mubr.bf16.gmra.mrb[0].mxu0 %v216
        %v3483 = vpop.f32.mrb[0].mxu0
        %v3484 = vadd.f32 0.0, %v3483
        %v3485 = vpop.f32.mrb[0].mxu0
        %v3486 = vadd.f32 0.0, %v3485
        %v3487 = vpop.f32.mrb[0].mxu0
        %v3488 = vpop.f32.mrb[0].mxu0
        %3489 = vdwg.mxu0
        %3490 = vmatprep.subr.bf16.mxu0 %v2380
        %3491 = vmatpush1.bf16.msra.mxu0 %v2379
        %3492 = vmatprep.subr.bf16.mxu0 %v2447
        %3493 = vmatpush1.bf16.msra.mxu0 %v2446
        %3494 = vmatprep.subr.bf16.mxu0 %v2514
        %3495 = vmatpush1.bf16.msra.mxu0 %v2513
        %3496 = vmatprep.subr.bf16.mxu0 %v2581
        %3497 = vmatpush1.bf16.msra.mxu0 %v2580
        %3498 = vmatprep.subr.bf16.mxu0 %v2648
        %3499 = vmatpush1.bf16.msra.mxu0 %v2647
        %3500 = vmatprep.subr.bf16.mxu0 %v2715
        %3501 = vmatpush1.bf16.msra.mxu0 %v2714
        %3502 = vmatprep.subr.bf16.mxu0 %v2782
        %3503 = vmatpush1.bf16.msra.mxu0 %v2781
        %3504 = vmatprep.subr.bf16.mxu0 %v2849
        %3505 = vmatpush1.bf16.msra.mxu0 %v2848
        %3506 = vmatprep.subr.bf16.mxu0 0
        %3507 = vmatpush1.bf16.msra.mxu0 0
        %3508 = vmatprep.subr.bf16.mxu0 0
        %3509 = vmatpush1.bf16.msra.mxu0 0
        %3510 = vmatprep.subr.bf16.mxu0 0
        %3511 = vmatpush1.bf16.msra.mxu0 0
        %3512 = vmatprep.subr.bf16.mxu0 0
        %3513 = vmatpush1.bf16.msra.mxu0 0
        %3514 = vmatprep.subr.bf16.mxu0 0
        %3515 = vmatpush1.bf16.msra.mxu0 0
        %3516 = vmatprep.subr.bf16.mxu0 0
        %3517 = vmatpush1.bf16.msra.mxu0 0
        %3518 = vmatprep.subr.bf16.mxu0 0
        %3519 = vmatpush1.bf16.msra.mxu0 0
        %3520 = vmatprep.subr.bf16.mxu0 0
        %3521 = vmatpush1.bf16.msra.mxu0 0
        %3522 = vmatprep.mubr.bf16.mxu0 0
        %3523 = vmatmul.mubr.bf16.gmra.mrb[0].mxu0 %v216
        %v3524 = vpop.f32.mrb[0].mxu0
        %v3525 = vadd.f32 0.0, %v3524
        %v3526 = vpop.f32.mrb[0].mxu0
        %v3527 = vadd.f32 0.0, %v3526
        %v3528 = vpop.f32.mrb[0].mxu0
        %v3529 = vpop.f32.mrb[0].mxu0
        %3530 = vdwg.mxu0
        %3531 = vmatprep.subr.bf16.mxu0 %v2382
        %3532 = vmatpush1.bf16.msra.mxu0 %v2381
        %3533 = vmatprep.subr.bf16.mxu0 %v2449
        %3534 = vmatpush1.bf16.msra.mxu0 %v2448
        %3535 = vmatprep.subr.bf16.mxu0 %v2516
        %3536 = vmatpush1.bf16.msra.mxu0 %v2515
        %3537 = vmatprep.subr.bf16.mxu0 %v2583
        %3538 = vmatpush1.bf16.msra.mxu0 %v2582
        %3539 = vmatprep.subr.bf16.mxu0 %v2650
        %3540 = vmatpush1.bf16.msra.mxu0 %v2649
        %3541 = vmatprep.subr.bf16.mxu0 %v2717
        %3542 = vmatpush1.bf16.msra.mxu0 %v2716
        %3543 = vmatprep.subr.bf16.mxu0 %v2784
        %3544 = vmatpush1.bf16.msra.mxu0 %v2783
        %3545 = vmatprep.subr.bf16.mxu0 %v2851
        %3546 = vmatpush1.bf16.msra.mxu0 %v2850
        %3547 = vmatprep.subr.bf16.mxu0 0
        %3548 = vmatpush1.bf16.msra.mxu0 0
        %3549 = vmatprep.subr.bf16.mxu0 0
        %3550 = vmatpush1.bf16.msra.mxu0 0
        %3551 = vmatprep.subr.bf16.mxu0 0
        %3552 = vmatpush1.bf16.msra.mxu0 0
        %3553 = vmatprep.subr.bf16.mxu0 0
        %3554 = vmatpush1.bf16.msra.mxu0 0
        %3555 = vmatprep.subr.bf16.mxu0 0
        %3556 = vmatpush1.bf16.msra.mxu0 0
        %3557 = vmatprep.subr.bf16.mxu0 0
        %3558 = vmatpush1.bf16.msra.mxu0 0
        %3559 = vmatprep.subr.bf16.mxu0 0
        %3560 = vmatpush1.bf16.msra.mxu0 0
        %3561 = vmatprep.subr.bf16.mxu0 0
        %3562 = vmatpush1.bf16.msra.mxu0 0
        %3563 = vmatprep.mubr.bf16.mxu0 0
        %3564 = vmatmul.mubr.bf16.gmra.mrb[0].mxu0 %v216
        %v3565 = vpop.f32.mrb[0].mxu0
        %v3566 = vadd.f32 0.0, %v3565
        %v3567 = vpop.f32.mrb[0].mxu0
        %v3568 = vadd.f32 0.0, %v3567
        %v3569 = vpop.f32.mrb[0].mxu0
        %v3570 = vpop.f32.mrb[0].mxu0
        %3571 = vdwg.mxu0
        %3572 = vmatprep.subr.bf16.mxu0 %v2384
        %3573 = vmatpush1.bf16.msra.mxu0 %v2383
        %3574 = vmatprep.subr.bf16.mxu0 %v2451
        %3575 = vmatpush1.bf16.msra.mxu0 %v2450
        %3576 = vmatprep.subr.bf16.mxu0 %v2518
        %3577 = vmatpush1.bf16.msra.mxu0 %v2517
        %3578 = vmatprep.subr.bf16.mxu0 %v2585
        %3579 = vmatpush1.bf16.msra.mxu0 %v2584
        %3580 = vmatprep.subr.bf16.mxu0 %v2652
        %3581 = vmatpush1.bf16.msra.mxu0 %v2651
        %3582 = vmatprep.subr.bf16.mxu0 %v2719
        %3583 = vmatpush1.bf16.msra.mxu0 %v2718
        %3584 = vmatprep.subr.bf16.mxu0 %v2786
        %3585 = vmatpush1.bf16.msra.mxu0 %v2785
        %3586 = vmatprep.subr.bf16.mxu0 %v2853
        %3587 = vmatpush1.bf16.msra.mxu0 %v2852
        %3588 = vmatprep.subr.bf16.mxu0 0
        %3589 = vmatpush1.bf16.msra.mxu0 0
        %3590 = vmatprep.subr.bf16.mxu0 0
        %3591 = vmatpush1.bf16.msra.mxu0 0
        %3592 = vmatprep.subr.bf16.mxu0 0
        %3593 = vmatpush1.bf16.msra.mxu0 0
        %3594 = vmatprep.subr.bf16.mxu0 0
        %3595 = vmatpush1.bf16.msra.mxu0 0
        %3596 = vmatprep.subr.bf16.mxu0 0
        %3597 = vmatpush1.bf16.msra.mxu0 0
        %3598 = vmatprep.subr.bf16.mxu0 0
        %3599 = vmatpush1.bf16.msra.mxu0 0
        %3600 = vmatprep.subr.bf16.mxu0 0
        %3601 = vmatpush1.bf16.msra.mxu0 0
        %3602 = vmatprep.subr.bf16.mxu0 0
        %3603 = vmatpush1.bf16.msra.mxu0 0
        %3604 = vmatprep.mubr.bf16.mxu0 0
        %3605 = vmatmul.mubr.bf16.gmra.mrb[0].mxu0 %v216
        %v3606 = vpop.f32.mrb[0].mxu0
        %v3607 = vadd.f32 0.0, %v3606
        %v3608 = vpop.f32.mrb[0].mxu0
        %v3609 = vadd.f32 0.0, %v3608
        %v3610 = vpop.f32.mrb[0].mxu0
        %v3611 = vpop.f32.mrb[0].mxu0
        %3612 = vdwg.mxu0
        %3613 = vmatprep.subr.bf16.mxu0 %v2386
        %3614 = vmatpush1.bf16.msra.mxu0 %v2385
        %3615 = vmatprep.subr.bf16.mxu0 %v2453
        %3616 = vmatpush1.bf16.msra.mxu0 %v2452
        %3617 = vmatprep.subr.bf16.mxu0 %v2520
        %3618 = vmatpush1.bf16.msra.mxu0 %v2519
        %3619 = vmatprep.subr.bf16.mxu0 %v2587
        %3620 = vmatpush1.bf16.msra.mxu0 %v2586
        %3621 = vmatprep.subr.bf16.mxu0 %v2654
        %3622 = vmatpush1.bf16.msra.mxu0 %v2653
        %3623 = vmatprep.subr.bf16.mxu0 %v2721
        %3624 = vmatpush1.bf16.msra.mxu0 %v2720
        %3625 = vmatprep.subr.bf16.mxu0 %v2788
        %3626 = vmatpush1.bf16.msra.mxu0 %v2787
        %3627 = vmatprep.subr.bf16.mxu0 %v2855
        %3628 = vmatpush1.bf16.msra.mxu0 %v2854
        %3629 = vmatprep.subr.bf16.mxu0 0
        %3630 = vmatpush1.bf16.msra.mxu0 0
        %3631 = vmatprep.subr.bf16.mxu0 0
        %3632 = vmatpush1.bf16.msra.mxu0 0
        %3633 = vmatprep.subr.bf16.mxu0 0
        %3634 = vmatpush1.bf16.msra.mxu0 0
        %3635 = vmatprep.subr.bf16.mxu0 0
        %3636 = vmatpush1.bf16.msra.mxu0 0
        %3637 = vmatprep.subr.bf16.mxu0 0
        %3638 = vmatpush1.bf16.msra.mxu0 0
        %3639 = vmatprep.subr.bf16.mxu0 0
        %3640 = vmatpush1.bf16.msra.mxu0 0
        %3641 = vmatprep.subr.bf16.mxu0 0
        %3642 = vmatpush1.bf16.msra.mxu0 0
        %3643 = vmatprep.subr.bf16.mxu0 0
        %3644 = vmatpush1.bf16.msra.mxu0 0
        %3645 = vmatprep.mubr.bf16.mxu0 0
        %3646 = vmatmul.mubr.bf16.gmra.mrb[0].mxu0 %v216
        %v3647 = vpop.f32.mrb[0].mxu0
        %v3648 = vadd.f32 0.0, %v3647
        %v3649 = vpop.f32.mrb[0].mxu0
        %v3650 = vadd.f32 0.0, %v3649
        %v3651 = vpop.f32.mrb[0].mxu0
        %v3652 = vpop.f32.mrb[0].mxu0
        %3653 = vdwg.mxu0
        %3654 = vmatprep.subr.bf16.mxu0 %v2388
        %3655 = vmatpush1.bf16.msra.mxu0 %v2387
        %3656 = vmatprep.subr.bf16.mxu0 %v2455
        %3657 = vmatpush1.bf16.msra.mxu0 %v2454
        %3658 = vmatprep.subr.bf16.mxu0 %v2522
        %3659 = vmatpush1.bf16.msra.mxu0 %v2521
        %3660 = vmatprep.subr.bf16.mxu0 %v2589
        %3661 = vmatpush1.bf16.msra.mxu0 %v2588
        %3662 = vmatprep.subr.bf16.mxu0 %v2656
        %3663 = vmatpush1.bf16.msra.mxu0 %v2655
        %3664 = vmatprep.subr.bf16.mxu0 %v2723
        %3665 = vmatpush1.bf16.msra.mxu0 %v2722
        %3666 = vmatprep.subr.bf16.mxu0 %v2790
        %3667 = vmatpush1.bf16.msra.mxu0 %v2789
        %3668 = vmatprep.subr.bf16.mxu0 %v2857
        %3669 = vmatpush1.bf16.msra.mxu0 %v2856
        %3670 = vmatprep.subr.bf16.mxu0 0
        %3671 = vmatpush1.bf16.msra.mxu0 0
        %3672 = vmatprep.subr.bf16.mxu0 0
        %3673 = vmatpush1.bf16.msra.mxu0 0
        %3674 = vmatprep.subr.bf16.mxu0 0
        %3675 = vmatpush1.bf16.msra.mxu0 0
        %3676 = vmatprep.subr.bf16.mxu0 0
        %3677 = vmatpush1.bf16.msra.mxu0 0
        %3678 = vmatprep.subr.bf16.mxu0 0
        %3679 = vmatpush1.bf16.msra.mxu0 0
        %3680 = vmatprep.subr.bf16.mxu0 0
        %3681 = vmatpush1.bf16.msra.mxu0 0
        %3682 = vmatprep.subr.bf16.mxu0 0
        %3683 = vmatpush1.bf16.msra.mxu0 0
        %3684 = vmatprep.subr.bf16.mxu0 0
        %3685 = vmatpush1.bf16.msra.mxu0 0
        %3686 = vmatprep.mubr.bf16.mxu0 0
        %3687 = vmatmul.mubr.bf16.gmra.mrb[0].mxu0 %v216
        %v3688 = vpop.f32.mrb[0].mxu0
        %v3689 = vadd.f32 0.0, %v3688
        %v3690 = vpop.f32.mrb[0].mxu0
        %v3691 = vadd.f32 0.0, %v3690
        %v3692 = vpop.f32.mrb[0].mxu0
        %v3693 = vpop.f32.mrb[0].mxu0
        %3694 = vdwg.mxu0
        %3695 = vmatprep.subr.bf16.mxu0 %v2390
        %3696 = vmatpush1.bf16.msra.mxu0 %v2389
        %3697 = vmatprep.subr.bf16.mxu0 %v2457
        %3698 = vmatpush1.bf16.msra.mxu0 %v2456
        %3699 = vmatprep.subr.bf16.mxu0 %v2524
        %3700 = vmatpush1.bf16.msra.mxu0 %v2523
        %3701 = vmatprep.subr.bf16.mxu0 %v2591
        %3702 = vmatpush1.bf16.msra.mxu0 %v2590
        %3703 = vmatprep.subr.bf16.mxu0 %v2658
        %3704 = vmatpush1.bf16.msra.mxu0 %v2657
        %3705 = vmatprep.subr.bf16.mxu0 %v2725
        %3706 = vmatpush1.bf16.msra.mxu0 %v2724
        %3707 = vmatprep.subr.bf16.mxu0 %v2792
        %3708 = vmatpush1.bf16.msra.mxu0 %v2791
        %3709 = vmatprep.subr.bf16.mxu0 %v2859
        %3710 = vmatpush1.bf16.msra.mxu0 %v2858
        %3711 = vmatprep.subr.bf16.mxu0 0
        %3712 = vmatpush1.bf16.msra.mxu0 0
        %3713 = vmatprep.subr.bf16.mxu0 0
        %3714 = vmatpush1.bf16.msra.mxu0 0
        %3715 = vmatprep.subr.bf16.mxu0 0
        %3716 = vmatpush1.bf16.msra.mxu0 0
        %3717 = vmatprep.subr.bf16.mxu0 0
        %3718 = vmatpush1.bf16.msra.mxu0 0
        %3719 = vmatprep.subr.bf16.mxu0 0
        %3720 = vmatpush1.bf16.msra.mxu0 0
        %3721 = vmatprep.subr.bf16.mxu0 0
        %3722 = vmatpush1.bf16.msra.mxu0 0
        %3723 = vmatprep.subr.bf16.mxu0 0
        %3724 = vmatpush1.bf16.msra.mxu0 0
        %3725 = vmatprep.subr.bf16.mxu0 0
        %3726 = vmatpush1.bf16.msra.mxu0 0
        %3727 = vmatprep.mubr.bf16.mxu0 0
        %3728 = vmatmul.mubr.bf16.gmra.mrb[0].mxu0 %v216
        %v3729 = vpop.f32.mrb[0].mxu0
        %v3730 = vadd.f32 0.0, %v3729
        %v3731 = vpop.f32.mrb[0].mxu0
        %v3732 = vadd.f32 0.0, %v3731
        %v3733 = vpop.f32.mrb[0].mxu0
        %v3734 = vpop.f32.mrb[0].mxu0
        %3735 = vdwg.mxu0
        %3736 = vmatprep.subr.bf16.mxu0 %v2392
        %3737 = vmatpush1.bf16.msra.mxu0 %v2391
        %3738 = vmatprep.subr.bf16.mxu0 %v2459
        %3739 = vmatpush1.bf16.msra.mxu0 %v2458
        %3740 = vmatprep.subr.bf16.mxu0 %v2526
        %3741 = vmatpush1.bf16.msra.mxu0 %v2525
        %3742 = vmatprep.subr.bf16.mxu0 %v2593
        %3743 = vmatpush1.bf16.msra.mxu0 %v2592
        %3744 = vmatprep.subr.bf16.mxu0 %v2660
        %3745 = vmatpush1.bf16.msra.mxu0 %v2659
        %3746 = vmatprep.subr.bf16.mxu0 %v2727
        %3747 = vmatpush1.bf16.msra.mxu0 %v2726
        %3748 = vmatprep.subr.bf16.mxu0 %v2794
        %3749 = vmatpush1.bf16.msra.mxu0 %v2793
        %3750 = vmatprep.subr.bf16.mxu0 %v2861
        %3751 = vmatpush1.bf16.msra.mxu0 %v2860
        %3752 = vmatprep.subr.bf16.mxu0 0
        %3753 = vmatpush1.bf16.msra.mxu0 0
        %3754 = vmatprep.subr.bf16.mxu0 0
        %3755 = vmatpush1.bf16.msra.mxu0 0
        %3756 = vmatprep.subr.bf16.mxu0 0
        %3757 = vmatpush1.bf16.msra.mxu0 0
        %3758 = vmatprep.subr.bf16.mxu0 0
        %3759 = vmatpush1.bf16.msra.mxu0 0
        %3760 = vmatprep.subr.bf16.mxu0 0
        %3761 = vmatpush1.bf16.msra.mxu0 0
        %3762 = vmatprep.subr.bf16.mxu0 0
        %3763 = vmatpush1.bf16.msra.mxu0 0
        %3764 = vmatprep.subr.bf16.mxu0 0
        %3765 = vmatpush1.bf16.msra.mxu0 0
        %3766 = vmatprep.subr.bf16.mxu0 0
        %3767 = vmatpush1.bf16.msra.mxu0 0
        %3768 = vmatprep.mubr.bf16.mxu0 0
        %3769 = vmatmul.mubr.bf16.gmra.mrb[0].mxu0 %v216
        %v3770 = vpop.f32.mrb[0].mxu0
        %v3771 = vadd.f32 0.0, %v3770
        %v3772 = vpop.f32.mrb[0].mxu0
        %v3773 = vadd.f32 0.0, %v3772
        %v3774 = vpop.f32.mrb[0].mxu0
        %v3775 = vpop.f32.mrb[0].mxu0
        %3776 = vdwg.mxu0
        %3777 = vmatprep.subr.bf16.mxu0 %v2394
        %3778 = vmatpush1.bf16.msra.mxu0 %v2393
        %3779 = vmatprep.subr.bf16.mxu0 %v2461
        %3780 = vmatpush1.bf16.msra.mxu0 %v2460
        %3781 = vmatprep.subr.bf16.mxu0 %v2528
        %3782 = vmatpush1.bf16.msra.mxu0 %v2527
        %3783 = vmatprep.subr.bf16.mxu0 %v2595
        %3784 = vmatpush1.bf16.msra.mxu0 %v2594
        %3785 = vmatprep.subr.bf16.mxu0 %v2662
        %3786 = vmatpush1.bf16.msra.mxu0 %v2661
        %3787 = vmatprep.subr.bf16.mxu0 %v2729
        %3788 = vmatpush1.bf16.msra.mxu0 %v2728
        %3789 = vmatprep.subr.bf16.mxu0 %v2796
        %3790 = vmatpush1.bf16.msra.mxu0 %v2795
        %3791 = vmatprep.subr.bf16.mxu0 %v2863
        %3792 = vmatpush1.bf16.msra.mxu0 %v2862
        %3793 = vmatprep.subr.bf16.mxu0 0
        %3794 = vmatpush1.bf16.msra.mxu0 0
        %3795 = vmatprep.subr.bf16.mxu0 0
        %3796 = vmatpush1.bf16.msra.mxu0 0
        %3797 = vmatprep.subr.bf16.mxu0 0
        %3798 = vmatpush1.bf16.msra.mxu0 0
        %3799 = vmatprep.subr.bf16.mxu0 0
        %3800 = vmatpush1.bf16.msra.mxu0 0
        %3801 = vmatprep.subr.bf16.mxu0 0
        %3802 = vmatpush1.bf16.msra.mxu0 0
        %3803 = vmatprep.subr.bf16.mxu0 0
        %3804 = vmatpush1.bf16.msra.mxu0 0
        %3805 = vmatprep.subr.bf16.mxu0 0
        %3806 = vmatpush1.bf16.msra.mxu0 0
        %3807 = vmatprep.subr.bf16.mxu0 0
        %3808 = vmatpush1.bf16.msra.mxu0 0
        %3809 = vmatprep.mubr.bf16.mxu0 0
        %3810 = vmatmul.mubr.bf16.gmra.mrb[0].mxu0 %v216
        %v3811 = vpop.f32.mrb[0].mxu0
        %v3812 = vadd.f32 0.0, %v3811
        %v3813 = vpop.f32.mrb[0].mxu0
        %v3814 = vadd.f32 0.0, %v3813
        %v3815 = vpop.f32.mrb[0].mxu0
        %v3816 = vpop.f32.mrb[0].mxu0
        %3817 = vdwg.mxu0
        %3818 = vmatprep.subr.bf16.mxu0 %v2396
        %3819 = vmatpush1.bf16.msra.mxu0 %v2395
        %3820 = vmatprep.subr.bf16.mxu0 %v2463
        %3821 = vmatpush1.bf16.msra.mxu0 %v2462
        %3822 = vmatprep.subr.bf16.mxu0 %v2530
        %3823 = vmatpush1.bf16.msra.mxu0 %v2529
        %3824 = vmatprep.subr.bf16.mxu0 %v2597
        %3825 = vmatpush1.bf16.msra.mxu0 %v2596
        %3826 = vmatprep.subr.bf16.mxu0 %v2664
        %3827 = vmatpush1.bf16.msra.mxu0 %v2663
        %3828 = vmatprep.subr.bf16.mxu0 %v2731
        %3829 = vmatpush1.bf16.msra.mxu0 %v2730
        %3830 = vmatprep.subr.bf16.mxu0 %v2798
        %3831 = vmatpush1.bf16.msra.mxu0 %v2797
        %3832 = vmatprep.subr.bf16.mxu0 %v2865
        %3833 = vmatpush1.bf16.msra.mxu0 %v2864
        %3834 = vmatprep.subr.bf16.mxu0 0
        %3835 = vmatpush1.bf16.msra.mxu0 0
        %3836 = vmatprep.subr.bf16.mxu0 0
        %3837 = vmatpush1.bf16.msra.mxu0 0
        %3838 = vmatprep.subr.bf16.mxu0 0
        %3839 = vmatpush1.bf16.msra.mxu0 0
        %3840 = vmatprep.subr.bf16.mxu0 0
        %3841 = vmatpush1.bf16.msra.mxu0 0
        %3842 = vmatprep.subr.bf16.mxu0 0
        %3843 = vmatpush1.bf16.msra.mxu0 0
        %3844 = vmatprep.subr.bf16.mxu0 0
        %3845 = vmatpush1.bf16.msra.mxu0 0
        %3846 = vmatprep.subr.bf16.mxu0 0
        %3847 = vmatpush1.bf16.msra.mxu0 0
        %3848 = vmatprep.subr.bf16.mxu0 0
        %3849 = vmatpush1.bf16.msra.mxu0 0
        %3850 = vmatprep.mubr.bf16.mxu0 0
        %3851 = vmatmul.mubr.bf16.gmra.mrb[0].mxu0 %v216
        %v3852 = vpop.f32.mrb[0].mxu0
        %v3853 = vadd.f32 0.0, %v3852
        %v3854 = vpop.f32.mrb[0].mxu0
        %v3855 = vadd.f32 0.0, %v3854
        %v3856 = vpop.f32.mrb[0].mxu0
        %v3857 = vpop.f32.mrb[0].mxu0
        %3858 = vdwg.mxu0
        %3859 = vmatprep.subr.bf16.mxu0 %v2398
        %3860 = vmatpush1.bf16.msra.mxu0 %v2397
        %3861 = vmatprep.subr.bf16.mxu0 %v2465
        %3862 = vmatpush1.bf16.msra.mxu0 %v2464
        %3863 = vmatprep.subr.bf16.mxu0 %v2532
        %3864 = vmatpush1.bf16.msra.mxu0 %v2531
        %3865 = vmatprep.subr.bf16.mxu0 %v2599
        %3866 = vmatpush1.bf16.msra.mxu0 %v2598
        %3867 = vmatprep.subr.bf16.mxu0 %v2666
        %3868 = vmatpush1.bf16.msra.mxu0 %v2665
        %3869 = vmatprep.subr.bf16.mxu0 %v2733
        %3870 = vmatpush1.bf16.msra.mxu0 %v2732
        %3871 = vmatprep.subr.bf16.mxu0 %v2800
        %3872 = vmatpush1.bf16.msra.mxu0 %v2799
        %3873 = vmatprep.subr.bf16.mxu0 %v2867
        %3874 = vmatpush1.bf16.msra.mxu0 %v2866
        %3875 = vmatprep.subr.bf16.mxu0 0
        %3876 = vmatpush1.bf16.msra.mxu0 0
        %3877 = vmatprep.subr.bf16.mxu0 0
        %3878 = vmatpush1.bf16.msra.mxu0 0
        %3879 = vmatprep.subr.bf16.mxu0 0
        %3880 = vmatpush1.bf16.msra.mxu0 0
        %3881 = vmatprep.subr.bf16.mxu0 0
        %3882 = vmatpush1.bf16.msra.mxu0 0
        %3883 = vmatprep.subr.bf16.mxu0 0
        %3884 = vmatpush1.bf16.msra.mxu0 0
        %3885 = vmatprep.subr.bf16.mxu0 0
        %3886 = vmatpush1.bf16.msra.mxu0 0
        %3887 = vmatprep.subr.bf16.mxu0 0
        %3888 = vmatpush1.bf16.msra.mxu0 0
        %3889 = vmatprep.subr.bf16.mxu0 0
        %3890 = vmatpush1.bf16.msra.mxu0 0
        %3891 = vmatprep.mubr.bf16.mxu0 0
        %3892 = vmatmul.mubr.bf16.gmra.mrb[0].mxu0 %v216
        %v3893 = vpop.f32.mrb[0].mxu0
        %v3894 = vadd.f32 0.0, %v3893
        %v3895 = vpop.f32.mrb[0].mxu0
        %v3896 = vadd.f32 0.0, %v3895
        %v3897 = vpop.f32.mrb[0].mxu0
        %v3898 = vpop.f32.mrb[0].mxu0
        %3899 = vdwg.mxu0
        %3900 = vmatprep.subr.bf16.mxu0 %v2400
        %3901 = vmatpush1.bf16.msra.mxu0 %v2399
        %3902 = vmatprep.subr.bf16.mxu0 %v2467
        %3903 = vmatpush1.bf16.msra.mxu0 %v2466
        %3904 = vmatprep.subr.bf16.mxu0 %v2534
        %3905 = vmatpush1.bf16.msra.mxu0 %v2533
        %3906 = vmatprep.subr.bf16.mxu0 %v2601
        %3907 = vmatpush1.bf16.msra.mxu0 %v2600
        %3908 = vmatprep.subr.bf16.mxu0 %v2668
        %3909 = vmatpush1.bf16.msra.mxu0 %v2667
        %3910 = vmatprep.subr.bf16.mxu0 %v2735
        %3911 = vmatpush1.bf16.msra.mxu0 %v2734
        %3912 = vmatprep.subr.bf16.mxu0 %v2802
        %3913 = vmatpush1.bf16.msra.mxu0 %v2801
        %3914 = vmatprep.subr.bf16.mxu0 %v2869
        %3915 = vmatpush1.bf16.msra.mxu0 %v2868
        %3916 = vmatprep.subr.bf16.mxu0 0
        %3917 = vmatpush1.bf16.msra.mxu0 0
        %3918 = vmatprep.subr.bf16.mxu0 0
        %3919 = vmatpush1.bf16.msra.mxu0 0
        %3920 = vmatprep.subr.bf16.mxu0 0
        %3921 = vmatpush1.bf16.msra.mxu0 0
        %3922 = vmatprep.subr.bf16.mxu0 0
        %3923 = vmatpush1.bf16.msra.mxu0 0
        %3924 = vmatprep.subr.bf16.mxu0 0
        %3925 = vmatpush1.bf16.msra.mxu0 0
        %3926 = vmatprep.subr.bf16.mxu0 0
        %3927 = vmatpush1.bf16.msra.mxu0 0
        %3928 = vmatprep.subr.bf16.mxu0 0
        %3929 = vmatpush1.bf16.msra.mxu0 0
        %3930 = vmatprep.subr.bf16.mxu0 0
        %3931 = vmatpush1.bf16.msra.mxu0 0
        %3932 = vmatprep.mubr.bf16.mxu0 0
        %3933 = vmatmul.mubr.bf16.gmra.mrb[0].mxu0 %v216
        %v3934 = vpop.f32.mrb[0].mxu0
        %v3935 = vadd.f32 0.0, %v3934
        %v3936 = vpop.f32.mrb[0].mxu0
        %v3937 = vadd.f32 0.0, %v3936
        %v3938 = vpop.f32.mrb[0].mxu0
        %v3939 = vpop.f32.mrb[0].mxu0
        %3940 = vdwg.mxu0
        %3941 = vmatprep.subr.bf16.mxu0 %v2402
        %3942 = vmatpush1.bf16.msra.mxu0 %v2401
        %3943 = vmatprep.subr.bf16.mxu0 %v2469
        %3944 = vmatpush1.bf16.msra.mxu0 %v2468
        %3945 = vmatprep.subr.bf16.mxu0 %v2536
        %3946 = vmatpush1.bf16.msra.mxu0 %v2535
        %3947 = vmatprep.subr.bf16.mxu0 %v2603
        %3948 = vmatpush1.bf16.msra.mxu0 %v2602
        %3949 = vmatprep.subr.bf16.mxu0 %v2670
        %3950 = vmatpush1.bf16.msra.mxu0 %v2669
        %3951 = vmatprep.subr.bf16.mxu0 %v2737
        %3952 = vmatpush1.bf16.msra.mxu0 %v2736
        %3953 = vmatprep.subr.bf16.mxu0 %v2804
        %3954 = vmatpush1.bf16.msra.mxu0 %v2803
        %3955 = vmatprep.subr.bf16.mxu0 %v2871
        %3956 = vmatpush1.bf16.msra.mxu0 %v2870
        %3957 = vmatprep.subr.bf16.mxu0 0
        %3958 = vmatpush1.bf16.msra.mxu0 0
        %3959 = vmatprep.subr.bf16.mxu0 0
        %3960 = vmatpush1.bf16.msra.mxu0 0
        %3961 = vmatprep.subr.bf16.mxu0 0
        %3962 = vmatpush1.bf16.msra.mxu0 0
        %3963 = vmatprep.subr.bf16.mxu0 0
        %3964 = vmatpush1.bf16.msra.mxu0 0
        %3965 = vmatprep.subr.bf16.mxu0 0
        %3966 = vmatpush1.bf16.msra.mxu0 0
        %3967 = vmatprep.subr.bf16.mxu0 0
        %3968 = vmatpush1.bf16.msra.mxu0 0
        %3969 = vmatprep.subr.bf16.mxu0 0
        %3970 = vmatpush1.bf16.msra.mxu0 0
        %3971 = vmatprep.subr.bf16.mxu0 0
        %3972 = vmatpush1.bf16.msra.mxu0 0
        %3973 = vmatprep.mubr.bf16.mxu0 0
        %3974 = vmatmul.mubr.bf16.gmra.mrb[0].mxu0 %v216
        %v3975 = vpop.f32.mrb[0].mxu0
        %v3976 = vadd.f32 0.0, %v3975
        %v3977 = vpop.f32.mrb[0].mxu0
        %v3978 = vadd.f32 0.0, %v3977
        %v3979 = vpop.f32.mrb[0].mxu0
        %v3980 = vpop.f32.mrb[0].mxu0
        %3981 = vdwg.mxu0
        %3982 = vmatprep.subr.bf16.mxu0 %v2404
        %3983 = vmatpush1.bf16.msra.mxu0 %v2403
        %3984 = vmatprep.subr.bf16.mxu0 %v2471
        %3985 = vmatpush1.bf16.msra.mxu0 %v2470
        %3986 = vmatprep.subr.bf16.mxu0 %v2538
        %3987 = vmatpush1.bf16.msra.mxu0 %v2537
        %3988 = vmatprep.subr.bf16.mxu0 %v2605
        %3989 = vmatpush1.bf16.msra.mxu0 %v2604
        %3990 = vmatprep.subr.bf16.mxu0 %v2672
        %3991 = vmatpush1.bf16.msra.mxu0 %v2671
        %3992 = vmatprep.subr.bf16.mxu0 %v2739
        %3993 = vmatpush1.bf16.msra.mxu0 %v2738
        %3994 = vmatprep.subr.bf16.mxu0 %v2806
        %3995 = vmatpush1.bf16.msra.mxu0 %v2805
        %3996 = vmatprep.subr.bf16.mxu0 %v2873
        %3997 = vmatpush1.bf16.msra.mxu0 %v2872
        %3998 = vmatprep.subr.bf16.mxu0 0
        %3999 = vmatpush1.bf16.msra.mxu0 0
        %4000 = vmatprep.subr.bf16.mxu0 0
        %4001 = vmatpush1.bf16.msra.mxu0 0
        %4002 = vmatprep.subr.bf16.mxu0 0
        %4003 = vmatpush1.bf16.msra.mxu0 0
        %4004 = vmatprep.subr.bf16.mxu0 0
        %4005 = vmatpush1.bf16.msra.mxu0 0
        %4006 = vmatprep.subr.bf16.mxu0 0
        %4007 = vmatpush1.bf16.msra.mxu0 0
        %4008 = vmatprep.subr.bf16.mxu0 0
        %4009 = vmatpush1.bf16.msra.mxu0 0
        %4010 = vmatprep.subr.bf16.mxu0 0
        %4011 = vmatpush1.bf16.msra.mxu0 0
        %4012 = vmatprep.subr.bf16.mxu0 0
        %4013 = vmatpush1.bf16.msra.mxu0 0
        %4014 = vmatprep.mubr.bf16.mxu0 0
        %4015 = vmatmul.mubr.bf16.gmra.mrb[0].mxu0 %v216
        %v4016 = vpop.f32.mrb[0].mxu0
        %v4017 = vadd.f32 0.0, %v4016
        %v4018 = vpop.f32.mrb[0].mxu0
        %v4019 = vadd.f32 0.0, %v4018
        %v4020 = vpop.f32.mrb[0].mxu0
        %v4021 = vpop.f32.mrb[0].mxu0
        %4022 = vdwg.mxu0
        %4023 = vmatprep.subr.bf16.mxu0 %v2406
        %4024 = vmatpush1.bf16.msra.mxu0 %v2405
        %4025 = vmatprep.subr.bf16.mxu0 %v2473
        %4026 = vmatpush1.bf16.msra.mxu0 %v2472
        %4027 = vmatprep.subr.bf16.mxu0 %v2540
        %4028 = vmatpush1.bf16.msra.mxu0 %v2539
        %4029 = vmatprep.subr.bf16.mxu0 %v2607
        %4030 = vmatpush1.bf16.msra.mxu0 %v2606
        %4031 = vmatprep.subr.bf16.mxu0 %v2674
        %4032 = vmatpush1.bf16.msra.mxu0 %v2673
        %4033 = vmatprep.subr.bf16.mxu0 %v2741
        %4034 = vmatpush1.bf16.msra.mxu0 %v2740
        %4035 = vmatprep.subr.bf16.mxu0 %v2808
        %4036 = vmatpush1.bf16.msra.mxu0 %v2807
        %4037 = vmatprep.subr.bf16.mxu0 %v2875
        %4038 = vmatpush1.bf16.msra.mxu0 %v2874
        %4039 = vmatprep.subr.bf16.mxu0 0
        %4040 = vmatpush1.bf16.msra.mxu0 0
        %4041 = vmatprep.subr.bf16.mxu0 0
        %4042 = vmatpush1.bf16.msra.mxu0 0
        %4043 = vmatprep.subr.bf16.mxu0 0
        %4044 = vmatpush1.bf16.msra.mxu0 0
        %4045 = vmatprep.subr.bf16.mxu0 0
        %4046 = vmatpush1.bf16.msra.mxu0 0
        %4047 = vmatprep.subr.bf16.mxu0 0
        %4048 = vmatpush1.bf16.msra.mxu0 0
        %4049 = vmatprep.subr.bf16.mxu0 0
        %4050 = vmatpush1.bf16.msra.mxu0 0
        %4051 = vmatprep.subr.bf16.mxu0 0
        %4052 = vmatpush1.bf16.msra.mxu0 0
        %4053 = vmatprep.subr.bf16.mxu0 0
        %4054 = vmatpush1.bf16.msra.mxu0 0
        %4055 = vmatprep.mubr.bf16.mxu0 0
        %4056 = vmatmul.mubr.bf16.gmra.mrb[0].mxu0 %v216
        %v4057 = vpop.f32.mrb[0].mxu0
        %v4058 = vadd.f32 0.0, %v4057
        %v4059 = vpop.f32.mrb[0].mxu0
        %v4060 = vadd.f32 0.0, %v4059
        %v4061 = vpop.f32.mrb[0].mxu0
        %v4062 = vpop.f32.mrb[0].mxu0
        %4063 = vdwg.mxu0
        %4064 = vmatprep.subr.bf16.mxu0 %v2408
        %4065 = vmatpush1.bf16.msra.mxu0 %v2407
        %4066 = vmatprep.subr.bf16.mxu0 %v2475
        %4067 = vmatpush1.bf16.msra.mxu0 %v2474
        %4068 = vmatprep.subr.bf16.mxu0 %v2542
        %4069 = vmatpush1.bf16.msra.mxu0 %v2541
        %4070 = vmatprep.subr.bf16.mxu0 %v2609
        %4071 = vmatpush1.bf16.msra.mxu0 %v2608
        %4072 = vmatprep.subr.bf16.mxu0 %v2676
        %4073 = vmatpush1.bf16.msra.mxu0 %v2675
        %4074 = vmatprep.subr.bf16.mxu0 %v2743
        %4075 = vmatpush1.bf16.msra.mxu0 %v2742
        %4076 = vmatprep.subr.bf16.mxu0 %v2810
        %4077 = vmatpush1.bf16.msra.mxu0 %v2809
        %4078 = vmatprep.subr.bf16.mxu0 %v2877
        %4079 = vmatpush1.bf16.msra.mxu0 %v2876
        %4080 = vmatprep.subr.bf16.mxu0 0
        %4081 = vmatpush1.bf16.msra.mxu0 0
        %4082 = vmatprep.subr.bf16.mxu0 0
        %4083 = vmatpush1.bf16.msra.mxu0 0
        %4084 = vmatprep.subr.bf16.mxu0 0
        %4085 = vmatpush1.bf16.msra.mxu0 0
        %4086 = vmatprep.subr.bf16.mxu0 0
        %4087 = vmatpush1.bf16.msra.mxu0 0
        %4088 = vmatprep.subr.bf16.mxu0 0
        %4089 = vmatpush1.bf16.msra.mxu0 0
        %4090 = vmatprep.subr.bf16.mxu0 0
        %4091 = vmatpush1.bf16.msra.mxu0 0
        %4092 = vmatprep.subr.bf16.mxu0 0
        %4093 = vmatpush1.bf16.msra.mxu0 0
        %4094 = vmatprep.subr.bf16.mxu0 0
        %4095 = vmatpush1.bf16.msra.mxu0 0
        %4096 = vmatprep.mubr.bf16.mxu0 0
        %4097 = vmatmul.mubr.bf16.gmra.mrb[0].mxu0 %v216
        %v4098 = vpop.f32.mrb[0].mxu0
        %v4099 = vadd.f32 0.0, %v4098
        %v4100 = vpop.f32.mrb[0].mxu0
        %v4101 = vadd.f32 0.0, %v4100
        %v4102 = vpop.f32.mrb[0].mxu0
        %v4103 = vpop.f32.mrb[0].mxu0
        %4104 = vdwg.mxu0
        %4105 = vmatprep.subr.bf16.mxu0 %v2410
        %4106 = vmatpush1.bf16.msra.mxu0 %v2409
        %4107 = vmatprep.subr.bf16.mxu0 %v2477
        %4108 = vmatpush1.bf16.msra.mxu0 %v2476
        %4109 = vmatprep.subr.bf16.mxu0 %v2544
        %4110 = vmatpush1.bf16.msra.mxu0 %v2543
        %4111 = vmatprep.subr.bf16.mxu0 %v2611
        %4112 = vmatpush1.bf16.msra.mxu0 %v2610
        %4113 = vmatprep.subr.bf16.mxu0 %v2678
        %4114 = vmatpush1.bf16.msra.mxu0 %v2677
        %4115 = vmatprep.subr.bf16.mxu0 %v2745
        %4116 = vmatpush1.bf16.msra.mxu0 %v2744
        %4117 = vmatprep.subr.bf16.mxu0 %v2812
        %4118 = vmatpush1.bf16.msra.mxu0 %v2811
        %4119 = vmatprep.subr.bf16.mxu0 %v2879
        %4120 = vmatpush1.bf16.msra.mxu0 %v2878
        %4121 = vmatprep.subr.bf16.mxu0 0
        %4122 = vmatpush1.bf16.msra.mxu0 0
        %4123 = vmatprep.subr.bf16.mxu0 0
        %4124 = vmatpush1.bf16.msra.mxu0 0
        %4125 = vmatprep.subr.bf16.mxu0 0
        %4126 = vmatpush1.bf16.msra.mxu0 0
        %4127 = vmatprep.subr.bf16.mxu0 0
        %4128 = vmatpush1.bf16.msra.mxu0 0
        %4129 = vmatprep.subr.bf16.mxu0 0
        %4130 = vmatpush1.bf16.msra.mxu0 0
        %4131 = vmatprep.subr.bf16.mxu0 0
        %4132 = vmatpush1.bf16.msra.mxu0 0
        %4133 = vmatprep.subr.bf16.mxu0 0
        %4134 = vmatpush1.bf16.msra.mxu0 0
        %4135 = vmatprep.subr.bf16.mxu0 0
        %4136 = vmatpush1.bf16.msra.mxu0 0
        %4137 = vmatprep.mubr.bf16.mxu0 0
        %4138 = vmatmul.mubr.bf16.gmra.mrb[0].mxu0 %v216
        %v4139 = vpop.f32.mrb[0].mxu0
        %v4140 = vadd.f32 0.0, %v4139
        %v4141 = vpop.f32.mrb[0].mxu0
        %v4142 = vadd.f32 0.0, %v4141
        %v4143 = vpop.f32.mrb[0].mxu0
        %v4144 = vpop.f32.mrb[0].mxu0
        %4145 = vdwg.mxu0
        %4146 = vmatprep.subr.bf16.mxu0 %v2412
        %4147 = vmatpush1.bf16.msra.mxu0 %v2411
        %4148 = vmatprep.subr.bf16.mxu0 %v2479
        %4149 = vmatpush1.bf16.msra.mxu0 %v2478
        %4150 = vmatprep.subr.bf16.mxu0 %v2546
        %4151 = vmatpush1.bf16.msra.mxu0 %v2545
        %4152 = vmatprep.subr.bf16.mxu0 %v2613
        %4153 = vmatpush1.bf16.msra.mxu0 %v2612
        %4154 = vmatprep.subr.bf16.mxu0 %v2680
        %4155 = vmatpush1.bf16.msra.mxu0 %v2679
        %4156 = vmatprep.subr.bf16.mxu0 %v2747
        %4157 = vmatpush1.bf16.msra.mxu0 %v2746
        %4158 = vmatprep.subr.bf16.mxu0 %v2814
        %4159 = vmatpush1.bf16.msra.mxu0 %v2813
        %4160 = vmatprep.subr.bf16.mxu0 %v2881
        %4161 = vmatpush1.bf16.msra.mxu0 %v2880
        %4162 = vmatprep.subr.bf16.mxu0 0
        %4163 = vmatpush1.bf16.msra.mxu0 0
        %4164 = vmatprep.subr.bf16.mxu0 0
        %4165 = vmatpush1.bf16.msra.mxu0 0
        %4166 = vmatprep.subr.bf16.mxu0 0
        %4167 = vmatpush1.bf16.msra.mxu0 0
        %4168 = vmatprep.subr.bf16.mxu0 0
        %4169 = vmatpush1.bf16.msra.mxu0 0
        %4170 = vmatprep.subr.bf16.mxu0 0
        %4171 = vmatpush1.bf16.msra.mxu0 0
        %4172 = vmatprep.subr.bf16.mxu0 0
        %4173 = vmatpush1.bf16.msra.mxu0 0
        %4174 = vmatprep.subr.bf16.mxu0 0
        %4175 = vmatpush1.bf16.msra.mxu0 0
        %4176 = vmatprep.subr.bf16.mxu0 0
        %4177 = vmatpush1.bf16.msra.mxu0 0
        %4178 = vmatprep.mubr.bf16.mxu0 0
        %4179 = vmatmul.mubr.bf16.gmra.mrb[0].mxu0 %v216
        %v4180 = vpop.f32.mrb[0].mxu0
        %v4181 = vadd.f32 0.0, %v4180
        %v4182 = vpop.f32.mrb[0].mxu0
        %v4183 = vadd.f32 0.0, %v4182
        %v4184 = vpop.f32.mrb[0].mxu0
        %v4185 = vpop.f32.mrb[0].mxu0
        %4186 = vdwg.mxu0
        %4187 = vmatprep.subr.bf16.mxu0 %v2414
        %4188 = vmatpush1.bf16.msra.mxu0 %v2413
        %4189 = vmatprep.subr.bf16.mxu0 %v2481
        %4190 = vmatpush1.bf16.msra.mxu0 %v2480
        %4191 = vmatprep.subr.bf16.mxu0 %v2548
        %4192 = vmatpush1.bf16.msra.mxu0 %v2547
        %4193 = vmatprep.subr.bf16.mxu0 %v2615
        %4194 = vmatpush1.bf16.msra.mxu0 %v2614
        %4195 = vmatprep.subr.bf16.mxu0 %v2682
        %4196 = vmatpush1.bf16.msra.mxu0 %v2681
        %4197 = vmatprep.subr.bf16.mxu0 %v2749
        %4198 = vmatpush1.bf16.msra.mxu0 %v2748
        %4199 = vmatprep.subr.bf16.mxu0 %v2816
        %4200 = vmatpush1.bf16.msra.mxu0 %v2815
        %4201 = vmatprep.subr.bf16.mxu0 %v2883
        %4202 = vmatpush1.bf16.msra.mxu0 %v2882
        %4203 = vmatprep.subr.bf16.mxu0 0
        %4204 = vmatpush1.bf16.msra.mxu0 0
        %4205 = vmatprep.subr.bf16.mxu0 0
        %4206 = vmatpush1.bf16.msra.mxu0 0
        %4207 = vmatprep.subr.bf16.mxu0 0
        %4208 = vmatpush1.bf16.msra.mxu0 0
        %4209 = vmatprep.subr.bf16.mxu0 0
        %4210 = vmatpush1.bf16.msra.mxu0 0
        %4211 = vmatprep.subr.bf16.mxu0 0
        %4212 = vmatpush1.bf16.msra.mxu0 0
        %4213 = vmatprep.subr.bf16.mxu0 0
        %4214 = vmatpush1.bf16.msra.mxu0 0
        %4215 = vmatprep.subr.bf16.mxu0 0
        %4216 = vmatpush1.bf16.msra.mxu0 0
        %4217 = vmatprep.subr.bf16.mxu0 0
        %4218 = vmatpush1.bf16.msra.mxu0 0
        %4219 = vmatprep.mubr.bf16.mxu0 0
        %4220 = vmatmul.mubr.bf16.gmra.mrb[0].mxu0 %v216
        %v4221 = vpop.f32.mrb[0].mxu0
        %v4222 = vadd.f32 0.0, %v4221
        %v4223 = vpop.f32.mrb[0].mxu0
        %v4224 = vadd.f32 0.0, %v4223
        %v4225 = vpop.f32.mrb[0].mxu0
        %v4226 = vpop.f32.mrb[0].mxu0
        %4227 = vdwg.mxu0
        %4228 = vmatprep.subr.bf16.mxu0 %v2416
        %4229 = vmatpush1.bf16.msra.mxu0 %v2415
        %4230 = vmatprep.subr.bf16.mxu0 %v2483
        %4231 = vmatpush1.bf16.msra.mxu0 %v2482
        %4232 = vmatprep.subr.bf16.mxu0 %v2550
        %4233 = vmatpush1.bf16.msra.mxu0 %v2549
        %4234 = vmatprep.subr.bf16.mxu0 %v2617
        %4235 = vmatpush1.bf16.msra.mxu0 %v2616
        %4236 = vmatprep.subr.bf16.mxu0 %v2684
        %4237 = vmatpush1.bf16.msra.mxu0 %v2683
        %4238 = vmatprep.subr.bf16.mxu0 %v2751
        %4239 = vmatpush1.bf16.msra.mxu0 %v2750
        %4240 = vmatprep.subr.bf16.mxu0 %v2818
        %4241 = vmatpush1.bf16.msra.mxu0 %v2817
        %4242 = vmatprep.subr.bf16.mxu0 %v2885
        %4243 = vmatpush1.bf16.msra.mxu0 %v2884
        %4244 = vmatprep.subr.bf16.mxu0 0
        %4245 = vmatpush1.bf16.msra.mxu0 0
        %4246 = vmatprep.subr.bf16.mxu0 0
        %4247 = vmatpush1.bf16.msra.mxu0 0
        %4248 = vmatprep.subr.bf16.mxu0 0
        %4249 = vmatpush1.bf16.msra.mxu0 0
        %4250 = vmatprep.subr.bf16.mxu0 0
        %4251 = vmatpush1.bf16.msra.mxu0 0
        %4252 = vmatprep.subr.bf16.mxu0 0
        %4253 = vmatpush1.bf16.msra.mxu0 0
        %4254 = vmatprep.subr.bf16.mxu0 0
        %4255 = vmatpush1.bf16.msra.mxu0 0
        %4256 = vmatprep.subr.bf16.mxu0 0
        %4257 = vmatpush1.bf16.msra.mxu0 0
        %4258 = vmatprep.subr.bf16.mxu0 0
        %4259 = vmatpush1.bf16.msra.mxu0 0
        %4260 = vmatprep.mubr.bf16.mxu0 0
        %4261 = vmatmul.mubr.bf16.gmra.mrb[0].mxu0 %v216
        %v4262 = vpop.f32.mrb[0].mxu0
        %v4263 = vadd.f32 0.0, %v4262
        %v4264 = vpop.f32.mrb[0].mxu0
        %v4265 = vadd.f32 0.0, %v4264
        %v4266 = vpop.f32.mrb[0].mxu0
        %v4267 = vpop.f32.mrb[0].mxu0
        %4268 = vdwg.mxu0
        %4269 = vmatprep.subr.bf16.mxu0 %v2418
        %4270 = vmatpush1.bf16.msra.mxu0 %v2417
        %4271 = vmatprep.subr.bf16.mxu0 %v2485
        %4272 = vmatpush1.bf16.msra.mxu0 %v2484
        %4273 = vmatprep.subr.bf16.mxu0 %v2552
        %4274 = vmatpush1.bf16.msra.mxu0 %v2551
        %4275 = vmatprep.subr.bf16.mxu0 %v2619
        %4276 = vmatpush1.bf16.msra.mxu0 %v2618
        %4277 = vmatprep.subr.bf16.mxu0 %v2686
        %4278 = vmatpush1.bf16.msra.mxu0 %v2685
        %4279 = vmatprep.subr.bf16.mxu0 %v2753
        %4280 = vmatpush1.bf16.msra.mxu0 %v2752
        %4281 = vmatprep.subr.bf16.mxu0 %v2820
        %4282 = vmatpush1.bf16.msra.mxu0 %v2819
        %4283 = vmatprep.subr.bf16.mxu0 %v2887
        %4284 = vmatpush1.bf16.msra.mxu0 %v2886
        %4285 = vmatprep.subr.bf16.mxu0 0
        %4286 = vmatpush1.bf16.msra.mxu0 0
        %4287 = vmatprep.subr.bf16.mxu0 0
        %4288 = vmatpush1.bf16.msra.mxu0 0
        %4289 = vmatprep.subr.bf16.mxu0 0
        %4290 = vmatpush1.bf16.msra.mxu0 0
        %4291 = vmatprep.subr.bf16.mxu0 0
        %4292 = vmatpush1.bf16.msra.mxu0 0
        %4293 = vmatprep.subr.bf16.mxu0 0
        %4294 = vmatpush1.bf16.msra.mxu0 0
        %4295 = vmatprep.subr.bf16.mxu0 0
        %4296 = vmatpush1.bf16.msra.mxu0 0
        %4297 = vmatprep.subr.bf16.mxu0 0
        %4298 = vmatpush1.bf16.msra.mxu0 0
        %4299 = vmatprep.subr.bf16.mxu0 0
        %4300 = vmatpush1.bf16.msra.mxu0 0
        %4301 = vmatprep.mubr.bf16.mxu0 0
        %4302 = vmatmul.mubr.bf16.gmra.mrb[0].mxu0 %v216
        %v4303 = vpop.f32.mrb[0].mxu0
        %v4304 = vadd.f32 0.0, %v4303
        %v4305 = vpop.f32.mrb[0].mxu0
        %v4306 = vadd.f32 0.0, %v4305
        %v4307 = vpop.f32.mrb[0].mxu0
        %v4308 = vpop.f32.mrb[0].mxu0
        %4309 = vdwg.mxu0
        %4310 = vmatprep.subr.bf16.mxu0 %v2420
        %4311 = vmatpush1.bf16.msra.mxu0 %v2419
        %4312 = vmatprep.subr.bf16.mxu0 %v2487
        %4313 = vmatpush1.bf16.msra.mxu0 %v2486
        %4314 = vmatprep.subr.bf16.mxu0 %v2554
        %4315 = vmatpush1.bf16.msra.mxu0 %v2553
        %4316 = vmatprep.subr.bf16.mxu0 %v2621
        %4317 = vmatpush1.bf16.msra.mxu0 %v2620
        %4318 = vmatprep.subr.bf16.mxu0 %v2688
        %4319 = vmatpush1.bf16.msra.mxu0 %v2687
        %4320 = vmatprep.subr.bf16.mxu0 %v2755
        %4321 = vmatpush1.bf16.msra.mxu0 %v2754
        %4322 = vmatprep.subr.bf16.mxu0 %v2822
        %4323 = vmatpush1.bf16.msra.mxu0 %v2821
        %4324 = vmatprep.subr.bf16.mxu0 %v2889
        %4325 = vmatpush1.bf16.msra.mxu0 %v2888
        %4326 = vmatprep.subr.bf16.mxu0 0
        %4327 = vmatpush1.bf16.msra.mxu0 0
        %4328 = vmatprep.subr.bf16.mxu0 0
        %4329 = vmatpush1.bf16.msra.mxu0 0
        %4330 = vmatprep.subr.bf16.mxu0 0
        %4331 = vmatpush1.bf16.msra.mxu0 0
        %4332 = vmatprep.subr.bf16.mxu0 0
        %4333 = vmatpush1.bf16.msra.mxu0 0
        %4334 = vmatprep.subr.bf16.mxu0 0
        %4335 = vmatpush1.bf16.msra.mxu0 0
        %4336 = vmatprep.subr.bf16.mxu0 0
        %4337 = vmatpush1.bf16.msra.mxu0 0
        %4338 = vmatprep.subr.bf16.mxu0 0
        %4339 = vmatpush1.bf16.msra.mxu0 0
        %4340 = vmatprep.subr.bf16.mxu0 0
        %4341 = vmatpush1.bf16.msra.mxu0 0
        %4342 = vmatprep.mubr.bf16.mxu0 0
        %4343 = vmatmul.mubr.bf16.gmra.mrb[0].mxu0 %v216
        %v4344 = vpop.f32.mrb[0].mxu0
        %v4345 = vadd.f32 0.0, %v4344
        %v4346 = vpop.f32.mrb[0].mxu0
        %v4347 = vadd.f32 0.0, %v4346
        %v4348 = vpop.f32.mrb[0].mxu0
        %v4349 = vpop.f32.mrb[0].mxu0
        %4350 = vdwg.mxu0
        %4351 = vmatprep.subr.bf16.mxu0 %v2422
        %4352 = vmatpush1.bf16.msra.mxu0 %v2421
        %4353 = vmatprep.subr.bf16.mxu0 %v2489
        %4354 = vmatpush1.bf16.msra.mxu0 %v2488
        %4355 = vmatprep.subr.bf16.mxu0 %v2556
        %4356 = vmatpush1.bf16.msra.mxu0 %v2555
        %4357 = vmatprep.subr.bf16.mxu0 %v2623
        %4358 = vmatpush1.bf16.msra.mxu0 %v2622
        %4359 = vmatprep.subr.bf16.mxu0 %v2690
        %4360 = vmatpush1.bf16.msra.mxu0 %v2689
        %4361 = vmatprep.subr.bf16.mxu0 %v2757
        %4362 = vmatpush1.bf16.msra.mxu0 %v2756
        %4363 = vmatprep.subr.bf16.mxu0 %v2824
        %4364 = vmatpush1.bf16.msra.mxu0 %v2823
        %4365 = vmatprep.subr.bf16.mxu0 %v2891
        %4366 = vmatpush1.bf16.msra.mxu0 %v2890
        %4367 = vmatprep.subr.bf16.mxu0 0
        %4368 = vmatpush1.bf16.msra.mxu0 0
        %4369 = vmatprep.subr.bf16.mxu0 0
        %4370 = vmatpush1.bf16.msra.mxu0 0
        %4371 = vmatprep.subr.bf16.mxu0 0
        %4372 = vmatpush1.bf16.msra.mxu0 0
        %4373 = vmatprep.subr.bf16.mxu0 0
        %4374 = vmatpush1.bf16.msra.mxu0 0
        %4375 = vmatprep.subr.bf16.mxu0 0
        %4376 = vmatpush1.bf16.msra.mxu0 0
        %4377 = vmatprep.subr.bf16.mxu0 0
        %4378 = vmatpush1.bf16.msra.mxu0 0
        %4379 = vmatprep.subr.bf16.mxu0 0
        %4380 = vmatpush1.bf16.msra.mxu0 0
        %4381 = vmatprep.subr.bf16.mxu0 0
        %4382 = vmatpush1.bf16.msra.mxu0 0
        %4383 = vmatprep.mubr.bf16.mxu0 0
        %4384 = vmatmul.mubr.bf16.gmra.mrb[0].mxu0 %v216
        %v4385 = vpop.f32.mrb[0].mxu0
        %v4386 = vadd.f32 0.0, %v4385
        %v4387 = vpop.f32.mrb[0].mxu0
        %v4388 = vadd.f32 0.0, %v4387
        %v4389 = vpop.f32.mrb[0].mxu0
        %v4390 = vpop.f32.mrb[0].mxu0
        %4391 = vdwg.mxu0
        %4392 = vmatprep.subr.bf16.mxu0 %v2424
        %4393 = vmatpush1.bf16.msra.mxu0 %v2423
        %4394 = vmatprep.subr.bf16.mxu0 %v2491
        %4395 = vmatpush1.bf16.msra.mxu0 %v2490
        %4396 = vmatprep.subr.bf16.mxu0 %v2558
        %4397 = vmatpush1.bf16.msra.mxu0 %v2557
        %4398 = vmatprep.subr.bf16.mxu0 %v2625
        %4399 = vmatpush1.bf16.msra.mxu0 %v2624
        %4400 = vmatprep.subr.bf16.mxu0 %v2692
        %4401 = vmatpush1.bf16.msra.mxu0 %v2691
        %4402 = vmatprep.subr.bf16.mxu0 %v2759
        %4403 = vmatpush1.bf16.msra.mxu0 %v2758
        %4404 = vmatprep.subr.bf16.mxu0 %v2826
        %4405 = vmatpush1.bf16.msra.mxu0 %v2825
        %4406 = vmatprep.subr.bf16.mxu0 %v2893
        %4407 = vmatpush1.bf16.msra.mxu0 %v2892
        %4408 = vmatprep.subr.bf16.mxu0 0
        %4409 = vmatpush1.bf16.msra.mxu0 0
        %4410 = vmatprep.subr.bf16.mxu0 0
        %4411 = vmatpush1.bf16.msra.mxu0 0
        %4412 = vmatprep.subr.bf16.mxu0 0
        %4413 = vmatpush1.bf16.msra.mxu0 0
        %4414 = vmatprep.subr.bf16.mxu0 0
        %4415 = vmatpush1.bf16.msra.mxu0 0
        %4416 = vmatprep.subr.bf16.mxu0 0
        %4417 = vmatpush1.bf16.msra.mxu0 0
        %4418 = vmatprep.subr.bf16.mxu0 0
        %4419 = vmatpush1.bf16.msra.mxu0 0
        %4420 = vmatprep.subr.bf16.mxu0 0
        %4421 = vmatpush1.bf16.msra.mxu0 0
        %4422 = vmatprep.subr.bf16.mxu0 0
        %4423 = vmatpush1.bf16.msra.mxu0 0
        %4424 = vmatprep.mubr.bf16.mxu0 0
        %4425 = vmatmul.mubr.bf16.gmra.mrb[0].mxu0 %v216
        %v4426 = vpop.f32.mrb[0].mxu0
        %v4427 = vadd.f32 0.0, %v4426
        %v4428 = vpop.f32.mrb[0].mxu0
        %v4429 = vadd.f32 0.0, %v4428
        %v4430 = vpop.f32.mrb[0].mxu0
        %v4431 = vpop.f32.mrb[0].mxu0
        %4432 = vdwg.mxu0
        %4433 = vmatprep.subr.bf16.mxu0 %v2426
        %4434 = vmatpush1.bf16.msra.mxu0 %v2425
        %4435 = vmatprep.subr.bf16.mxu0 %v2493
        %4436 = vmatpush1.bf16.msra.mxu0 %v2492
        %4437 = vmatprep.subr.bf16.mxu0 %v2560
        %4438 = vmatpush1.bf16.msra.mxu0 %v2559
        %4439 = vmatprep.subr.bf16.mxu0 %v2627
        %4440 = vmatpush1.bf16.msra.mxu0 %v2626
        %4441 = vmatprep.subr.bf16.mxu0 %v2694
        %4442 = vmatpush1.bf16.msra.mxu0 %v2693
        %4443 = vmatprep.subr.bf16.mxu0 %v2761
        %4444 = vmatpush1.bf16.msra.mxu0 %v2760
        %4445 = vmatprep.subr.bf16.mxu0 %v2828
        %4446 = vmatpush1.bf16.msra.mxu0 %v2827
        %4447 = vmatprep.subr.bf16.mxu0 %v2895
        %4448 = vmatpush1.bf16.msra.mxu0 %v2894
        %4449 = vmatprep.subr.bf16.mxu0 0
        %4450 = vmatpush1.bf16.msra.mxu0 0
        %4451 = vmatprep.subr.bf16.mxu0 0
        %4452 = vmatpush1.bf16.msra.mxu0 0
        %4453 = vmatprep.subr.bf16.mxu0 0
        %4454 = vmatpush1.bf16.msra.mxu0 0
        %4455 = vmatprep.subr.bf16.mxu0 0
        %4456 = vmatpush1.bf16.msra.mxu0 0
        %4457 = vmatprep.subr.bf16.mxu0 0
        %4458 = vmatpush1.bf16.msra.mxu0 0
        %4459 = vmatprep.subr.bf16.mxu0 0
        %4460 = vmatpush1.bf16.msra.mxu0 0
        %4461 = vmatprep.subr.bf16.mxu0 0
        %4462 = vmatpush1.bf16.msra.mxu0 0
        %4463 = vmatprep.subr.bf16.mxu0 0
        %4464 = vmatpush1.bf16.msra.mxu0 0
        %4465 = vmatprep.mubr.bf16.mxu0 0
        %4466 = vmatmul.mubr.bf16.gmra.mrb[0].mxu0 %v216
        %v4467 = vpop.f32.mrb[0].mxu0
        %v4468 = vadd.f32 0.0, %v4467
        %v4469 = vpop.f32.mrb[0].mxu0
        %v4470 = vadd.f32 0.0, %v4469
        %v4471 = vpop.f32.mrb[0].mxu0
        %v4472 = vpop.f32.mrb[0].mxu0
        %4473 = vdwg.mxu0
        %4474 = vmatprep.subr.bf16.mxu0 %v2428
        %4475 = vmatpush1.bf16.msra.mxu0 %v2427
        %4476 = vmatprep.subr.bf16.mxu0 %v2495
        %4477 = vmatpush1.bf16.msra.mxu0 %v2494
        %4478 = vmatprep.subr.bf16.mxu0 %v2562
        %4479 = vmatpush1.bf16.msra.mxu0 %v2561
        %4480 = vmatprep.subr.bf16.mxu0 %v2629
        %4481 = vmatpush1.bf16.msra.mxu0 %v2628
        %4482 = vmatprep.subr.bf16.mxu0 %v2696
        %4483 = vmatpush1.bf16.msra.mxu0 %v2695
        %4484 = vmatprep.subr.bf16.mxu0 %v2763
        %4485 = vmatpush1.bf16.msra.mxu0 %v2762
        %4486 = vmatprep.subr.bf16.mxu0 %v2830
        %4487 = vmatpush1.bf16.msra.mxu0 %v2829
        %4488 = vmatprep.subr.bf16.mxu0 %v2897
        %4489 = vmatpush1.bf16.msra.mxu0 %v2896
        %4490 = vmatprep.subr.bf16.mxu0 0
        %4491 = vmatpush1.bf16.msra.mxu0 0
        %4492 = vmatprep.subr.bf16.mxu0 0
        %4493 = vmatpush1.bf16.msra.mxu0 0
        %4494 = vmatprep.subr.bf16.mxu0 0
        %4495 = vmatpush1.bf16.msra.mxu0 0
        %4496 = vmatprep.subr.bf16.mxu0 0
        %4497 = vmatpush1.bf16.msra.mxu0 0
        %4498 = vmatprep.subr.bf16.mxu0 0
        %4499 = vmatpush1.bf16.msra.mxu0 0
        %4500 = vmatprep.subr.bf16.mxu0 0
        %4501 = vmatpush1.bf16.msra.mxu0 0
        %4502 = vmatprep.subr.bf16.mxu0 0
        %4503 = vmatpush1.bf16.msra.mxu0 0
        %4504 = vmatprep.subr.bf16.mxu0 0
        %4505 = vmatpush1.bf16.msra.mxu0 0
        %4506 = vmatprep.mubr.bf16.mxu0 0
        %4507 = vmatmul.mubr.bf16.gmra.mrb[0].mxu0 %v216
        %v4508 = vpop.f32.mrb[0].mxu0
        %v4509 = vadd.f32 0.0, %v4508
        %v4510 = vpop.f32.mrb[0].mxu0
        %v4511 = vadd.f32 0.0, %v4510
        %v4512 = vpop.f32.mrb[0].mxu0
        %v4513 = vpop.f32.mrb[0].mxu0
        %4514 = vdwg.mxu0
        %4515 = vmatprep.subr.bf16.mxu0 %v2430
        %4516 = vmatpush1.bf16.msra.mxu0 %v2429
        %4517 = vmatprep.subr.bf16.mxu0 %v2497
        %4518 = vmatpush1.bf16.msra.mxu0 %v2496
        %4519 = vmatprep.subr.bf16.mxu0 %v2564
        %4520 = vmatpush1.bf16.msra.mxu0 %v2563
        %4521 = vmatprep.subr.bf16.mxu0 %v2631
        %4522 = vmatpush1.bf16.msra.mxu0 %v2630
        %4523 = vmatprep.subr.bf16.mxu0 %v2698
        %4524 = vmatpush1.bf16.msra.mxu0 %v2697
        %4525 = vmatprep.subr.bf16.mxu0 %v2765
        %4526 = vmatpush1.bf16.msra.mxu0 %v2764
        %4527 = vmatprep.subr.bf16.mxu0 %v2832
        %4528 = vmatpush1.bf16.msra.mxu0 %v2831
        %4529 = vmatprep.subr.bf16.mxu0 %v2899
        %4530 = vmatpush1.bf16.msra.mxu0 %v2898
        %4531 = vmatprep.subr.bf16.mxu0 0
        %4532 = vmatpush1.bf16.msra.mxu0 0
        %4533 = vmatprep.subr.bf16.mxu0 0
        %4534 = vmatpush1.bf16.msra.mxu0 0
        %4535 = vmatprep.subr.bf16.mxu0 0
        %4536 = vmatpush1.bf16.msra.mxu0 0
        %4537 = vmatprep.subr.bf16.mxu0 0
        %4538 = vmatpush1.bf16.msra.mxu0 0
        %4539 = vmatprep.subr.bf16.mxu0 0
        %4540 = vmatpush1.bf16.msra.mxu0 0
        %4541 = vmatprep.subr.bf16.mxu0 0
        %4542 = vmatpush1.bf16.msra.mxu0 0
        %4543 = vmatprep.subr.bf16.mxu0 0
        %4544 = vmatpush1.bf16.msra.mxu0 0
        %4545 = vmatprep.subr.bf16.mxu0 0
        %4546 = vmatpush1.bf16.msra.mxu0 0
        %4547 = vmatprep.mubr.bf16.mxu0 0
        %4548 = vmatmul.mubr.bf16.gmra.mrb[0].mxu0 %v216
        %v4549 = vpop.f32.mrb[0].mxu0
        %v4550 = vadd.f32 0.0, %v4549
        %v4551 = vpop.f32.mrb[0].mxu0
        %v4552 = vadd.f32 0.0, %v4551
        %v4553 = vpop.f32.mrb[0].mxu0
        %v4554 = vpop.f32.mrb[0].mxu0
        %4555 = vdwg.mxu0
        %4556 = vmatprep.subr.bf16.mxu0 %v2432
        %4557 = vmatpush1.bf16.msra.mxu0 %v2431
        %4558 = vmatprep.subr.bf16.mxu0 %v2499
        %4559 = vmatpush1.bf16.msra.mxu0 %v2498
        %4560 = vmatprep.subr.bf16.mxu0 %v2566
        %4561 = vmatpush1.bf16.msra.mxu0 %v2565
        %4562 = vmatprep.subr.bf16.mxu0 %v2633
        %4563 = vmatpush1.bf16.msra.mxu0 %v2632
        %4564 = vmatprep.subr.bf16.mxu0 %v2700
        %4565 = vmatpush1.bf16.msra.mxu0 %v2699
        %4566 = vmatprep.subr.bf16.mxu0 %v2767
        %4567 = vmatpush1.bf16.msra.mxu0 %v2766
        %4568 = vmatprep.subr.bf16.mxu0 %v2834
        %4569 = vmatpush1.bf16.msra.mxu0 %v2833
        %4570 = vmatprep.subr.bf16.mxu0 %v2901
        %4571 = vmatpush1.bf16.msra.mxu0 %v2900
        %4572 = vmatprep.subr.bf16.mxu0 0
        %4573 = vmatpush1.bf16.msra.mxu0 0
        %4574 = vmatprep.subr.bf16.mxu0 0
        %4575 = vmatpush1.bf16.msra.mxu0 0
        %4576 = vmatprep.subr.bf16.mxu0 0
        %4577 = vmatpush1.bf16.msra.mxu0 0
        %4578 = vmatprep.subr.bf16.mxu0 0
        %4579 = vmatpush1.bf16.msra.mxu0 0
        %4580 = vmatprep.subr.bf16.mxu0 0
        %4581 = vmatpush1.bf16.msra.mxu0 0
        %4582 = vmatprep.subr.bf16.mxu0 0
        %4583 = vmatpush1.bf16.msra.mxu0 0
        %4584 = vmatprep.subr.bf16.mxu0 0
        %4585 = vmatpush1.bf16.msra.mxu0 0
        %4586 = vmatprep.subr.bf16.mxu0 0
        %4587 = vmatpush1.bf16.msra.mxu0 0
        %4588 = vmatprep.mubr.bf16.mxu0 0
        %4589 = vmatmul.mubr.bf16.gmra.mrb[0].mxu0 %v216
        %v4590 = vpop.f32.mrb[0].mxu0
        %v4591 = vadd.f32 0.0, %v4590
        %v4592 = vpop.f32.mrb[0].mxu0
        %v4593 = vadd.f32 0.0, %v4592
        %v4594 = vpop.f32.mrb[0].mxu0
        %v4595 = vpop.f32.mrb[0].mxu0
        %4596 = vdwg.mxu0
        %4597 = vmatprep.subr.bf16.mxu0 %v2434
        %4598 = vmatpush1.bf16.msra.mxu0 %v2433
        %4599 = vmatprep.subr.bf16.mxu0 %v2501
        %4600 = vmatpush1.bf16.msra.mxu0 %v2500
        %4601 = vmatprep.subr.bf16.mxu0 %v2568
        %4602 = vmatpush1.bf16.msra.mxu0 %v2567
        %4603 = vmatprep.subr.bf16.mxu0 %v2635
        %4604 = vmatpush1.bf16.msra.mxu0 %v2634
        %4605 = vmatprep.subr.bf16.mxu0 %v2702
        %4606 = vmatpush1.bf16.msra.mxu0 %v2701
        %4607 = vmatprep.subr.bf16.mxu0 %v2769
        %4608 = vmatpush1.bf16.msra.mxu0 %v2768
        %4609 = vmatprep.subr.bf16.mxu0 %v2836
        %4610 = vmatpush1.bf16.msra.mxu0 %v2835
        %4611 = vmatprep.subr.bf16.mxu0 %v2903
        %4612 = vmatpush1.bf16.msra.mxu0 %v2902
        %4613 = vmatprep.subr.bf16.mxu0 0
        %4614 = vmatpush1.bf16.msra.mxu0 0
        %4615 = vmatprep.subr.bf16.mxu0 0
        %4616 = vmatpush1.bf16.msra.mxu0 0
        %4617 = vmatprep.subr.bf16.mxu0 0
        %4618 = vmatpush1.bf16.msra.mxu0 0
        %4619 = vmatprep.subr.bf16.mxu0 0
        %4620 = vmatpush1.bf16.msra.mxu0 0
        %4621 = vmatprep.subr.bf16.mxu0 0
        %4622 = vmatpush1.bf16.msra.mxu0 0
        %4623 = vmatprep.subr.bf16.mxu0 0
        %4624 = vmatpush1.bf16.msra.mxu0 0
        %4625 = vmatprep.subr.bf16.mxu0 0
        %4626 = vmatpush1.bf16.msra.mxu0 0
        %4627 = vmatprep.subr.bf16.mxu0 0
        %4628 = vmatpush1.bf16.msra.mxu0 0
        %4629 = vmatprep.mubr.bf16.mxu0 0
        %4630 = vmatmul.mubr.bf16.gmra.mrb[0].mxu0 %v216
        %v4631 = vpop.f32.mrb[0].mxu0
        %v4632 = vadd.f32 0.0, %v4631
        %v4633 = vpop.f32.mrb[0].mxu0
        %v4634 = vadd.f32 0.0, %v4633
        %v4635 = vpop.f32.mrb[0].mxu0
        %v4636 = vpop.f32.mrb[0].mxu0
        %4637 = vdwg.mxu0
        %4638 = vmatprep.subr.bf16.mxu0 %v2436
        %4639 = vmatpush1.bf16.msra.mxu0 %v2435
        %4640 = vmatprep.subr.bf16.mxu0 %v2503
        %4641 = vmatpush1.bf16.msra.mxu0 %v2502
        %4642 = vmatprep.subr.bf16.mxu0 %v2570
        %4643 = vmatpush1.bf16.msra.mxu0 %v2569
        %4644 = vmatprep.subr.bf16.mxu0 %v2637
        %4645 = vmatpush1.bf16.msra.mxu0 %v2636
        %4646 = vmatprep.subr.bf16.mxu0 %v2704
        %4647 = vmatpush1.bf16.msra.mxu0 %v2703
        %4648 = vmatprep.subr.bf16.mxu0 %v2771
        %4649 = vmatpush1.bf16.msra.mxu0 %v2770
        %4650 = vmatprep.subr.bf16.mxu0 %v2838
        %4651 = vmatpush1.bf16.msra.mxu0 %v2837
        %4652 = vmatprep.subr.bf16.mxu0 %v2905
        %4653 = vmatpush1.bf16.msra.mxu0 %v2904
        %4654 = vmatprep.subr.bf16.mxu0 0
        %4655 = vmatpush1.bf16.msra.mxu0 0
        %4656 = vmatprep.subr.bf16.mxu0 0
        %4657 = vmatpush1.bf16.msra.mxu0 0
        %4658 = vmatprep.subr.bf16.mxu0 0
        %4659 = vmatpush1.bf16.msra.mxu0 0
        %4660 = vmatprep.subr.bf16.mxu0 0
        %4661 = vmatpush1.bf16.msra.mxu0 0
        %4662 = vmatprep.subr.bf16.mxu0 0
        %4663 = vmatpush1.bf16.msra.mxu0 0
        %4664 = vmatprep.subr.bf16.mxu0 0
        %4665 = vmatpush1.bf16.msra.mxu0 0
        %4666 = vmatprep.subr.bf16.mxu0 0
        %4667 = vmatpush1.bf16.msra.mxu0 0
        %4668 = vmatprep.subr.bf16.mxu0 0
        %4669 = vmatpush1.bf16.msra.mxu0 0
        %4670 = vmatprep.mubr.bf16.mxu0 0
        %4671 = vmatmul.mubr.bf16.gmra.mrb[0].mxu0 %v216
        %v4672 = vpop.f32.mrb[0].mxu0
        %v4673 = vadd.f32 0.0, %v4672
        %v4674 = vpop.f32.mrb[0].mxu0
        %v4675 = vadd.f32 0.0, %v4674
        %v4676 = vpop.f32.mrb[0].mxu0
        %v4677 = vpop.f32.mrb[0].mxu0
        %4678 = vdwg.mxu0
        %4679 = vmatprep.subr.bf16.mxu0 %v2438
        %4680 = vmatpush1.bf16.msra.mxu0 %v2437
        %4681 = vmatprep.subr.bf16.mxu0 %v2505
        %4682 = vmatpush1.bf16.msra.mxu0 %v2504
        %4683 = vmatprep.subr.bf16.mxu0 %v2572
        %4684 = vmatpush1.bf16.msra.mxu0 %v2571
        %4685 = vmatprep.subr.bf16.mxu0 %v2639
        %4686 = vmatpush1.bf16.msra.mxu0 %v2638
        %4687 = vmatprep.subr.bf16.mxu0 %v2706
        %4688 = vmatpush1.bf16.msra.mxu0 %v2705
        %4689 = vmatprep.subr.bf16.mxu0 %v2773
        %4690 = vmatpush1.bf16.msra.mxu0 %v2772
        %4691 = vmatprep.subr.bf16.mxu0 %v2840
        %4692 = vmatpush1.bf16.msra.mxu0 %v2839
        %4693 = vmatprep.subr.bf16.mxu0 %v2907
        %4694 = vmatpush1.bf16.msra.mxu0 %v2906
        %4695 = vmatprep.subr.bf16.mxu0 0
        %4696 = vmatpush1.bf16.msra.mxu0 0
        %4697 = vmatprep.subr.bf16.mxu0 0
        %4698 = vmatpush1.bf16.msra.mxu0 0
        %4699 = vmatprep.subr.bf16.mxu0 0
        %4700 = vmatpush1.bf16.msra.mxu0 0
        %4701 = vmatprep.subr.bf16.mxu0 0
        %4702 = vmatpush1.bf16.msra.mxu0 0
        %4703 = vmatprep.subr.bf16.mxu0 0
        %4704 = vmatpush1.bf16.msra.mxu0 0
        %4705 = vmatprep.subr.bf16.mxu0 0
        %4706 = vmatpush1.bf16.msra.mxu0 0
        %4707 = vmatprep.subr.bf16.mxu0 0
        %4708 = vmatpush1.bf16.msra.mxu0 0
        %4709 = vmatprep.subr.bf16.mxu0 0
        %4710 = vmatpush1.bf16.msra.mxu0 0
        %4711 = vmatprep.mubr.bf16.mxu0 0
        %4712 = vmatmul.mubr.bf16.gmra.mrb[0].mxu0 %v216
        %v4713 = vpop.f32.mrb[0].mxu0
        %v4714 = vadd.f32 0.0, %v4713
        %v4715 = vpop.f32.mrb[0].mxu0
        %v4716 = vadd.f32 0.0, %v4715
        %v4717 = vpop.f32.mrb[0].mxu0
        %v4718 = vpop.f32.mrb[0].mxu0
        %4719 = vdwg.mxu0
        %4720 = vmatprep.subr.bf16.mxu0 %v2440
        %4721 = vmatpush1.bf16.msra.mxu0 %v2439
        %4722 = vmatprep.subr.bf16.mxu0 %v2507
        %4723 = vmatpush1.bf16.msra.mxu0 %v2506
        %4724 = vmatprep.subr.bf16.mxu0 %v2574
        %4725 = vmatpush1.bf16.msra.mxu0 %v2573
        %4726 = vmatprep.subr.bf16.mxu0 %v2641
        %4727 = vmatpush1.bf16.msra.mxu0 %v2640
        %4728 = vmatprep.subr.bf16.mxu0 %v2708
        %4729 = vmatpush1.bf16.msra.mxu0 %v2707
        %4730 = vmatprep.subr.bf16.mxu0 %v2775
        %4731 = vmatpush1.bf16.msra.mxu0 %v2774
        %4732 = vmatprep.subr.bf16.mxu0 %v2842
        %4733 = vmatpush1.bf16.msra.mxu0 %v2841
        %4734 = vmatprep.subr.bf16.mxu0 %v2909
        %4735 = vmatpush1.bf16.msra.mxu0 %v2908
        %4736 = vmatprep.subr.bf16.mxu0 0
        %4737 = vmatpush1.bf16.msra.mxu0 0
        %4738 = vmatprep.subr.bf16.mxu0 0
        %4739 = vmatpush1.bf16.msra.mxu0 0
        %4740 = vmatprep.subr.bf16.mxu0 0
        %4741 = vmatpush1.bf16.msra.mxu0 0
        %4742 = vmatprep.subr.bf16.mxu0 0
        %4743 = vmatpush1.bf16.msra.mxu0 0
        %4744 = vmatprep.subr.bf16.mxu0 0
        %4745 = vmatpush1.bf16.msra.mxu0 0
        %4746 = vmatprep.subr.bf16.mxu0 0
        %4747 = vmatpush1.bf16.msra.mxu0 0
        %4748 = vmatprep.subr.bf16.mxu0 0
        %4749 = vmatpush1.bf16.msra.mxu0 0
        %4750 = vmatprep.subr.bf16.mxu0 0
        %4751 = vmatpush1.bf16.msra.mxu0 0
        %4752 = vmatprep.mubr.bf16.mxu0 0
        %4753 = vmatmul.mubr.bf16.gmra.mrb[0].mxu0 %v216
        %v4754 = vpop.f32.mrb[0].mxu0
        %v4755 = vadd.f32 0.0, %v4754
        %v4756 = vpop.f32.mrb[0].mxu0
        %v4757 = vadd.f32 0.0, %v4756
        %v4758 = vpop.f32.mrb[0].mxu0
        %v4759 = vpop.f32.mrb[0].mxu0
        %4760 = vdwg.mxu0
        %4761 = vmatprep.subr.bf16.mxu0 %v2442
        %4762 = vmatpush1.bf16.msra.mxu0 %v2441
        %4763 = vmatprep.subr.bf16.mxu0 %v2509
        %4764 = vmatpush1.bf16.msra.mxu0 %v2508
        %4765 = vmatprep.subr.bf16.mxu0 %v2576
        %4766 = vmatpush1.bf16.msra.mxu0 %v2575
        %4767 = vmatprep.subr.bf16.mxu0 %v2643
        %4768 = vmatpush1.bf16.msra.mxu0 %v2642
        %4769 = vmatprep.subr.bf16.mxu0 %v2710
        %4770 = vmatpush1.bf16.msra.mxu0 %v2709
        %4771 = vmatprep.subr.bf16.mxu0 %v2777
        %4772 = vmatpush1.bf16.msra.mxu0 %v2776
        %4773 = vmatprep.subr.bf16.mxu0 %v2844
        %4774 = vmatpush1.bf16.msra.mxu0 %v2843
        %4775 = vmatprep.subr.bf16.mxu0 %v2911
        %4776 = vmatpush1.bf16.msra.mxu0 %v2910
        %4777 = vmatprep.subr.bf16.mxu0 0
        %4778 = vmatpush1.bf16.msra.mxu0 0
        %4779 = vmatprep.subr.bf16.mxu0 0
        %4780 = vmatpush1.bf16.msra.mxu0 0
        %4781 = vmatprep.subr.bf16.mxu0 0
        %4782 = vmatpush1.bf16.msra.mxu0 0
        %4783 = vmatprep.subr.bf16.mxu0 0
        %4784 = vmatpush1.bf16.msra.mxu0 0
        %4785 = vmatprep.subr.bf16.mxu0 0
        %4786 = vmatpush1.bf16.msra.mxu0 0
        %4787 = vmatprep.subr.bf16.mxu0 0
        %4788 = vmatpush1.bf16.msra.mxu0 0
        %4789 = vmatprep.subr.bf16.mxu0 0
        %4790 = vmatpush1.bf16.msra.mxu0 0
        %4791 = vmatprep.subr.bf16.mxu0 0
        %4792 = vmatpush1.bf16.msra.mxu0 0
        %4793 = vmatprep.mubr.bf16.mxu0 0
        %4794 = vmatmul.mubr.bf16.gmra.mrb[0].mxu0 %v216
        %v4795 = vpop.f32.mrb[0].mxu0
        %v4796 = vadd.f32 0.0, %v4795
        %v4797 = vpop.f32.mrb[0].mxu0
        %v4798 = vadd.f32 0.0, %v4797
        %v4799 = vpop.f32.mrb[0].mxu0
        %v4800 = vpop.f32.mrb[0].mxu0
        %4801 = vdwg.mxu0
        %4802 = vmatprep.subr.bf16.mxu0 0
        %4803 = vmatpush1.bf16.msra.mxu0 %v2443
        %4804 = vmatprep.subr.bf16.mxu0 0
        %4805 = vmatpush1.bf16.msra.mxu0 %v2510
        %4806 = vmatprep.subr.bf16.mxu0 0
        %4807 = vmatpush1.bf16.msra.mxu0 %v2577
        %4808 = vmatprep.subr.bf16.mxu0 0
        %4809 = vmatpush1.bf16.msra.mxu0 %v2644
        %4810 = vmatprep.subr.bf16.mxu0 0
        %4811 = vmatpush1.bf16.msra.mxu0 %v2711
        %4812 = vmatprep.subr.bf16.mxu0 0
        %4813 = vmatpush1.bf16.msra.mxu0 %v2778
        %4814 = vmatprep.subr.bf16.mxu0 0
        %4815 = vmatpush1.bf16.msra.mxu0 %v2845
        %4816 = vmatprep.subr.bf16.mxu0 0
        %4817 = vmatpush1.bf16.msra.mxu0 %v2912
        %4818 = vmatprep.subr.bf16.mxu0 0
        %4819 = vmatpush1.bf16.msra.mxu0 0
        %4820 = vmatprep.subr.bf16.mxu0 0
        %4821 = vmatpush1.bf16.msra.mxu0 0
        %4822 = vmatprep.subr.bf16.mxu0 0
        %4823 = vmatpush1.bf16.msra.mxu0 0
        %4824 = vmatprep.subr.bf16.mxu0 0
        %4825 = vmatpush1.bf16.msra.mxu0 0
        %4826 = vmatprep.subr.bf16.mxu0 0
        %4827 = vmatpush1.bf16.msra.mxu0 0
        %4828 = vmatprep.subr.bf16.mxu0 0
        %4829 = vmatpush1.bf16.msra.mxu0 0
        %4830 = vmatprep.subr.bf16.mxu0 0
        %4831 = vmatpush1.bf16.msra.mxu0 0
        %4832 = vmatprep.subr.bf16.mxu0 0
        %4833 = vmatpush1.bf16.msra.mxu0 0
        %4834 = vmatprep.mubr.bf16.mxu0 0
        %4835 = vmatmul.mubr.bf16.gmra.mrb[0].mxu0 %v216
        %v4836 = vpop.f32.mrb[0].mxu0
        %v4837 = vadd.f32 0.0, %v4836
        %v4838 = vpop.f32.mrb[0].mxu0
        %v4839 = vpop.f32.mrb[0].mxu0
        %v4840 = vpop.f32.mrb[0].mxu0
        %4841 = vdwg.mxu0
        %v4842 = vld [vmem:[%s176] sm:$0xff]
        %v4843 = vld [vmem:[%s176 + $0x8] sm:$0xff]
        %v4844 = vld [vmem:[%s176 + $0x10] sm:$0xff]
        %v4845 = vld [vmem:[%s176 + $0x18] sm:$0xff]
        %v4846 = vld [vmem:[%s176 + $0x20] sm:$0xff]
        %v4847 = vld [vmem:[%s176 + $0x28] sm:$0xff]
        %v4848 = vld [vmem:[%s176 + $0x30] sm:$0xff]
        %v4849 = vld [vmem:[%s176 + $0x38] sm:$0xff]
        %v4850 = vld [vmem:[%s176 + $0x40] sm:$0xff]
        %v4851 = vld [vmem:[%s176 + $0x48] sm:$0xff]
        %v4852 = vld [vmem:[%s176 + $0x50] sm:$0xff]
        %v4853 = vld [vmem:[%s176 + $0x58] sm:$0xff]
        %v4854 = vld [vmem:[%s176 + $0x60] sm:$0xff]
        %v4855 = vld [vmem:[%s176 + $0x68] sm:$0xff]
        %v4856 = vld [vmem:[%s176 + $0x70] sm:$0xff]
        %v4857 = vld [vmem:[%s176 + $0x78] sm:$0xff]
        %v4858 = vld [vmem:[%s176 + $0x80] sm:$0xff]
        %v4859 = vld [vmem:[%s176 + $0x88] sm:$0xff]
        %v4860 = vld [vmem:[%s176 + $0x90] sm:$0xff]
        %v4861 = vld [vmem:[%s176 + $0x98] sm:$0xff]
        %v4862 = vld [vmem:[%s176 + $0xa0] sm:$0xff]
        %v4863 = vld [vmem:[%s176 + $0xa8] sm:$0xff]
        %v4864 = vld [vmem:[%s176 + $0xb0] sm:$0xff]
        %v4865 = vld [vmem:[%s176 + $0xb8] sm:$0xff]
        %v4866 = vld [vmem:[%s176 + $0xc0] sm:$0xff]
        %v4867 = vld [vmem:[%s176 + $0xc8] sm:$0xff]
        %v4868 = vld [vmem:[%s176 + $0xd0] sm:$0xff]
        %v4869 = vld [vmem:[%s176 + $0xd8] sm:$0xff]
        %v4870 = vld [vmem:[%s176 + $0xe0] sm:$0xff]
        %v4871 = vld [vmem:[%s176 + $0xe8] sm:$0xff]
        %v4872 = vld [vmem:[%s176 + $0xf0] sm:$0xff]
        %v4873 = vld [vmem:[%s176 + $0xf8] sm:$0xff]
        %v4874 = vld [vmem:[%s176 + $0x100] sm:$0xff]
        %v4875 = vld [vmem:[%s176 + $0x108] sm:$0xff]
        %v4876 = vld [vmem:[%s176 + $0x110] sm:$0xff]
        %v4877 = vld [vmem:[%s176 + $0x118] sm:$0xff]
        %v4878 = vld [vmem:[%s176 + $0x120] sm:$0xff]
        %v4879 = vld [vmem:[%s176 + $0x128] sm:$0xff]
        %v4880 = vld [vmem:[%s176 + $0x130] sm:$0xff]
        %v4881 = vld [vmem:[%s176 + $0x138] sm:$0xff]
        %v4882 = vld [vmem:[%s176 + $0x140] sm:$0xff]
        %v4883 = vld [vmem:[%s176 + $0x148] sm:$0xff]
        %v4884 = vld [vmem:[%s176 + $0x150] sm:$0xff]
        %v4885 = vld [vmem:[%s176 + $0x158] sm:$0xff]
        %v4886 = vld [vmem:[%s176 + $0x160] sm:$0xff]
        %v4887 = vld [vmem:[%s176 + $0x168] sm:$0xff]
        %v4888 = vld [vmem:[%s176 + $0x170] sm:$0xff]
        %v4889 = vld [vmem:[%s176 + $0x178] sm:$0xff]
        %v4890 = vld [vmem:[%s176 + $0x180] sm:$0xff]
        %v4891 = vld [vmem:[%s176 + $0x188] sm:$0xff]
        %v4892 = vld [vmem:[%s176 + $0x190] sm:$0xff]
        %v4893 = vld [vmem:[%s176 + $0x198] sm:$0xff]
        %v4894 = vld [vmem:[%s176 + $0x1a0] sm:$0xff]
        %v4895 = vld [vmem:[%s176 + $0x1a8] sm:$0xff]
        %v4896 = vld [vmem:[%s176 + $0x1b0] sm:$0xff]
        %v4897 = vld [vmem:[%s176 + $0x1b8] sm:$0xff]
        %v4898 = vld [vmem:[%s176 + $0x1c0] sm:$0xff]
        %v4899 = vld [vmem:[%s176 + $0x1c8] sm:$0xff]
        %v4900 = vld [vmem:[%s176 + $0x1d0] sm:$0xff]
        %v4901 = vld [vmem:[%s176 + $0x1d8] sm:$0xff]
        %v4902 = vld [vmem:[%s176 + $0x1e0] sm:$0xff]
        %v4903 = vld [vmem:[%s176 + $0x1e8] sm:$0xff]
        %v4904 = vld [vmem:[%s176 + $0x1f0] sm:$0xff]
        %v4905 = vld [vmem:[%s176 + $0x1f8] sm:$0xff]
        %v4906 = vld [vmem:[%s176 + $0x200] sm:$0xff]
        %v4907 = vld [vmem:[%s176 + $0x208] sm:$0xff]
        %v4908 = vld [vmem:[%s176 + $0x210] sm:$0xff]
        %v4909 = vadd.f32 %v4842, %v3484
        %v4910 = vadd.f32 %v4843, %v3486
        %v4911 = vadd.f32 %v4844, %v3525
        %v4912 = vadd.f32 %v4845, %v3527
        %v4913 = vadd.f32 %v4846, %v3566
        %v4914 = vadd.f32 %v4847, %v3568
        %v4915 = vadd.f32 %v4848, %v3607
        %v4916 = vadd.f32 %v4849, %v3609
        %v4917 = vadd.f32 %v4850, %v3648
        %v4918 = vadd.f32 %v4851, %v3650
        %v4919 = vadd.f32 %v4852, %v3689
        %v4920 = vadd.f32 %v4853, %v3691
        %v4921 = vadd.f32 %v4854, %v3730
        %v4922 = vadd.f32 %v4855, %v3732
        %v4923 = vadd.f32 %v4856, %v3771
        %v4924 = vadd.f32 %v4857, %v3773
        %v4925 = vadd.f32 %v4858, %v3812
        %v4926 = vadd.f32 %v4859, %v3814
        %v4927 = vadd.f32 %v4860, %v3853
        %v4928 = vadd.f32 %v4861, %v3855
        %v4929 = vadd.f32 %v4862, %v3894
        %v4930 = vadd.f32 %v4863, %v3896
        %v4931 = vadd.f32 %v4864, %v3935
        %v4932 = vadd.f32 %v4865, %v3937
        %v4933 = vadd.f32 %v4866, %v3976
        %v4934 = vadd.f32 %v4867, %v3978
        %v4935 = vadd.f32 %v4868, %v4017
        %v4936 = vadd.f32 %v4869, %v4019
        %v4937 = vadd.f32 %v4870, %v4058
        %v4938 = vadd.f32 %v4871, %v4060
        %v4939 = vadd.f32 %v4872, %v4099
        %v4940 = vadd.f32 %v4873, %v4101
        %v4941 = vadd.f32 %v4874, %v4140
        %v4942 = vadd.f32 %v4875, %v4142
        %v4943 = vadd.f32 %v4876, %v4181
        %v4944 = vadd.f32 %v4877, %v4183
        %v4945 = vadd.f32 %v4878, %v4222
        %v4946 = vadd.f32 %v4879, %v4224
        %v4947 = vadd.f32 %v4880, %v4263
        %v4948 = vadd.f32 %v4881, %v4265
        %v4949 = vadd.f32 %v4882, %v4304
        %v4950 = vadd.f32 %v4883, %v4306
        %v4951 = vadd.f32 %v4884, %v4345
        %v4952 = vadd.f32 %v4885, %v4347
        %v4953 = vadd.f32 %v4886, %v4386
        %v4954 = vadd.f32 %v4887, %v4388
        %v4955 = vadd.f32 %v4888, %v4427
        %v4956 = vadd.f32 %v4889, %v4429
        %v4957 = vadd.f32 %v4890, %v4468
        %v4958 = vadd.f32 %v4891, %v4470
        %v4959 = vadd.f32 %v4892, %v4509
        %v4960 = vadd.f32 %v4893, %v4511
        %v4961 = vadd.f32 %v4894, %v4550
        %v4962 = vadd.f32 %v4895, %v4552
        %v4963 = vadd.f32 %v4896, %v4591
        %v4964 = vadd.f32 %v4897, %v4593
        %v4965 = vadd.f32 %v4898, %v4632
        %v4966 = vadd.f32 %v4899, %v4634
        %v4967 = vadd.f32 %v4900, %v4673
        %v4968 = vadd.f32 %v4901, %v4675
        %v4969 = vadd.f32 %v4902, %v4714
        %v4970 = vadd.f32 %v4903, %v4716
        %v4971 = vadd.f32 %v4904, %v4755
        %v4972 = vadd.f32 %v4905, %v4757
        %v4973 = vadd.f32 %v4906, %v4796
        %v4974 = vadd.f32 %v4907, %v4798
        %v4975 = vadd.f32 %v4908, %v4837
        %4976 = vst [vmem:[%s198] sm:$0xff] %v4909
        %4977 = vst [vmem:[%s198 + $0x8] sm:$0xff] %v4910
        %4978 = vst [vmem:[%s198 + $0x10] sm:$0xff] %v4911
        %4979 = vst [vmem:[%s198 + $0x18] sm:$0xff] %v4912
        %4980 = vst [vmem:[%s198 + $0x20] sm:$0xff] %v4913
        %4981 = vst [vmem:[%s198 + $0x28] sm:$0xff] %v4914
        %4982 = vst [vmem:[%s198 + $0x30] sm:$0xff] %v4915
        %4983 = vst [vmem:[%s198 + $0x38] sm:$0xff] %v4916
        %4984 = vst [vmem:[%s198 + $0x40] sm:$0xff] %v4917
        %4985 = vst [vmem:[%s198 + $0x48] sm:$0xff] %v4918
        %4986 = vst [vmem:[%s198 + $0x50] sm:$0xff] %v4919
        %4987 = vst [vmem:[%s198 + $0x58] sm:$0xff] %v4920
        %4988 = vst [vmem:[%s198 + $0x60] sm:$0xff] %v4921
        %4989 = vst [vmem:[%s198 + $0x68] sm:$0xff] %v4922
        %4990 = vst [vmem:[%s198 + $0x70] sm:$0xff] %v4923
        %4991 = vst [vmem:[%s198 + $0x78] sm:$0xff] %v4924
        %4992 = vst [vmem:[%s198 + $0x80] sm:$0xff] %v4925
        %4993 = vst [vmem:[%s198 + $0x88] sm:$0xff] %v4926
        %4994 = vst [vmem:[%s198 + $0x90] sm:$0xff] %v4927
        %4995 = vst [vmem:[%s198 + $0x98] sm:$0xff] %v4928
        %4996 = vst [vmem:[%s198 + $0xa0] sm:$0xff] %v4929
        %4997 = vst [vmem:[%s198 + $0xa8] sm:$0xff] %v4930
        %4998 = vst [vmem:[%s198 + $0xb0] sm:$0xff] %v4931
        %4999 = vst [vmem:[%s198 + $0xb8] sm:$0xff] %v4932
        %5000 = vst [vmem:[%s198 + $0xc0] sm:$0xff] %v4933
        %5001 = vst [vmem:[%s198 + $0xc8] sm:$0xff] %v4934
        %5002 = vst [vmem:[%s198 + $0xd0] sm:$0xff] %v4935
        %5003 = vst [vmem:[%s198 + $0xd8] sm:$0xff] %v4936
        %5004 = vst [vmem:[%s198 + $0xe0] sm:$0xff] %v4937
        %5005 = vst [vmem:[%s198 + $0xe8] sm:$0xff] %v4938
        %5006 = vst [vmem:[%s198 + $0xf0] sm:$0xff] %v4939
        %5007 = vst [vmem:[%s198 + $0xf8] sm:$0xff] %v4940
        %5008 = vst [vmem:[%s198 + $0x100] sm:$0xff] %v4941
        %5009 = vst [vmem:[%s198 + $0x108] sm:$0xff] %v4942
        %5010 = vst [vmem:[%s198 + $0x110] sm:$0xff] %v4943
        %5011 = vst [vmem:[%s198 + $0x118] sm:$0xff] %v4944
        %5012 = vst [vmem:[%s198 + $0x120] sm:$0xff] %v4945
        %5013 = vst [vmem:[%s198 + $0x128] sm:$0xff] %v4946
        %5014 = vst [vmem:[%s198 + $0x130] sm:$0xff] %v4947
        %5015 = vst [vmem:[%s198 + $0x138] sm:$0xff] %v4948
        %5016 = vst [vmem:[%s198 + $0x140] sm:$0xff] %v4949
        %5017 = vst [vmem:[%s198 + $0x148] sm:$0xff] %v4950
        %5018 = vst [vmem:[%s198 + $0x150] sm:$0xff] %v4951
        %5019 = vst [vmem:[%s198 + $0x158] sm:$0xff] %v4952
        %5020 = vst [vmem:[%s198 + $0x160] sm:$0xff] %v4953
        %5021 = vst [vmem:[%s198 + $0x168] sm:$0xff] %v4954
        %5022 = vst [vmem:[%s198 + $0x170] sm:$0xff] %v4955
        %5023 = vst [vmem:[%s198 + $0x178] sm:$0xff] %v4956
        %5024 = vst [vmem:[%s198 + $0x180] sm:$0xff] %v4957
        %5025 = vst [vmem:[%s198 + $0x188] sm:$0xff] %v4958
        %5026 = vst [vmem:[%s198 + $0x190] sm:$0xff] %v4959
        %5027 = vst [vmem:[%s198 + $0x198] sm:$0xff] %v4960
        %5028 = vst [vmem:[%s198 + $0x1a0] sm:$0xff] %v4961
        %5029 = vst [vmem:[%s198 + $0x1a8] sm:$0xff] %v4962
        %5030 = vst [vmem:[%s198 + $0x1b0] sm:$0xff] %v4963
        %5031 = vst [vmem:[%s198 + $0x1b8] sm:$0xff] %v4964
        %5032 = vst [vmem:[%s198 + $0x1c0] sm:$0xff] %v4965
        %5033 = vst [vmem:[%s198 + $0x1c8] sm:$0xff] %v4966
        %5034 = vst [vmem:[%s198 + $0x1d0] sm:$0xff] %v4967
        %5035 = vst [vmem:[%s198 + $0x1d8] sm:$0xff] %v4968
        %5036 = vst [vmem:[%s198 + $0x1e0] sm:$0xff] %v4969
        %5037 = vst [vmem:[%s198 + $0x1e8] sm:$0xff] %v4970
        %5038 = vst [vmem:[%s198 + $0x1f0] sm:$0xff] %v4971
        %5039 = vst [vmem:[%s198 + $0x1f8] sm:$0xff] %v4972
        %5040 = vst [vmem:[%s198 + $0x200] sm:$0xff] %v4973
        %5041 = vst [vmem:[%s198 + $0x208] sm:$0xff] %v4974
        %5042 = vst [vmem:[%s198 + $0x210] sm:$0xff] %v4975
        %s5043 = sand.u32 %s107, 1
        %s5044 = scalar_lea.sflag [#allocation6], %s5043
        %s5045 = sand.u32 %s107, 1
        %s5046 = smul.addr %s5045, 536
        %s5047 = scalar_lea.vmem [#allocation7], %s5046
        // Predicated region
        $region37: #{tpu_custom_call.1} parent=31 // pred_check
          %p5048 = pneg %p117
        $region38: #{tpu_custom_call.1} parent=31 // pred_check_branch
          %5050 = sbr.rel (%p5048) target = $region40
        $region39: #{tpu_custom_call.1} parent=31 // pred_region
          %s5051 = sld [smem:[#allocation3 + %s27]]
          %s5053 = ssub.s32 8576, 8576
          %5054 = vsyncadd %s5044, %s5053
          %s5055 = smul.addr %s5051, 67
          %s5056 = smul.addr %s5055, 128
          %s5057 = scalar_lea.hbm %s4, %s5056
          %s5059 = sshll.u32 %s5047, 4
          %s5060 = int_to_ptr.vmem [resolvable:$true] %s5059
          %5062 = dma.vmem_to_hbm [thread:$0]  %s5060, 8576, %s5057, %s5044
        $region40: #{tpu_custom_call.1} parent=31 // pred_fallthru
          _
      $region32: #{tpu_custom_call.1} parent=5 // pred_fallthru
        _
      %p5063 = scmp.le.s32.totalorder 2, %s22
      // Predicated region
      $region41: #{tpu_custom_call.1} parent=5 // pred_check
        %p5064 = pneg %p5063
      $region42: #{tpu_custom_call.1} parent=5 // pred_check_branch
        %5066 = sbr.rel (%p5064) target = $region44
      $region43: #{tpu_custom_call.1} parent=5 // pred_region
        %s5067 = ssub.s32 %s22, 2
        // Predicated region
        $region45: #{tpu_custom_call.1} parent=43 // pred_check
          %p5068 = pneg %p123
        $region46: #{tpu_custom_call.1} parent=43 // pred_check_branch
          %5070 = sbr.rel (%p5068) target = $region48
        $region47: #{tpu_custom_call.1} parent=43 // pred_region
          %s5071 = sand.u32 %s108, 1
          %s5072 = scalar_lea.sflag [#allocation6], %s5071
          %s5073 = sand.u32 %s108, 1
          %s5074 = smul.addr %s5073, 536
          %s5075 = scalar_lea.vmem [#allocation7], %s5074
          %5076 = dma.done %s5072, 8576
        $region48: #{tpu_custom_call.1} parent=43 // pred_fallthru
          _
      $region44: #{tpu_custom_call.1} parent=5 // pred_fallthru
        _
    $region6: #{tpu_custom_call.1} parent=1 // loop_footer
      %s26 = sadd.s32 1, %s22
    $region7: #{tpu_custom_call.1} parent=1 // loop_footer_branch
      %21 = sbr.rel target = $region3
    $region8: #{tpu_custom_call.1} parent=1 // loop_exit
      _
    %5077 = vsyncpa [#allocation5], 1
    %s5078 = scalar_lea.sflag [#allocation5], 1
    %5079 = vsyncpa %s5078, 1
    %5080 = vsyncpa [#allocation6], 1
    %s5081 = scalar_lea.sflag [#allocation6], 1
    %5082 = vsyncpa %s5081, 1

</llo_original>
